<compile_context>
chip_gen: v7x
topology: tpu7x:2x2x1
jax: 0.10.0
libtpu: 0.0.40
codegen_flags: <defaults>
</compile_context>

<pallas_src>
import math

import jax
import jax.numpy as jnp
from jax import lax
from jax.experimental import pallas as pl
from jax.experimental.pallas import tpu as pltpu


# ----------------------------------------------------------------------------
# Fused kernel: gather gate pre-activations -> pipelined 2-layer LSTM -> select
# hidden at idx.  Combined gate lane layout: [i0 i1 f0 f1 o0 o1 g0 g1].
# ----------------------------------------------------------------------------
def qenc_kernel(tok_ref,     # (T*N, 1) int32, time-major token ids
                idx_ref,     # (N, 1)   int32, last-word time index per row
                table_ref,   # (V, 8*Hp) bf16: embed @ W_ih0 in layer-0 columns
                bias_ref,    # (1, 8*Hp) f32 : b0 (layer-0 cols) + b1 (layer-1)
                wblk_ref,    # (2*Hp, 8*Hp) bf16 fused recurrent block weight
                out_ref):    # (N, Hp)  f32  (lane-dense; wrapper slices [:H])
    f32 = jnp.float32
    TN = tok_ref.shape[0]
    V = table_ref.shape[0]
    N, Hp = out_ref.shape
    T = TN // N

    # --- one-shot additive gate slab for ALL timesteps ------------------------
    # Embedding lookup + layer-0 input projection + both biases, fused.
    # TODO(synk): for large vocabularies keep the table in HBM (pl.ANY) and
    # DMA-gather rows instead of the one-hot matmul (O(TN*D) bytes, no (TN,V)).
    tok = tok_ref[...]                                             # (TN, 1)
    onehot = (tok == lax.broadcasted_iota(jnp.int32, (TN, V), 1)
              ).astype(jnp.bfloat16)
    add_all = jnp.dot(onehot, table_ref[...],
                      preferred_element_type=f32) + bias_ref[...]  # (TN, 8Hp)

    w_block = wblk_ref[...]                                        # (2Hp, 8Hp)
    idx = idx_ref[...]                                             # (N, 1)

    # --- prologue: layer-0 cell at t=0 (h_{-1} = c_{-1} = 0 for both layers) --
    a0 = add_all[0:N, :]
    s0 = jax.nn.sigmoid(a0[:, 0:6 * Hp])
    g0 = jnp.tanh(a0[:, 6 * Hp:7 * Hp])
    c0 = s0[:, 0:Hp] * g0                        # i0 * g0    (f0 * c_{-1} = 0)
    h0 = s0[:, 4 * Hp:5 * Hp] * jnp.tanh(c0)     # o0 * tanh(c0)
    zeros = jnp.zeros((N, Hp), f32)
    h_cat = jnp.concatenate([h0, zeros], axis=1)   # [h0_0 | h1_{-1} = 0]
    c_cat = jnp.concatenate([c0, zeros], axis=1)   # [c0_0 | c1_{-1} = 0]
    acc = zeros

    # --- pipelined recurrence, fully unrolled (T small & static) --------------
    # Iteration t: ONE fused MXU matmul produces layer-0 gates for step t+1 and
    # layer-1 gates for step t; ONE sigmoid + ONE tanh cover both layers.
    for t in range(T):
        rec = jnp.dot(h_cat.astype(jnp.bfloat16), w_block,
                      preferred_element_type=f32)                  # (N, 8Hp)
        # Layer-0 additive is for token t+1; on the last iteration that half is
        # dead (h0_T never consumed), so any in-range row block works — its
        # layer-1 columns still carry the correct b1.
        tn = min(t + 1, T - 1)
        gates = rec + add_all[tn * N:(tn + 1) * N, :]

        sg = jax.nn.sigmoid(gates[:, 0:6 * Hp])      # [i0 i1 | f0 f1 | o0 o1]
        gg = jnp.tanh(gates[:, 6 * Hp:8 * Hp])       # [g0 g1]
        c_cat = sg[:, 2 * Hp:4 * Hp] * c_cat + sg[:, 0:2 * Hp] * gg
        h_cat = sg[:, 4 * Hp:6 * Hp] * jnp.tanh(c_cat)   # [h0_{t+1} | h1_t]

        acc = jnp.where(idx == t, h_cat[:, Hp:2 * Hp], acc)

    out_ref[...] = acc          # full 128-lane unmasked store


# ----------------------------------------------------------------------------
# Wrapper: weight folding / padding / layout prep + pallas_call.
# ----------------------------------------------------------------------------
def _prep_weights(params, Hp):
    """Build (table, bias_row, w_block) in the kernel's combined layout.

    Lane layout, 8 blocks of Hp: [i0 i1 f0 f1 o0 o1 g0 g1]  (PyTorch per-layer
    gate order is [i, f, g, o]; '0'/'1' are the two LSTM layers).  All padding
    (gate cols H->Hp, contraction rows H->Hp) is exactly zero so padded h/c
    lanes stay exactly 0 through the recurrence (also exact after bf16 cast).
    """
    f32 = jnp.float32
    embed = params["embed"].astype(f32)
    V, _ = embed.shape
    H = params["w_hh0"].shape[1]
    PT_GATE = {"i": 0, "f": 1, "g": 2, "o": 3}
    GATE_SEQ = ("i", "f", "o", "g")

    def gate_w(w, k):            # (4H, Din) PyTorch -> (Din, H) for gate k
        r = PT_GATE[k]
        return w[r * H:(r + 1) * H, :].T.astype(f32)

    def gate_b(b, k):            # (4H,) -> (1, H)
        r = PT_GATE[k]
        return b[r * H:(r + 1) * H][None, :].astype(f32)

    padc = lambda m: jnp.pad(m, ((0, 0), (0, Hp - m.shape[1])))
    padr = lambda m: jnp.pad(m, ((0, Hp - m.shape[0]), (0, 0)))

    # --- additive table: embedding folded into the layer-0 input projection ---
    x_proj = {k: padc(embed @ gate_w(params["w_ih0"], k)) for k in GATE_SEQ}
    zeros_v = jnp.zeros((V, Hp), f32)
    table = jnp.concatenate(
        [blk for k in GATE_SEQ for blk in (x_proj[k], zeros_v)], axis=1)

    b0 = params["b_ih0"] + params["b_hh0"]
    b1 = params["b_ih1"] + params["b_hh1"]
    bias_row = jnp.concatenate(
        [padc(gate_b(b, k)) for k in GATE_SEQ for b in (b0, b1)], axis=1)

    # --- fused recurrent block weight ------------------------------------------
    # rows [0:Hp] contract with h0, rows [Hp:2Hp] with h1:
    #   layer-0 gate cols: [W_hh0 ; 0]      layer-1 gate cols: [W_ih1 ; W_hh1]
    zeros_h = jnp.zeros((Hp, Hp), f32)

    def col0(k):
        return jnp.concatenate(
            [padc(padr(gate_w(params["w_hh0"], k))), zeros_h], axis=0)

    def col1(k):
        return jnp.concatenate(
            [padc(padr(gate_w(params["w_ih1"], k))),
             padc(padr(gate_w(params["w_hh1"], k)))], axis=0)

    w_block = jnp.concatenate(
        [blk for k in GATE_SEQ for blk in (col0(k), col1(k))], axis=1)

    return (table.astype(jnp.bfloat16),
            bias_row.astype(f32),
            w_block.astype(jnp.bfloat16))


def question_lstm_encoder(x_tokens, params, null_idx):
    """x_tokens: (N, T) int32 token ids.  Returns (N, H) f32."""
    N, T = x_tokens.shape
    H = params["w_hh0"].shape[1]
    Hp = ((H + 127) // 128) * 128                 # lane-tile aligned hidden

    table, bias_row, w_block = _prep_weights(params, Hp)

    # Token ids, time-major flattened, as a column for the in-kernel one-hot.
    tok_col = x_tokens.T.reshape(T * N, 1).astype(jnp.int32)

    # idx[i] = first t with x[i,t] != NULL and x[i,t+1] == NULL, else T-1.
    cond = (x_tokens[:, :-1] != null_idx) & (x_tokens[:, 1:] == null_idx)
    idx = jnp.where(jnp.any(cond, axis=1), jnp.argmax(cond, axis=1), T - 1)
    idx_col = idx.astype(jnp.int32)[:, None]                       # (N, 1)

    full = lambda shape: pl.BlockSpec(shape, lambda i: (0,) * len(shape))

    out = pl.pallas_call(
        qenc_kernel,
        out_shape=jax.ShapeDtypeStruct((N, Hp), jnp.float32),
        grid=(1,),
        in_specs=[
            full(tok_col.shape), full(idx_col.shape),
            full(table.shape), full(bias_row.shape), full(w_block.shape),
        ],
        out_specs=full((N, Hp)),
        compiler_params=pltpu.CompilerParams(
            dimension_semantics=("arbitrary",)),
        # NOTE: for production batch sizes add a leading grid axis tiled over N
        # and mark it "parallel" (uses both v7x TensorCores and keeps the
        # per-tile additive slab inside v7x's 64 MiB VMEM); unnecessary at N=2.
    )(tok_col, idx_col, table, bias_row, w_block)
    return out[:, :H]


# ----------------------------------------------------------------------------
# Pure-JAX reference (mirrors the PyTorch forward) for a correctness check.
# ----------------------------------------------------------------------------
def reference_forward(x_tokens, params, null_idx):
    N, T = x_tokens.shape
    H = params["w_hh0"].shape[1]
    emb = jnp.take(params["embed"], x_tokens, axis=0)  # (N, T, D)

    def lstm_layer(inputs, w_ih, w_hh, b_ih, b_hh):
        def step(carry, x_t):
            h, c = carry
            gates = x_t @ w_ih.T + h @ w_hh.T + b_ih + b_hh
            i_g = jax.nn.sigmoid(gates[:, 0:H])
            f_g = jax.nn.sigmoid(gates[:, H:2 * H])
            g_g = jnp.tanh(gates[:, 2 * H:3 * H])
            o_g = jax.nn.sigmoid(gates[:, 3 * H:4 * H])
            c_new = f_g * c + i_g * g_g
            h_new = o_g * jnp.tanh(c_new)
            return (h_new, c_new), h_new

        init = (jnp.zeros((N, H), jnp.float32), jnp.zeros((N, H), jnp.float32))
        _, hs = lax.scan(step, init, jnp.transpose(inputs, (1, 0, 2)))
        return jnp.transpose(hs, (1, 0, 2))  # (N, T, H)

    h0 = lstm_layer(emb, params["w_ih0"], params["w_hh0"],
                    params["b_ih0"], params["b_hh0"])
    h1 = lstm_layer(h0, params["w_ih1"], params["w_hh1"],
                    params["b_ih1"], params["b_hh1"])

    cond = (x_tokens[:, :-1] != null_idx) & (x_tokens[:, 1:] == null_idx)
    idx = jnp.where(jnp.any(cond, axis=1), jnp.argmax(cond, axis=1), T - 1)
    return h1[jnp.arange(N), idx, :]


# ----------------------------------------------------------------------------
def init_params(key, vocab_size, wordvec_dim, rnn_dim):
    ks = jax.random.split(key, 9)
    k = 1.0 / math.sqrt(rnn_dim)
    u = lambda kk, shape, a: jax.random.uniform(kk, shape, jnp.float32, -a, a)
    return {
        "embed": u(ks[0], (vocab_size, wordvec_dim), 0.1),      # init_weights()
        "w_ih0": u(ks[1], (4 * rnn_dim, wordvec_dim), k),
        "w_hh0": u(ks[2], (4 * rnn_dim, rnn_dim), k),
        "b_ih0": u(ks[3], (4 * rnn_dim,), k),
        "b_hh0": u(ks[4], (4 * rnn_dim,), k),
        "w_ih1": u(ks[5], (4 * rnn_dim, rnn_dim), k),
        "w_hh1": u(ks[6], (4 * rnn_dim, rnn_dim), k),
        "b_ih1": u(ks[7], (4 * rnn_dim,), k),
        "b_hh1": u(ks[8], (4 * rnn_dim,), k),
    }


if __name__ == "__main__":
    # Small shapes: N=2 sequences of length T=8, vocab 16, wordvec_dim=rnn_dim=64.
    token_to_idx = {"<NULL>": 0, "<START>": 1, "<END>": 2}
    for w in range(13):
        token_to_idx[f"w{w}"] = 3 + w
    NULL = token_to_idx["<NULL>"]

    key = jax.random.PRNGKey(0)
    pkey, tkey = jax.random.split(key)
    params = init_params(pkey, len(token_to_idx), wordvec_dim=64, rnn_dim=64)

    # Deterministic padded token sequences (<START> ... <END> <NULL> ...).
    words = jax.random.randint(tkey, (2, 8), 3, len(token_to_idx), dtype=jnp.int32)
    x = jnp.array([
        [1, int(words[0, 1]), int(words[0, 2]), int(words[0, 3]), 2, 0, 0, 0],
        [1, int(words[1, 1]), int(words[1, 2]), 2, 0, 0, 0, 0],
    ], dtype=jnp.int32)

    out = question_lstm_encoder(x, params, NULL)
    out = jax.block_until_ready(out)

    ref = jax.block_until_ready(reference_forward(x, params, NULL))
    assert out.shape == (2, 64), out.shape
    assert jnp.allclose(out, ref, atol=3e-3, rtol=3e-3), (
        float(jnp.max(jnp.abs(out - ref))))

    print("KERNEL_OK")
</pallas_src>

<mosaic_0001>
module attributes {stable_mosaic.version = 11 : i64} {
  func.func @qenc_kernel(%arg0: i32, %arg1: memref<16x1xi32, #tpu.memory_space<vmem>>, %arg2: memref<2x1xi32, #tpu.memory_space<vmem>>, %arg3: memref<16x1024xbf16, #tpu.memory_space<vmem>>, %arg4: memref<1x1024xf32, #tpu.memory_space<vmem>>, %arg5: memref<256x1024xbf16, #tpu.memory_space<vmem>>, %arg6: memref<2x128xf32, #tpu.memory_space<vmem>>) attributes {dimension_semantics = [#tpu.dimension_semantics<arbitrary>], iteration_bounds = array<i64: 1>, scalar_prefetch = 0 : i64, scratch_operands = 0 : i64, tpu.core_type = #tpu.core_type<tc>, window_params = [{pipeline_mode = #tpu.pipeline_mode<synchronous>, transform_indices = @transform_0, window_bounds = array<i64: 16, 1>}, {pipeline_mode = #tpu.pipeline_mode<synchronous>, transform_indices = @transform_1, window_bounds = array<i64: 2, 1>}, {pipeline_mode = #tpu.pipeline_mode<synchronous>, transform_indices = @transform_2, window_bounds = array<i64: 16, 1024>}, {pipeline_mode = #tpu.pipeline_mode<synchronous>, transform_indices = @transform_3, window_bounds = array<i64: 1, 1024>}, {pipeline_mode = #tpu.pipeline_mode<synchronous>, transform_indices = @transform_4, window_bounds = array<i64: 256, 1024>}, {pipeline_mode = #tpu.pipeline_mode<synchronous>, transform_indices = @transform_5, window_bounds = array<i64: 2, 128>}]} {
    %c0 = arith.constant 0 : index
    %c0_0 = arith.constant 0 : index
    %0 = vector.load %arg1[%c0, %c0_0] : memref<16x1xi32, #tpu.memory_space<vmem>>, vector<16x1xi32>
    %1 = tpu.iota {dimensions = array<i32: 1>} : vector<16x16xi32>
    %2 = vector.broadcast %0 : vector<16x1xi32> to vector<16x16xi32>
    %3 = arith.cmpi eq, %2, %1 : vector<16x16xi32>
    %4 = arith.extui %3 : vector<16x16xi1> to vector<16x16xi32>
    %5 = arith.sitofp %4 : vector<16x16xi32> to vector<16x16xf32>
    %6 = arith.truncf %5 : vector<16x16xf32> to vector<16x16xbf16>
    %c0_1 = arith.constant 0 : index
    %c0_2 = arith.constant 0 : index
    %7 = vector.load %arg3[%c0_1, %c0_2] : memref<16x1024xbf16, #tpu.memory_space<vmem>>, vector<16x1024xbf16>
    %cst = arith.constant dense<0.000000e+00> : vector<16x1024xf32>
    %8 = tpu.matmul %6, %7, %cst {dimension_numbers = #tpu.dot_dimension_numbers<[1], [0], [0], [1], [0, 0, 1, 1], [], []>} : vector<16x16xbf16>, vector<16x1024xbf16>, vector<16x1024xf32> -> vector<16x1024xf32>
    %c0_3 = arith.constant 0 : index
    %c0_4 = arith.constant 0 : index
    %9 = vector.load %arg4[%c0_3, %c0_4] : memref<1x1024xf32, #tpu.memory_space<vmem>>, vector<1x1024xf32>
    %10 = vector.broadcast %9 : vector<1x1024xf32> to vector<16x1024xf32>
    %11 = arith.addf %8, %10 : vector<16x1024xf32>
    %c0_5 = arith.constant 0 : index
    %c0_6 = arith.constant 0 : index
    %12 = vector.load %arg5[%c0_5, %c0_6] : memref<256x1024xbf16, #tpu.memory_space<vmem>>, vector<256x1024xbf16>
    %c0_7 = arith.constant 0 : index
    %c0_8 = arith.constant 0 : index
    %13 = vector.load %arg2[%c0_7, %c0_8] : memref<2x1xi32, #tpu.memory_space<vmem>>, vector<2x1xi32>
    %14 = vector.extract_strided_slice %11 {offsets = [0, 0], sizes = [2, 1024], strides = [1, 1]} : vector<16x1024xf32> to vector<2x1024xf32>
    %15 = vector.extract_strided_slice %14 {offsets = [0, 0], sizes = [2, 768], strides = [1, 1]} : vector<2x1024xf32> to vector<2x768xf32>
    %16 = arith.negf %15 : vector<2x768xf32>
    %17 = math.exp %16 : vector<2x768xf32>
    %cst_9 = arith.constant 1.000000e+00 : f32
    %18 = vector.broadcast %cst_9 : f32 to vector<2x768xf32>
    %19 = arith.addf %18, %17 : vector<2x768xf32>
    %20 = arith.divf %18, %19 : vector<2x768xf32>
    %21 = vector.extract_strided_slice %14 {offsets = [0, 768], sizes = [2, 128], strides = [1, 1]} : vector<2x1024xf32> to vector<2x128xf32>
    %22 = math.tanh %21 : vector<2x128xf32>
    %23 = vector.extract_strided_slice %20 {offsets = [0, 0], sizes = [2, 128], strides = [1, 1]} : vector<2x768xf32> to vector<2x128xf32>
    %24 = arith.mulf %23, %22 : vector<2x128xf32>
    %25 = vector.extract_strided_slice %20 {offsets = [0, 512], sizes = [2, 128], strides = [1, 1]} : vector<2x768xf32> to vector<2x128xf32>
    %26 = math.tanh %24 : vector<2x128xf32>
    %27 = arith.mulf %25, %26 : vector<2x128xf32>
    %cst_10 = arith.constant 0.000000e+00 : f32
    %28 = vector.broadcast %cst_10 : f32 to vector<2x128xf32>
    %29 = tpu.concatenate %27, %28 in 1 : vector<2x128xf32>, vector<2x128xf32> -> vector<2x256xf32>
    %30 = tpu.concatenate %24, %28 in 1 : vector<2x128xf32>, vector<2x128xf32> -> vector<2x256xf32>
    %31 = arith.truncf %29 : vector<2x256xf32> to vector<2x256xbf16>
    %cst_11 = arith.constant dense<0.000000e+00> : vector<2x1024xf32>
    %32 = tpu.matmul %31, %12, %cst_11 {dimension_numbers = #tpu.dot_dimension_numbers<[1], [0], [0], [1], [0, 0, 1, 1], [], []>} : vector<2x256xbf16>, vector<256x1024xbf16>, vector<2x1024xf32> -> vector<2x1024xf32>
    %33 = vector.extract_strided_slice %11 {offsets = [2, 0], sizes = [2, 1024], strides = [1, 1]} : vector<16x1024xf32> to vector<2x1024xf32>
    %34 = arith.addf %32, %33 : vector<2x1024xf32>
    %35 = vector.extract_strided_slice %34 {offsets = [0, 0], sizes = [2, 768], strides = [1, 1]} : vector<2x1024xf32> to vector<2x768xf32>
    %36 = arith.negf %35 : vector<2x768xf32>
    %37 = math.exp %36 : vector<2x768xf32>
    %cst_12 = arith.constant 1.000000e+00 : f32
    %38 = vector.broadcast %cst_12 : f32 to vector<2x768xf32>
    %39 = arith.addf %38, %37 : vector<2x768xf32>
    %40 = arith.divf %38, %39 : vector<2x768xf32>
    %41 = vector.extract_strided_slice %34 {offsets = [0, 768], sizes = [2, 256], strides = [1, 1]} : vector<2x1024xf32> to vector<2x256xf32>
    %42 = math.tanh %41 : vector<2x256xf32>
    %43 = vector.extract_strided_slice %40 {offsets = [0, 256], sizes = [2, 256], strides = [1, 1]} : vector<2x768xf32> to vector<2x256xf32>
    %44 = arith.mulf %43, %30 : vector<2x256xf32>
    %45 = vector.extract_strided_slice %40 {offsets = [0, 0], sizes = [2, 256], strides = [1, 1]} : vector<2x768xf32> to vector<2x256xf32>
    %46 = arith.mulf %45, %42 : vector<2x256xf32>
    %47 = arith.addf %44, %46 : vector<2x256xf32>
    %48 = vector.extract_strided_slice %40 {offsets = [0, 512], sizes = [2, 256], strides = [1, 1]} : vector<2x768xf32> to vector<2x256xf32>
    %49 = math.tanh %47 : vector<2x256xf32>
    %50 = arith.mulf %48, %49 : vector<2x256xf32>
    %c0_i32 = arith.constant 0 : i32
    %51 = vector.broadcast %c0_i32 : i32 to vector<2x1xi32>
    %52 = arith.cmpi eq, %13, %51 : vector<2x1xi32>
    %53 = vector.extract_strided_slice %50 {offsets = [0, 128], sizes = [2, 128], strides = [1, 1]} : vector<2x256xf32> to vector<2x128xf32>
    %54 = vector.shape_cast %52 : vector<2x1xi1> to vector<2x1xi1>
    %55 = vector.broadcast %54 : vector<2x1xi1> to vector<2x128xi1>
    %56 = arith.select %55, %53, %28 : vector<2x128xi1>, vector<2x128xf32>
    %57 = arith.truncf %50 : vector<2x256xf32> to vector<2x256xbf16>
    %cst_13 = arith.constant dense<0.000000e+00> : vector<2x1024xf32>
    %58 = tpu.matmul %57, %12, %cst_13 {dimension_numbers = #tpu.dot_dimension_numbers<[1], [0], [0], [1], [0, 0, 1, 1], [], []>} : vector<2x256xbf16>, vector<256x1024xbf16>, vector<2x1024xf32> -> vector<2x1024xf32>
    %59 = vector.extract_strided_slice %11 {offsets = [4, 0], sizes = [2, 1024], strides = [1, 1]} : vector<16x1024xf32> to vector<2x1024xf32>
    %60 = arith.addf %58, %59 : vector<2x1024xf32>
    %61 = vector.extract_strided_slice %60 {offsets = [0, 0], sizes = [2, 768], strides = [1, 1]} : vector<2x1024xf32> to vector<2x768xf32>
    %62 = arith.negf %61 : vector<2x768xf32>
    %63 = math.exp %62 : vector<2x768xf32>
    %cst_14 = arith.constant 1.000000e+00 : f32
    %64 = vector.broadcast %cst_14 : f32 to vector<2x768xf32>
    %65 = arith.addf %64, %63 : vector<2x768xf32>
    %66 = arith.divf %64, %65 : vector<2x768xf32>
    %67 = vector.extract_strided_slice %60 {offsets = [0, 768], sizes = [2, 256], strides = [1, 1]} : vector<2x1024xf32> to vector<2x256xf32>
    %68 = math.tanh %67 : vector<2x256xf32>
    %69 = vector.extract_strided_slice %66 {offsets = [0, 256], sizes = [2, 256], strides = [1, 1]} : vector<2x768xf32> to vector<2x256xf32>
    %70 = arith.mulf %69, %47 : vector<2x256xf32>
    %71 = vector.extract_strided_slice %66 {offsets = [0, 0], sizes = [2, 256], strides = [1, 1]} : vector<2x768xf32> to vector<2x256xf32>
    %72 = arith.mulf %71, %68 : vector<2x256xf32>
    %73 = arith.addf %70, %72 : vector<2x256xf32>
    %74 = vector.extract_strided_slice %66 {offsets = [0, 512], sizes = [2, 256], strides = [1, 1]} : vector<2x768xf32> to vector<2x256xf32>
    %75 = math.tanh %73 : vector<2x256xf32>
    %76 = arith.mulf %74, %75 : vector<2x256xf32>
    %c1_i32 = arith.constant 1 : i32
    %77 = vector.broadcast %c1_i32 : i32 to vector<2x1xi32>
    %78 = arith.cmpi eq, %13, %77 : vector<2x1xi32>
    %79 = vector.extract_strided_slice %76 {offsets = [0, 128], sizes = [2, 128], strides = [1, 1]} : vector<2x256xf32> to vector<2x128xf32>
    %80 = vector.shape_cast %78 : vector<2x1xi1> to vector<2x1xi1>
    %81 = vector.broadcast %80 : vector<2x1xi1> to vector<2x128xi1>
    %82 = arith.select %81, %79, %56 : vector<2x128xi1>, vector<2x128xf32>
    %83 = arith.truncf %76 : vector<2x256xf32> to vector<2x256xbf16>
    %cst_15 = arith.constant dense<0.000000e+00> : vector<2x1024xf32>
    %84 = tpu.matmul %83, %12, %cst_15 {dimension_numbers = #tpu.dot_dimension_numbers<[1], [0], [0], [1], [0, 0, 1, 1], [], []>} : vector<2x256xbf16>, vector<256x1024xbf16>, vector<2x1024xf32> -> vector<2x1024xf32>
    %85 = vector.extract_strided_slice %11 {offsets = [6, 0], sizes = [2, 1024], strides = [1, 1]} : vector<16x1024xf32> to vector<2x1024xf32>
    %86 = arith.addf %84, %85 : vector<2x1024xf32>
    %87 = vector.extract_strided_slice %86 {offsets = [0, 0], sizes = [2, 768], strides = [1, 1]} : vector<2x1024xf32> to vector<2x768xf32>
    %88 = arith.negf %87 : vector<2x768xf32>
    %89 = math.exp %88 : vector<2x768xf32>
    %cst_16 = arith.constant 1.000000e+00 : f32
    %90 = vector.broadcast %cst_16 : f32 to vector<2x768xf32>
    %91 = arith.addf %90, %89 : vector<2x768xf32>
    %92 = arith.divf %90, %91 : vector<2x768xf32>
    %93 = vector.extract_strided_slice %86 {offsets = [0, 768], sizes = [2, 256], strides = [1, 1]} : vector<2x1024xf32> to vector<2x256xf32>
    %94 = math.tanh %93 : vector<2x256xf32>
    %95 = vector.extract_strided_slice %92 {offsets = [0, 256], sizes = [2, 256], strides = [1, 1]} : vector<2x768xf32> to vector<2x256xf32>
    %96 = arith.mulf %95, %73 : vector<2x256xf32>
    %97 = vector.extract_strided_slice %92 {offsets = [0, 0], sizes = [2, 256], strides = [1, 1]} : vector<2x768xf32> to vector<2x256xf32>
    %98 = arith.mulf %97, %94 : vector<2x256xf32>
    %99 = arith.addf %96, %98 : vector<2x256xf32>
    %100 = vector.extract_strided_slice %92 {offsets = [0, 512], sizes = [2, 256], strides = [1, 1]} : vector<2x768xf32> to vector<2x256xf32>
    %101 = math.tanh %99 : vector<2x256xf32>
    %102 = arith.mulf %100, %101 : vector<2x256xf32>
    %c2_i32 = arith.constant 2 : i32
    %103 = vector.broadcast %c2_i32 : i32 to vector<2x1xi32>
    %104 = arith.cmpi eq, %13, %103 : vector<2x1xi32>
    %105 = vector.extract_strided_slice %102 {offsets = [0, 128], sizes = [2, 128], strides = [1, 1]} : vector<2x256xf32> to vector<2x128xf32>
    %106 = vector.shape_cast %104 : vector<2x1xi1> to vector<2x1xi1>
    %107 = vector.broadcast %106 : vector<2x1xi1> to vector<2x128xi1>
    %108 = arith.select %107, %105, %82 : vector<2x128xi1>, vector<2x128xf32>
    %109 = arith.truncf %102 : vector<2x256xf32> to vector<2x256xbf16>
    %cst_17 = arith.constant dense<0.000000e+00> : vector<2x1024xf32>
    %110 = tpu.matmul %109, %12, %cst_17 {dimension_numbers = #tpu.dot_dimension_numbers<[1], [0], [0], [1], [0, 0, 1, 1], [], []>} : vector<2x256xbf16>, vector<256x1024xbf16>, vector<2x1024xf32> -> vector<2x1024xf32>
    %111 = vector.extract_strided_slice %11 {offsets = [8, 0], sizes = [2, 1024], strides = [1, 1]} : vector<16x1024xf32> to vector<2x1024xf32>
    %112 = arith.addf %110, %111 : vector<2x1024xf32>
    %113 = vector.extract_strided_slice %112 {offsets = [0, 0], sizes = [2, 768], strides = [1, 1]} : vector<2x1024xf32> to vector<2x768xf32>
    %114 = arith.negf %113 : vector<2x768xf32>
    %115 = math.exp %114 : vector<2x768xf32>
    %cst_18 = arith.constant 1.000000e+00 : f32
    %116 = vector.broadcast %cst_18 : f32 to vector<2x768xf32>
    %117 = arith.addf %116, %115 : vector<2x768xf32>
    %118 = arith.divf %116, %117 : vector<2x768xf32>
    %119 = vector.extract_strided_slice %112 {offsets = [0, 768], sizes = [2, 256], strides = [1, 1]} : vector<2x1024xf32> to vector<2x256xf32>
    %120 = math.tanh %119 : vector<2x256xf32>
    %121 = vector.extract_strided_slice %118 {offsets = [0, 256], sizes = [2, 256], strides = [1, 1]} : vector<2x768xf32> to vector<2x256xf32>
    %122 = arith.mulf %121, %99 : vector<2x256xf32>
    %123 = vector.extract_strided_slice %118 {offsets = [0, 0], sizes = [2, 256], strides = [1, 1]} : vector<2x768xf32> to vector<2x256xf32>
    %124 = arith.mulf %123, %120 : vector<2x256xf32>
    %125 = arith.addf %122, %124 : vector<2x256xf32>
    %126 = vector.extract_strided_slice %118 {offsets = [0, 512], sizes = [2, 256], strides = [1, 1]} : vector<2x768xf32> to vector<2x256xf32>
    %127 = math.tanh %125 : vector<2x256xf32>
    %128 = arith.mulf %126, %127 : vector<2x256xf32>
    %c3_i32 = arith.constant 3 : i32
    %129 = vector.broadcast %c3_i32 : i32 to vector<2x1xi32>
    %130 = arith.cmpi eq, %13, %129 : vector<2x1xi32>
    %131 = vector.extract_strided_slice %128 {offsets = [0, 128], sizes = [2, 128], strides = [1, 1]} : vector<2x256xf32> to vector<2x128xf32>
    %132 = vector.shape_cast %130 : vector<2x1xi1> to vector<2x1xi1>
    %133 = vector.broadcast %132 : vector<2x1xi1> to vector<2x128xi1>
    %134 = arith.select %133, %131, %108 : vector<2x128xi1>, vector<2x128xf32>
    %135 = arith.truncf %128 : vector<2x256xf32> to vector<2x256xbf16>
    %cst_19 = arith.constant dense<0.000000e+00> : vector<2x1024xf32>
    %136 = tpu.matmul %135, %12, %cst_19 {dimension_numbers = #tpu.dot_dimension_numbers<[1], [0], [0], [1], [0, 0, 1, 1], [], []>} : vector<2x256xbf16>, vector<256x1024xbf16>, vector<2x1024xf32> -> vector<2x1024xf32>
    %137 = vector.extract_strided_slice %11 {offsets = [10, 0], sizes = [2, 1024], strides = [1, 1]} : vector<16x1024xf32> to vector<2x1024xf32>
    %138 = arith.addf %136, %137 : vector<2x1024xf32>
    %139 = vector.extract_strided_slice %138 {offsets = [0, 0], sizes = [2, 768], strides = [1, 1]} : vector<2x1024xf32> to vector<2x768xf32>
    %140 = arith.negf %139 : vector<2x768xf32>
    %141 = math.exp %140 : vector<2x768xf32>
    %cst_20 = arith.constant 1.000000e+00 : f32
    %142 = vector.broadcast %cst_20 : f32 to vector<2x768xf32>
    %143 = arith.addf %142, %141 : vector<2x768xf32>
    %144 = arith.divf %142, %143 : vector<2x768xf32>
    %145 = vector.extract_strided_slice %138 {offsets = [0, 768], sizes = [2, 256], strides = [1, 1]} : vector<2x1024xf32> to vector<2x256xf32>
    %146 = math.tanh %145 : vector<2x256xf32>
    %147 = vector.extract_strided_slice %144 {offsets = [0, 256], sizes = [2, 256], strides = [1, 1]} : vector<2x768xf32> to vector<2x256xf32>
    %148 = arith.mulf %147, %125 : vector<2x256xf32>
    %149 = vector.extract_strided_slice %144 {offsets = [0, 0], sizes = [2, 256], strides = [1, 1]} : vector<2x768xf32> to vector<2x256xf32>
    %150 = arith.mulf %149, %146 : vector<2x256xf32>
    %151 = arith.addf %148, %150 : vector<2x256xf32>
    %152 = vector.extract_strided_slice %144 {offsets = [0, 512], sizes = [2, 256], strides = [1, 1]} : vector<2x768xf32> to vector<2x256xf32>
    %153 = math.tanh %151 : vector<2x256xf32>
    %154 = arith.mulf %152, %153 : vector<2x256xf32>
    %c4_i32 = arith.constant 4 : i32
    %155 = vector.broadcast %c4_i32 : i32 to vector<2x1xi32>
    %156 = arith.cmpi eq, %13, %155 : vector<2x1xi32>
    %157 = vector.extract_strided_slice %154 {offsets = [0, 128], sizes = [2, 128], strides = [1, 1]} : vector<2x256xf32> to vector<2x128xf32>
    %158 = vector.shape_cast %156 : vector<2x1xi1> to vector<2x1xi1>
    %159 = vector.broadcast %158 : vector<2x1xi1> to vector<2x128xi1>
    %160 = arith.select %159, %157, %134 : vector<2x128xi1>, vector<2x128xf32>
    %161 = arith.truncf %154 : vector<2x256xf32> to vector<2x256xbf16>
    %cst_21 = arith.constant dense<0.000000e+00> : vector<2x1024xf32>
    %162 = tpu.matmul %161, %12, %cst_21 {dimension_numbers = #tpu.dot_dimension_numbers<[1], [0], [0], [1], [0, 0, 1, 1], [], []>} : vector<2x256xbf16>, vector<256x1024xbf16>, vector<2x1024xf32> -> vector<2x1024xf32>
    %163 = vector.extract_strided_slice %11 {offsets = [12, 0], sizes = [2, 1024], strides = [1, 1]} : vector<16x1024xf32> to vector<2x1024xf32>
    %164 = arith.addf %162, %163 : vector<2x1024xf32>
    %165 = vector.extract_strided_slice %164 {offsets = [0, 0], sizes = [2, 768], strides = [1, 1]} : vector<2x1024xf32> to vector<2x768xf32>
    %166 = arith.negf %165 : vector<2x768xf32>
    %167 = math.exp %166 : vector<2x768xf32>
    %cst_22 = arith.constant 1.000000e+00 : f32
    %168 = vector.broadcast %cst_22 : f32 to vector<2x768xf32>
    %169 = arith.addf %168, %167 : vector<2x768xf32>
    %170 = arith.divf %168, %169 : vector<2x768xf32>
    %171 = vector.extract_strided_slice %164 {offsets = [0, 768], sizes = [2, 256], strides = [1, 1]} : vector<2x1024xf32> to vector<2x256xf32>
    %172 = math.tanh %171 : vector<2x256xf32>
    %173 = vector.extract_strided_slice %170 {offsets = [0, 256], sizes = [2, 256], strides = [1, 1]} : vector<2x768xf32> to vector<2x256xf32>
    %174 = arith.mulf %173, %151 : vector<2x256xf32>
    %175 = vector.extract_strided_slice %170 {offsets = [0, 0], sizes = [2, 256], strides = [1, 1]} : vector<2x768xf32> to vector<2x256xf32>
    %176 = arith.mulf %175, %172 : vector<2x256xf32>
    %177 = arith.addf %174, %176 : vector<2x256xf32>
    %178 = vector.extract_strided_slice %170 {offsets = [0, 512], sizes = [2, 256], strides = [1, 1]} : vector<2x768xf32> to vector<2x256xf32>
    %179 = math.tanh %177 : vector<2x256xf32>
    %180 = arith.mulf %178, %179 : vector<2x256xf32>
    %c5_i32 = arith.constant 5 : i32
    %181 = vector.broadcast %c5_i32 : i32 to vector<2x1xi32>
    %182 = arith.cmpi eq, %13, %181 : vector<2x1xi32>
    %183 = vector.extract_strided_slice %180 {offsets = [0, 128], sizes = [2, 128], strides = [1, 1]} : vector<2x256xf32> to vector<2x128xf32>
    %184 = vector.shape_cast %182 : vector<2x1xi1> to vector<2x1xi1>
    %185 = vector.broadcast %184 : vector<2x1xi1> to vector<2x128xi1>
    %186 = arith.select %185, %183, %160 : vector<2x128xi1>, vector<2x128xf32>
    %187 = arith.truncf %180 : vector<2x256xf32> to vector<2x256xbf16>
    %cst_23 = arith.constant dense<0.000000e+00> : vector<2x1024xf32>
    %188 = tpu.matmul %187, %12, %cst_23 {dimension_numbers = #tpu.dot_dimension_numbers<[1], [0], [0], [1], [0, 0, 1, 1], [], []>} : vector<2x256xbf16>, vector<256x1024xbf16>, vector<2x1024xf32> -> vector<2x1024xf32>
    %189 = vector.extract_strided_slice %11 {offsets = [14, 0], sizes = [2, 1024], strides = [1, 1]} : vector<16x1024xf32> to vector<2x1024xf32>
    %190 = arith.addf %188, %189 : vector<2x1024xf32>
    %191 = vector.extract_strided_slice %190 {offsets = [0, 0], sizes = [2, 768], strides = [1, 1]} : vector<2x1024xf32> to vector<2x768xf32>
    %192 = arith.negf %191 : vector<2x768xf32>
    %193 = math.exp %192 : vector<2x768xf32>
    %cst_24 = arith.constant 1.000000e+00 : f32
    %194 = vector.broadcast %cst_24 : f32 to vector<2x768xf32>
    %195 = arith.addf %194, %193 : vector<2x768xf32>
    %196 = arith.divf %194, %195 : vector<2x768xf32>
    %197 = vector.extract_strided_slice %190 {offsets = [0, 768], sizes = [2, 256], strides = [1, 1]} : vector<2x1024xf32> to vector<2x256xf32>
    %198 = math.tanh %197 : vector<2x256xf32>
    %199 = vector.extract_strided_slice %196 {offsets = [0, 256], sizes = [2, 256], strides = [1, 1]} : vector<2x768xf32> to vector<2x256xf32>
    %200 = arith.mulf %199, %177 : vector<2x256xf32>
    %201 = vector.extract_strided_slice %196 {offsets = [0, 0], sizes = [2, 256], strides = [1, 1]} : vector<2x768xf32> to vector<2x256xf32>
    %202 = arith.mulf %201, %198 : vector<2x256xf32>
    %203 = arith.addf %200, %202 : vector<2x256xf32>
    %204 = vector.extract_strided_slice %196 {offsets = [0, 512], sizes = [2, 256], strides = [1, 1]} : vector<2x768xf32> to vector<2x256xf32>
    %205 = math.tanh %203 : vector<2x256xf32>
    %206 = arith.mulf %204, %205 : vector<2x256xf32>
    %c6_i32 = arith.constant 6 : i32
    %207 = vector.broadcast %c6_i32 : i32 to vector<2x1xi32>
    %208 = arith.cmpi eq, %13, %207 : vector<2x1xi32>
    %209 = vector.extract_strided_slice %206 {offsets = [0, 128], sizes = [2, 128], strides = [1, 1]} : vector<2x256xf32> to vector<2x128xf32>
    %210 = vector.shape_cast %208 : vector<2x1xi1> to vector<2x1xi1>
    %211 = vector.broadcast %210 : vector<2x1xi1> to vector<2x128xi1>
    %212 = arith.select %211, %209, %186 : vector<2x128xi1>, vector<2x128xf32>
    %213 = arith.truncf %206 : vector<2x256xf32> to vector<2x256xbf16>
    %cst_25 = arith.constant dense<0.000000e+00> : vector<2x1024xf32>
    %214 = tpu.matmul %213, %12, %cst_25 {dimension_numbers = #tpu.dot_dimension_numbers<[1], [0], [0], [1], [0, 0, 1, 1], [], []>} : vector<2x256xbf16>, vector<256x1024xbf16>, vector<2x1024xf32> -> vector<2x1024xf32>
    %215 = vector.extract_strided_slice %11 {offsets = [14, 0], sizes = [2, 1024], strides = [1, 1]} : vector<16x1024xf32> to vector<2x1024xf32>
    %216 = arith.addf %214, %215 : vector<2x1024xf32>
    %217 = vector.extract_strided_slice %216 {offsets = [0, 0], sizes = [2, 768], strides = [1, 1]} : vector<2x1024xf32> to vector<2x768xf32>
    %218 = arith.negf %217 : vector<2x768xf32>
    %219 = math.exp %218 : vector<2x768xf32>
    %cst_26 = arith.constant 1.000000e+00 : f32
    %220 = vector.broadcast %cst_26 : f32 to vector<2x768xf32>
    %221 = arith.addf %220, %219 : vector<2x768xf32>
    %222 = arith.divf %220, %221 : vector<2x768xf32>
    %223 = vector.extract_strided_slice %216 {offsets = [0, 768], sizes = [2, 256], strides = [1, 1]} : vector<2x1024xf32> to vector<2x256xf32>
    %224 = math.tanh %223 : vector<2x256xf32>
    %225 = vector.extract_strided_slice %222 {offsets = [0, 256], sizes = [2, 256], strides = [1, 1]} : vector<2x768xf32> to vector<2x256xf32>
    %226 = arith.mulf %225, %203 : vector<2x256xf32>
    %227 = vector.extract_strided_slice %222 {offsets = [0, 0], sizes = [2, 256], strides = [1, 1]} : vector<2x768xf32> to vector<2x256xf32>
    %228 = arith.mulf %227, %224 : vector<2x256xf32>
    %229 = arith.addf %226, %228 : vector<2x256xf32>
    %230 = vector.extract_strided_slice %222 {offsets = [0, 512], sizes = [2, 256], strides = [1, 1]} : vector<2x768xf32> to vector<2x256xf32>
    %231 = math.tanh %229 : vector<2x256xf32>
    %232 = arith.mulf %230, %231 : vector<2x256xf32>
    %c7_i32 = arith.constant 7 : i32
    %233 = vector.broadcast %c7_i32 : i32 to vector<2x1xi32>
    %234 = arith.cmpi eq, %13, %233 : vector<2x1xi32>
    %235 = vector.extract_strided_slice %232 {offsets = [0, 128], sizes = [2, 128], strides = [1, 1]} : vector<2x256xf32> to vector<2x128xf32>
    %236 = vector.shape_cast %234 : vector<2x1xi1> to vector<2x1xi1>
    %237 = vector.broadcast %236 : vector<2x1xi1> to vector<2x128xi1>
    %238 = arith.select %237, %235, %212 : vector<2x128xi1>, vector<2x128xf32>
    %c0_27 = arith.constant 0 : index
    %c0_28 = arith.constant 0 : index
    %239 = vector.load %arg6[%c0_27, %c0_28] : memref<2x128xf32, #tpu.memory_space<vmem>>, vector<2x128xf32>
    tpu.vector_store %arg6[%c0_27, %c0_28], %238 {strides = array<i32>} : memref<2x128xf32, #tpu.memory_space<vmem>>, vector<2x128xf32>,
    return
  }
  func.func @transform_0(%arg0: i32) -> (i32, i32) {
    %c0_i32 = arith.constant 0 : i32
    %c0_i32_0 = arith.constant 0 : i32
    %c0_i32_1 = arith.constant 0 : i32
    return %c0_i32, %c0_i32_0 : i32, i32
  }
  func.func @transform_1(%arg0: i32) -> (i32, i32) {
    %c0_i32 = arith.constant 0 : i32
    %c0_i32_0 = arith.constant 0 : i32
    %c0_i32_1 = arith.constant 0 : i32
    return %c0_i32, %c0_i32_0 : i32, i32
  }
  func.func @transform_2(%arg0: i32) -> (i32, i32) {
    %c0_i32 = arith.constant 0 : i32
    %c0_i32_0 = arith.constant 0 : i32
    %c0_i32_1 = arith.constant 0 : i32
    return %c0_i32, %c0_i32_0 : i32, i32
  }
  func.func @transform_3(%arg0: i32) -> (i32, i32) {
    %c0_i32 = arith.constant 0 : i32
    %c0_i32_0 = arith.constant 0 : i32
    %c0_i32_1 = arith.constant 0 : i32
    return %c0_i32, %c0_i32_0 : i32, i32
  }
  func.func @transform_4(%arg0: i32) -> (i32, i32) {
    %c0_i32 = arith.constant 0 : i32
    %c0_i32_0 = arith.constant 0 : i32
    %c0_i32_1 = arith.constant 0 : i32
    return %c0_i32, %c0_i32_0 : i32, i32
  }
  func.func @transform_5(%arg0: i32) -> (i32, i32) {
    %c0_i32 = arith.constant 0 : i32
    %c0_i32_0 = arith.constant 0 : i32
    %c0_i32_1 = arith.constant 0 : i32
    return %c0_i32, %c0_i32_0 : i32, i32
  }
}

</mosaic_0001>

<llo_original>
// kernel: tpu_custom_call.1
$region0: #{tpu_custom_call.1}
  #allocation0 [shape = 'u32[]', space=smem, size = 0x4, offset = 0x4, fixed_abs, tag = 'smem constant byte address 0x4 - core index']
  #allocation1 [shape = 'u32[144,128]{1,0:T(1,128)}', space=vmem, size = 0x12000, scoped, tag = 'internal scratch']
  %s0 = inlined_call_operand.vmem [shape: s32[16,1], index: 0, kind: input, shape index: {}]
  %s1 = inlined_call_operand.vmem [shape: s32[2,1], index: 1, kind: input, shape index: {}]
  %s2 = inlined_call_operand.hbm [shape: bf16[16,1024], index: 2, kind: input, shape index: {}]
  %s3 = inlined_call_operand.vmem [shape: f32[1,1024], index: 3, kind: input, shape index: {}]
  %s4 = inlined_call_operand.hbm [shape: bf16[256,1024], index: 4, kind: input, shape index: {}]
  %s5 = inlined_call_operand.hbm [shape: f32[2,128], index: 5, kind: output, shape index: {}]
  %s6 = sld [smem:[#allocation0]]
  $region38: #{tpu_custom_call.1} parent=0
    _
  %s8 = ssub.s32 1, %s6
  %s9 = scalar_select 0, %s8, %s6
  $region1: #{tpu_custom_call.1} parent=0
    #allocation2 [shape = 'u8[32768]{0}', space=vmem, size = 0x8000, scoped, tag = 'input window, operand 2, single buffered']
    #allocation3 [shape = 's32[1]{0}', space=sflag, size = 0x4, scoped, tag = 'scoped memory for tpu_custom_call.1']
    #allocation4 [shape = 's32[1]{0}', space=sflag, size = 0x4, scoped, tag = 'scoped memory for tpu_custom_call.1']
    #allocation5 [shape = 'u8[524288]{0}', space=vmem, size = 0x80000, scoped, tag = 'input window, operand 4, single buffered']
    #allocation6 [shape = 's32[1]{0}', space=sflag, size = 0x4, scoped, tag = 'scoped memory for tpu_custom_call.1']
    #allocation7 [shape = 'u8[1024]{0}', space=vmem, size = 0x400, scoped, tag = 'output window, operand 0, single buffered']
    %10 = vsyncpa [#allocation3], 0
    %11 = vsyncpa [#allocation6], 0
    %12 = vsyncpa [#allocation4], 0
    // Predicated region
    $region2: #{tpu_custom_call.1} parent=1 // pred_check
      _
    $region3: #{tpu_custom_call.1} parent=1 // pred_check_branch
      %14 = sbr.rel (0) target = $region5
    $region4: #{tpu_custom_call.1} parent=1 // pred_region
      _
    $region5: #{tpu_custom_call.1} parent=1 // pred_fallthru
      _
    // Predicated region
    $region6: #{tpu_custom_call.1} parent=1 // pred_check
      _
    $region7: #{tpu_custom_call.1} parent=1 // pred_check_branch
      %16 = sbr.rel (0) target = $region9
    $region8: #{tpu_custom_call.1} parent=1 // pred_region
      _
    $region9: #{tpu_custom_call.1} parent=1 // pred_fallthru
      _
    // Predicated region
    $region10: #{tpu_custom_call.1} parent=1 // pred_check
      _
    $region11: #{tpu_custom_call.1} parent=1 // pred_check_branch
      %18 = sbr.rel (0) target = $region13
    $region12: #{tpu_custom_call.1} parent=1 // pred_region
      %s20 = ssub.s32 1024, 1024
      %21 = vsyncadd [#allocation3], %s20
      %s22 = sshll.u32 [#allocation2], 4
      %s23 = int_to_ptr.vmem [resolvable:$true] %s22
      %28 = dma.hbm_to_vmem [thread:$0]  %s2, 1024, %s23, [#allocation3], 512, 512, 32
    $region13: #{tpu_custom_call.1} parent=1 // pred_fallthru
      _
    // Predicated region
    $region14: #{tpu_custom_call.1} parent=1 // pred_check
      _
    $region15: #{tpu_custom_call.1} parent=1 // pred_check_branch
      %30 = sbr.rel (0) target = $region17
    $region16: #{tpu_custom_call.1} parent=1 // pred_region
      _
    $region17: #{tpu_custom_call.1} parent=1 // pred_fallthru
      _
    // Predicated region
    $region18: #{tpu_custom_call.1} parent=1 // pred_check
      _
    $region19: #{tpu_custom_call.1} parent=1 // pred_check_branch
      %32 = sbr.rel (0) target = $region21
    $region20: #{tpu_custom_call.1} parent=1 // pred_region
      %s34 = ssub.s32 16384, 16384
      %35 = vsyncadd [#allocation6], %s34
      %s36 = sshll.u32 [#allocation5], 4
      %s37 = int_to_ptr.vmem [resolvable:$true] %s36
      %42 = dma.hbm_to_vmem [thread:$0]  %s4, 16384, %s37, [#allocation6], 512, 512, 32
    $region21: #{tpu_custom_call.1} parent=1 // pred_fallthru
      _
    // Predicated region
    $region22: #{tpu_custom_call.1} parent=1 // pred_check
      _
    $region23: #{tpu_custom_call.1} parent=1 // pred_check_branch
      %44 = sbr.rel (0) target = $region25
    $region24: #{tpu_custom_call.1} parent=1 // pred_region
      %45 = dma.done [#allocation3], 1024
    $region25: #{tpu_custom_call.1} parent=1 // pred_fallthru
      _
    // Predicated region
    $region26: #{tpu_custom_call.1} parent=1 // pred_check
      _
    $region27: #{tpu_custom_call.1} parent=1 // pred_check_branch
      %47 = sbr.rel (0) target = $region29
    $region28: #{tpu_custom_call.1} parent=1 // pred_region
      %48 = dma.done [#allocation6], 16384
    $region29: #{tpu_custom_call.1} parent=1 // pred_fallthru
      _
    %v50 = vld [vmem:[%s0] sm:$0xff]
    %v51 = vld [vmem:[%s0 + $0x8] sm:$0xff]
    %v52 = vlaneseq
    %v53 = vand.u32 %v52, 127
    %54 = vset.pattern.permute.xlu0 0
    %55 = vperm.xlu0 %54, %v50
    %v56 = vpop.permute.xlu0 %55
    %57 = vset.pattern.permute.xlu0 0
    %58 = vperm.xlu0 %57, %v51
    %v59 = vpop.permute.xlu0 %58
    %vm60 = vcmp.eq.s32.totalorder %v56, %v53
    %vm61 = vcmp.eq.s32.totalorder %v59, %v53
    %v62 = vsel %vm60, 1, 0
    %v63 = vsel %vm61, 1, 0
    %v64 = vcvt.s32.f32 %v62
    %v65 = vcvt.s32.f32 %v63
    %v66 = vpack.c.bf16 %v65, %v64
    %v67 = vld [vmem:[#allocation2] sm:$0xff]
    %v68 = vld [vmem:[#allocation2 + $0x8] sm:$0xff]
    %v69 = vld [vmem:[#allocation2 + $0x10] sm:$0xff]
    %v70 = vld [vmem:[#allocation2 + $0x18] sm:$0xff]
    %v71 = vld [vmem:[#allocation2 + $0x20] sm:$0xff]
    %v72 = vld [vmem:[#allocation2 + $0x28] sm:$0xff]
    %v73 = vld [vmem:[#allocation2 + $0x30] sm:$0xff]
    %v74 = vld [vmem:[#allocation2 + $0x38] sm:$0xff]
    %v75 = vld [vmem:[%s3] sm:$0xff]
    %v77 = vlaneseq
    %v78 = vshrl.u32 %v77, 7
    %v79 = vsub.s32 0, %v78
    %v80 = vrot.slane %v75, %v79
    %v81 = vlaneseq
    %v82 = vshrl.u32 %v81, 7
    %v83 = vsub.s32 1, %v82
    %v84 = vrot.slane %v75, %v83
    %v85 = vlaneseq
    %v86 = vshrl.u32 %v85, 7
    %v87 = vsub.s32 2, %v86
    %v88 = vrot.slane %v75, %v87
    %v89 = vlaneseq
    %v90 = vshrl.u32 %v89, 7
    %v91 = vsub.s32 3, %v90
    %v92 = vrot.slane %v75, %v91
    %v93 = vlaneseq
    %v94 = vshrl.u32 %v93, 7
    %v95 = vsub.s32 4, %v94
    %v96 = vrot.slane %v75, %v95
    %v97 = vlaneseq
    %v98 = vshrl.u32 %v97, 7
    %v99 = vsub.s32 5, %v98
    %v100 = vrot.slane %v75, %v99
    %v101 = vlaneseq
    %v102 = vshrl.u32 %v101, 7
    %v103 = vsub.s32 6, %v102
    %v104 = vrot.slane %v75, %v103
    %v105 = vlaneseq
    %v106 = vshrl.u32 %v105, 7
    %v107 = vsub.s32 7, %v106
    %v108 = vrot.slane %v75, %v107
    %v125 = vunpack.c.l.b16 %v67
    %v126 = vunpack.c.h.b16 %v67
    %v127 = vunpack.c.l.b16 %v68
    %v128 = vunpack.c.h.b16 %v68
    %v129 = vunpack.c.l.b16 %v69
    %v130 = vunpack.c.h.b16 %v69
    %v131 = vunpack.c.l.b16 %v70
    %v132 = vunpack.c.h.b16 %v70
    %v133 = vunpack.c.l.b16 %v71
    %v134 = vunpack.c.h.b16 %v71
    %v135 = vunpack.c.l.b16 %v72
    %v136 = vunpack.c.h.b16 %v72
    %v137 = vunpack.c.l.b16 %v73
    %v138 = vunpack.c.h.b16 %v73
    %v139 = vunpack.c.l.b16 %v74
    %v140 = vunpack.c.h.b16 %v74
    %v141 = vpack.c.b16 %v133, %v125
    %v142 = vpack.c.b16 %v134, %v126
    %v143 = vpack.c.b16 %v135, %v127
    %v144 = vpack.c.b16 %v136, %v128
    %v145 = vpack.c.b16 %v137, %v129
    %v146 = vpack.c.b16 %v138, %v130
    %v147 = vpack.c.b16 %v139, %v131
    %v148 = vpack.c.b16 %v140, %v132
    %vm157 = vcmask 130048
    %v159 = vsel %vm157, %v66, 0
    %161 = vmatprep.subr.bf16.mxu0 %v142
    %162 = vmatpush1.bf16.msra.mxu0 %v141
    %163 = vmatprep.subr.bf16.mxu0 0
    %164 = vmatpush1.bf16.msra.mxu0 0
    %165 = vmatprep.subr.bf16.mxu0 0
    %166 = vmatpush1.bf16.msra.mxu0 0
    %167 = vmatprep.subr.bf16.mxu0 0
    %168 = vmatpush1.bf16.msra.mxu0 0
    %169 = vmatprep.subr.bf16.mxu0 0
    %170 = vmatpush1.bf16.msra.mxu0 0
    %171 = vmatprep.subr.bf16.mxu0 0
    %172 = vmatpush1.bf16.msra.mxu0 0
    %173 = vmatprep.subr.bf16.mxu0 0
    %174 = vmatpush1.bf16.msra.mxu0 0
    %175 = vmatprep.subr.bf16.mxu0 0
    %176 = vmatpush1.bf16.msra.mxu0 0
    %177 = vmatprep.subr.bf16.mxu0 0
    %178 = vmatpush1.bf16.msra.mxu0 0
    %179 = vmatprep.subr.bf16.mxu0 0
    %180 = vmatpush1.bf16.msra.mxu0 0
    %181 = vmatprep.subr.bf16.mxu0 0
    %182 = vmatpush1.bf16.msra.mxu0 0
    %183 = vmatprep.subr.bf16.mxu0 0
    %184 = vmatpush1.bf16.msra.mxu0 0
    %185 = vmatprep.subr.bf16.mxu0 0
    %186 = vmatpush1.bf16.msra.mxu0 0
    %187 = vmatprep.subr.bf16.mxu0 0
    %188 = vmatpush1.bf16.msra.mxu0 0
    %189 = vmatprep.subr.bf16.mxu0 0
    %190 = vmatpush1.bf16.msra.mxu0 0
    %191 = vmatprep.subr.bf16.mxu0 0
    %192 = vmatpush1.bf16.msra.mxu0 0
    %193 = vmatprep.mubr.bf16.mxu0 0
    %194 = vmatmul.mubr.bf16.gmra.mrb[0].mxu0 %v159
    %v195 = vpop.f32.mrb[0].mxu0
    %v196 = vadd.f32 %v80, %v195
    %v197 = vpop.f32.mrb[0].mxu0
    %v198 = vadd.f32 %v84, %v197
    %v199 = vpop.f32.mrb[0].mxu0
    %v200 = vadd.f32 %v80, %v199
    %v201 = vpop.f32.mrb[0].mxu0
    %v202 = vadd.f32 %v84, %v201
    %203 = vdwg.mxu0
    %204 = vmatprep.subr.bf16.mxu0 %v144
    %205 = vmatpush1.bf16.msra.mxu0 %v143
    %206 = vmatprep.subr.bf16.mxu0 0
    %207 = vmatpush1.bf16.msra.mxu0 0
    %208 = vmatprep.subr.bf16.mxu0 0
    %209 = vmatpush1.bf16.msra.mxu0 0
    %210 = vmatprep.subr.bf16.mxu0 0
    %211 = vmatpush1.bf16.msra.mxu0 0
    %212 = vmatprep.subr.bf16.mxu0 0
    %213 = vmatpush1.bf16.msra.mxu0 0
    %214 = vmatprep.subr.bf16.mxu0 0
    %215 = vmatpush1.bf16.msra.mxu0 0
    %216 = vmatprep.subr.bf16.mxu0 0
    %217 = vmatpush1.bf16.msra.mxu0 0
    %218 = vmatprep.subr.bf16.mxu0 0
    %219 = vmatpush1.bf16.msra.mxu0 0
    %220 = vmatprep.subr.bf16.mxu0 0
    %221 = vmatpush1.bf16.msra.mxu0 0
    %222 = vmatprep.subr.bf16.mxu0 0
    %223 = vmatpush1.bf16.msra.mxu0 0
    %224 = vmatprep.subr.bf16.mxu0 0
    %225 = vmatpush1.bf16.msra.mxu0 0
    %226 = vmatprep.subr.bf16.mxu0 0
    %227 = vmatpush1.bf16.msra.mxu0 0
    %228 = vmatprep.subr.bf16.mxu0 0
    %229 = vmatpush1.bf16.msra.mxu0 0
    %230 = vmatprep.subr.bf16.mxu0 0
    %231 = vmatpush1.bf16.msra.mxu0 0
    %232 = vmatprep.subr.bf16.mxu0 0
    %233 = vmatpush1.bf16.msra.mxu0 0
    %234 = vmatprep.subr.bf16.mxu0 0
    %235 = vmatpush1.bf16.msra.mxu0 0
    %236 = vmatprep.mubr.bf16.mxu0 0
    %237 = vmatmul.mubr.bf16.gmra.mrb[0].mxu0 %v159
    %v238 = vpop.f32.mrb[0].mxu0
    %v239 = vadd.f32 %v88, %v238
    %v240 = vpop.f32.mrb[0].mxu0
    %v241 = vadd.f32 %v92, %v240
    %v242 = vpop.f32.mrb[0].mxu0
    %v243 = vadd.f32 %v88, %v242
    %v244 = vpop.f32.mrb[0].mxu0
    %v245 = vadd.f32 %v92, %v244
    %246 = vdwg.mxu0
    %247 = vmatprep.subr.bf16.mxu0 %v146
    %248 = vmatpush1.bf16.msra.mxu0 %v145
    %249 = vmatprep.subr.bf16.mxu0 0
    %250 = vmatpush1.bf16.msra.mxu0 0
    %251 = vmatprep.subr.bf16.mxu0 0
    %252 = vmatpush1.bf16.msra.mxu0 0
    %253 = vmatprep.subr.bf16.mxu0 0
    %254 = vmatpush1.bf16.msra.mxu0 0
    %255 = vmatprep.subr.bf16.mxu0 0
    %256 = vmatpush1.bf16.msra.mxu0 0
    %257 = vmatprep.subr.bf16.mxu0 0
    %258 = vmatpush1.bf16.msra.mxu0 0
    %259 = vmatprep.subr.bf16.mxu0 0
    %260 = vmatpush1.bf16.msra.mxu0 0
    %261 = vmatprep.subr.bf16.mxu0 0
    %262 = vmatpush1.bf16.msra.mxu0 0
    %263 = vmatprep.subr.bf16.mxu0 0
    %264 = vmatpush1.bf16.msra.mxu0 0
    %265 = vmatprep.subr.bf16.mxu0 0
    %266 = vmatpush1.bf16.msra.mxu0 0
    %267 = vmatprep.subr.bf16.mxu0 0
    %268 = vmatpush1.bf16.msra.mxu0 0
    %269 = vmatprep.subr.bf16.mxu0 0
    %270 = vmatpush1.bf16.msra.mxu0 0
    %271 = vmatprep.subr.bf16.mxu0 0
    %272 = vmatpush1.bf16.msra.mxu0 0
    %273 = vmatprep.subr.bf16.mxu0 0
    %274 = vmatpush1.bf16.msra.mxu0 0
    %275 = vmatprep.subr.bf16.mxu0 0
    %276 = vmatpush1.bf16.msra.mxu0 0
    %277 = vmatprep.subr.bf16.mxu0 0
    %278 = vmatpush1.bf16.msra.mxu0 0
    %279 = vmatprep.mubr.bf16.mxu0 0
    %280 = vmatmul.mubr.bf16.gmra.mrb[0].mxu0 %v159
    %v281 = vpop.f32.mrb[0].mxu0
    %v282 = vadd.f32 %v96, %v281
    %v283 = vpop.f32.mrb[0].mxu0
    %v284 = vadd.f32 %v100, %v283
    %v285 = vpop.f32.mrb[0].mxu0
    %v286 = vadd.f32 %v96, %v285
    %v287 = vpop.f32.mrb[0].mxu0
    %v288 = vadd.f32 %v100, %v287
    %289 = vdwg.mxu0
    %290 = vmatprep.subr.bf16.mxu0 %v148
    %291 = vmatpush1.bf16.msra.mxu0 %v147
    %292 = vmatprep.subr.bf16.mxu0 0
    %293 = vmatpush1.bf16.msra.mxu0 0
    %294 = vmatprep.subr.bf16.mxu0 0
    %295 = vmatpush1.bf16.msra.mxu0 0
    %296 = vmatprep.subr.bf16.mxu0 0
    %297 = vmatpush1.bf16.msra.mxu0 0
    %298 = vmatprep.subr.bf16.mxu0 0
    %299 = vmatpush1.bf16.msra.mxu0 0
    %300 = vmatprep.subr.bf16.mxu0 0
    %301 = vmatpush1.bf16.msra.mxu0 0
    %302 = vmatprep.subr.bf16.mxu0 0
    %303 = vmatpush1.bf16.msra.mxu0 0
    %304 = vmatprep.subr.bf16.mxu0 0
    %305 = vmatpush1.bf16.msra.mxu0 0
    %306 = vmatprep.subr.bf16.mxu0 0
    %307 = vmatpush1.bf16.msra.mxu0 0
    %308 = vmatprep.subr.bf16.mxu0 0
    %309 = vmatpush1.bf16.msra.mxu0 0
    %310 = vmatprep.subr.bf16.mxu0 0
    %311 = vmatpush1.bf16.msra.mxu0 0
    %312 = vmatprep.subr.bf16.mxu0 0
    %313 = vmatpush1.bf16.msra.mxu0 0
    %314 = vmatprep.subr.bf16.mxu0 0
    %315 = vmatpush1.bf16.msra.mxu0 0
    %316 = vmatprep.subr.bf16.mxu0 0
    %317 = vmatpush1.bf16.msra.mxu0 0
    %318 = vmatprep.subr.bf16.mxu0 0
    %319 = vmatpush1.bf16.msra.mxu0 0
    %320 = vmatprep.subr.bf16.mxu0 0
    %321 = vmatpush1.bf16.msra.mxu0 0
    %322 = vmatprep.mubr.bf16.mxu0 0
    %323 = vmatmul.mubr.bf16.gmra.mrb[0].mxu0 %v159
    %v324 = vpop.f32.mrb[0].mxu0
    %v325 = vadd.f32 %v104, %v324
    %v326 = vpop.f32.mrb[0].mxu0
    %v327 = vadd.f32 %v108, %v326
    %v328 = vpop.f32.mrb[0].mxu0
    %v329 = vadd.f32 %v104, %v328
    %v330 = vpop.f32.mrb[0].mxu0
    %v331 = vadd.f32 %v108, %v330
    %332 = vdwg.mxu0
    %v333 = vld [vmem:[#allocation5] sm:$0xff]
    %v334 = vld [vmem:[#allocation5 + $0x8] sm:$0xff]
    %v335 = vld [vmem:[#allocation5 + $0x10] sm:$0xff]
    %v336 = vld [vmem:[#allocation5 + $0x18] sm:$0xff]
    %v337 = vld [vmem:[#allocation5 + $0x20] sm:$0xff]
    %v338 = vld [vmem:[#allocation5 + $0x28] sm:$0xff]
    %v339 = vld [vmem:[#allocation5 + $0x30] sm:$0xff]
    %v340 = vld [vmem:[#allocation5 + $0x38] sm:$0xff]
    %v341 = vld [vmem:[#allocation5 + $0x40] sm:$0xff]
    %v342 = vld [vmem:[#allocation5 + $0x48] sm:$0xff]
    %v343 = vld [vmem:[#allocation5 + $0x50] sm:$0xff]
    %v344 = vld [vmem:[#allocation5 + $0x58] sm:$0xff]
    %v345 = vld [vmem:[#allocation5 + $0x60] sm:$0xff]
    %v346 = vld [vmem:[#allocation5 + $0x68] sm:$0xff]
    %v347 = vld [vmem:[#allocation5 + $0x70] sm:$0xff]
    %v348 = vld [vmem:[#allocation5 + $0x78] sm:$0xff]
    %v349 = vld [vmem:[#allocation5 + $0x80] sm:$0xff]
    %v350 = vld [vmem:[#allocation5 + $0x88] sm:$0xff]
    %v351 = vld [vmem:[#allocation5 + $0x90] sm:$0xff]
    %v352 = vld [vmem:[#allocation5 + $0x98] sm:$0xff]
    %v353 = vld [vmem:[#allocation5 + $0xa0] sm:$0xff]
    %v354 = vld [vmem:[#allocation5 + $0xa8] sm:$0xff]
    %v355 = vld [vmem:[#allocation5 + $0xb0] sm:$0xff]
    %v356 = vld [vmem:[#allocation5 + $0xb8] sm:$0xff]
    %v357 = vld [vmem:[#allocation5 + $0xc0] sm:$0xff]
    %v358 = vld [vmem:[#allocation5 + $0xc8] sm:$0xff]
    %v359 = vld [vmem:[#allocation5 + $0xd0] sm:$0xff]
    %v360 = vld [vmem:[#allocation5 + $0xd8] sm:$0xff]
    %v361 = vld [vmem:[#allocation5 + $0xe0] sm:$0xff]
    %v362 = vld [vmem:[#allocation5 + $0xe8] sm:$0xff]
    %v363 = vld [vmem:[#allocation5 + $0xf0] sm:$0xff]
    %v364 = vld [vmem:[#allocation5 + $0xf8] sm:$0xff]
    %v365 = vld [vmem:[#allocation5 + $0x100] sm:$0xff]
    %v366 = vld [vmem:[#allocation5 + $0x108] sm:$0xff]
    %v367 = vld [vmem:[#allocation5 + $0x110] sm:$0xff]
    %v368 = vld [vmem:[#allocation5 + $0x118] sm:$0xff]
    %v369 = vld [vmem:[#allocation5 + $0x120] sm:$0xff]
    %v370 = vld [vmem:[#allocation5 + $0x128] sm:$0xff]
    %v371 = vld [vmem:[#allocation5 + $0x130] sm:$0xff]
    %v372 = vld [vmem:[#allocation5 + $0x138] sm:$0xff]
    %v373 = vld [vmem:[#allocation5 + $0x140] sm:$0xff]
    %v374 = vld [vmem:[#allocation5 + $0x148] sm:$0xff]
    %v375 = vld [vmem:[#allocation5 + $0x150] sm:$0xff]
    %v376 = vld [vmem:[#allocation5 + $0x158] sm:$0xff]
    %v377 = vld [vmem:[#allocation5 + $0x160] sm:$0xff]
    %v378 = vld [vmem:[#allocation5 + $0x168] sm:$0xff]
    %v379 = vld [vmem:[#allocation5 + $0x170] sm:$0xff]
    %v380 = vld [vmem:[#allocation5 + $0x178] sm:$0xff]
    %v381 = vld [vmem:[#allocation5 + $0x180] sm:$0xff]
    %v382 = vld [vmem:[#allocation5 + $0x188] sm:$0xff]
    %v383 = vld [vmem:[#allocation5 + $0x190] sm:$0xff]
    %v384 = vld [vmem:[#allocation5 + $0x198] sm:$0xff]
    %v385 = vld [vmem:[#allocation5 + $0x1a0] sm:$0xff]
    %v386 = vld [vmem:[#allocation5 + $0x1a8] sm:$0xff]
    %v387 = vld [vmem:[#allocation5 + $0x1b0] sm:$0xff]
    %v388 = vld [vmem:[#allocation5 + $0x1b8] sm:$0xff]
    %v389 = vld [vmem:[#allocation5 + $0x1c0] sm:$0xff]
    %v390 = vld [vmem:[#allocation5 + $0x1c8] sm:$0xff]
    %v391 = vld [vmem:[#allocation5 + $0x1d0] sm:$0xff]
    %v392 = vld [vmem:[#allocation5 + $0x1d8] sm:$0xff]
    %v393 = vld [vmem:[#allocation5 + $0x1e0] sm:$0xff]
    %v394 = vld [vmem:[#allocation5 + $0x1e8] sm:$0xff]
    %v395 = vld [vmem:[#allocation5 + $0x1f0] sm:$0xff]
    %v396 = vld [vmem:[#allocation5 + $0x1f8] sm:$0xff]
    %v397 = vld [vmem:[#allocation5 + $0x200] sm:$0xff]
    %v398 = vld [vmem:[#allocation5 + $0x208] sm:$0xff]
    %v399 = vld [vmem:[#allocation5 + $0x210] sm:$0xff]
    %v400 = vld [vmem:[#allocation5 + $0x218] sm:$0xff]
    %v401 = vld [vmem:[#allocation5 + $0x220] sm:$0xff]
    %v402 = vld [vmem:[#allocation5 + $0x228] sm:$0xff]
    %v403 = vld [vmem:[#allocation5 + $0x230] sm:$0xff]
    %v404 = vld [vmem:[#allocation5 + $0x238] sm:$0xff]
    %v405 = vld [vmem:[#allocation5 + $0x240] sm:$0xff]
    %v406 = vld [vmem:[#allocation5 + $0x248] sm:$0xff]
    %v407 = vld [vmem:[#allocation5 + $0x250] sm:$0xff]
    %v408 = vld [vmem:[#allocation5 + $0x258] sm:$0xff]
    %v409 = vld [vmem:[#allocation5 + $0x260] sm:$0xff]
    %v410 = vld [vmem:[#allocation5 + $0x268] sm:$0xff]
    %v411 = vld [vmem:[#allocation5 + $0x270] sm:$0xff]
    %v412 = vld [vmem:[#allocation5 + $0x278] sm:$0xff]
    %v413 = vld [vmem:[#allocation5 + $0x280] sm:$0xff]
    %v414 = vld [vmem:[#allocation5 + $0x288] sm:$0xff]
    %v415 = vld [vmem:[#allocation5 + $0x290] sm:$0xff]
    %v416 = vld [vmem:[#allocation5 + $0x298] sm:$0xff]
    %v417 = vld [vmem:[#allocation5 + $0x2a0] sm:$0xff]
    %v418 = vld [vmem:[#allocation5 + $0x2a8] sm:$0xff]
    %v419 = vld [vmem:[#allocation5 + $0x2b0] sm:$0xff]
    %v420 = vld [vmem:[#allocation5 + $0x2b8] sm:$0xff]
    %v421 = vld [vmem:[#allocation5 + $0x2c0] sm:$0xff]
    %v422 = vld [vmem:[#allocation5 + $0x2c8] sm:$0xff]
    %v423 = vld [vmem:[#allocation5 + $0x2d0] sm:$0xff]
    %v424 = vld [vmem:[#allocation5 + $0x2d8] sm:$0xff]
    %v425 = vld [vmem:[#allocation5 + $0x2e0] sm:$0xff]
    %v426 = vld [vmem:[#allocation5 + $0x2e8] sm:$0xff]
    %v427 = vld [vmem:[#allocation5 + $0x2f0] sm:$0xff]
    %v428 = vld [vmem:[#allocation5 + $0x2f8] sm:$0xff]
    %v429 = vld [vmem:[#allocation5 + $0x300] sm:$0xff]
    %v430 = vld [vmem:[#allocation5 + $0x308] sm:$0xff]
    %v431 = vld [vmem:[#allocation5 + $0x310] sm:$0xff]
    %v432 = vld [vmem:[#allocation5 + $0x318] sm:$0xff]
    %v433 = vld [vmem:[#allocation5 + $0x320] sm:$0xff]
    %v434 = vld [vmem:[#allocation5 + $0x328] sm:$0xff]
    %v435 = vld [vmem:[#allocation5 + $0x330] sm:$0xff]
    %v436 = vld [vmem:[#allocation5 + $0x338] sm:$0xff]
    %v437 = vld [vmem:[#allocation5 + $0x340] sm:$0xff]
    %v438 = vld [vmem:[#allocation5 + $0x348] sm:$0xff]
    %v439 = vld [vmem:[#allocation5 + $0x350] sm:$0xff]
    %v440 = vld [vmem:[#allocation5 + $0x358] sm:$0xff]
    %v441 = vld [vmem:[#allocation5 + $0x360] sm:$0xff]
    %v442 = vld [vmem:[#allocation5 + $0x368] sm:$0xff]
    %v443 = vld [vmem:[#allocation5 + $0x370] sm:$0xff]
    %v444 = vld [vmem:[#allocation5 + $0x378] sm:$0xff]
    %v445 = vld [vmem:[#allocation5 + $0x380] sm:$0xff]
    %v446 = vld [vmem:[#allocation5 + $0x388] sm:$0xff]
    %v447 = vld [vmem:[#allocation5 + $0x390] sm:$0xff]
    %v448 = vld [vmem:[#allocation5 + $0x398] sm:$0xff]
    %v449 = vld [vmem:[#allocation5 + $0x3a0] sm:$0xff]
    %v450 = vld [vmem:[#allocation5 + $0x3a8] sm:$0xff]
    %v451 = vld [vmem:[#allocation5 + $0x3b0] sm:$0xff]
    %v452 = vld [vmem:[#allocation5 + $0x3b8] sm:$0xff]
    %v453 = vld [vmem:[#allocation5 + $0x3c0] sm:$0xff]
    %v454 = vld [vmem:[#allocation5 + $0x3c8] sm:$0xff]
    %v455 = vld [vmem:[#allocation5 + $0x3d0] sm:$0xff]
    %v456 = vld [vmem:[#allocation5 + $0x3d8] sm:$0xff]
    %v457 = vld [vmem:[#allocation5 + $0x3e0] sm:$0xff]
    %v458 = vld [vmem:[#allocation5 + $0x3e8] sm:$0xff]
    %v459 = vld [vmem:[#allocation5 + $0x3f0] sm:$0xff]
    %v460 = vld [vmem:[#allocation5 + $0x3f8] sm:$0xff]
    %v461 = vld [vmem:[%s1] sm:$0x3]
    %v462 = vxor.u32 %v196, 2147483648
    %v463 = vxor.u32 %v282, 2147483648
    %v464 = vmul.f32 %v462, 1.442695
    %v465 = vpow.pop %v464
    %v466 = vmul.f32 %v463, 1.442695
    %v467 = vpow.pop %v466
    %v468 = vadd.f32 %v465, 1.0
    %v469 = vadd.f32 %v467, 1.0
    %v470 = vrcp.pop %v468
    %v471 = vmul.f32 1.0, %v470
    %v472 = vrcp.pop %v469
    %v473 = vmul.f32 1.0, %v472
    %v474 = vtanh.pop %v325
    %v475 = vmul.f32 %v471, %v474
    %v476 = vtanh.pop %v475
    %v477 = vmul.f32 %v473, %v476
    %v478 = vpack.c.bf16 %v477, %v477
    %v479 = vpack.c.bf16 0.0, 0.0
    %v608 = vunpack.c.l.b16 %v333
    %v609 = vunpack.c.h.b16 %v333
    %v610 = vunpack.c.l.b16 %v334
    %v611 = vunpack.c.h.b16 %v334
    %v612 = vunpack.c.l.b16 %v335
    %v613 = vunpack.c.h.b16 %v335
    %v614 = vunpack.c.l.b16 %v336
    %v615 = vunpack.c.h.b16 %v336
    %v616 = vunpack.c.l.b16 %v337
    %v617 = vunpack.c.h.b16 %v337
    %v618 = vunpack.c.l.b16 %v338
    %v619 = vunpack.c.h.b16 %v338
    %v620 = vunpack.c.l.b16 %v339
    %v621 = vunpack.c.h.b16 %v339
    %v622 = vunpack.c.l.b16 %v340
    %v623 = vunpack.c.h.b16 %v340
    %v624 = vunpack.c.l.b16 %v341
    %v625 = vunpack.c.h.b16 %v341
    %v626 = vunpack.c.l.b16 %v342
    %v627 = vunpack.c.h.b16 %v342
    %v628 = vunpack.c.l.b16 %v343
    %v629 = vunpack.c.h.b16 %v343
    %v630 = vunpack.c.l.b16 %v344
    %v631 = vunpack.c.h.b16 %v344
    %v632 = vunpack.c.l.b16 %v345
    %v633 = vunpack.c.h.b16 %v345
    %v634 = vunpack.c.l.b16 %v346
    %v635 = vunpack.c.h.b16 %v346
    %v636 = vunpack.c.l.b16 %v347
    %v637 = vunpack.c.h.b16 %v347
    %v638 = vunpack.c.l.b16 %v348
    %v639 = vunpack.c.h.b16 %v348
    %v640 = vunpack.c.l.b16 %v349
    %v641 = vunpack.c.h.b16 %v349
    %v642 = vunpack.c.l.b16 %v350
    %v643 = vunpack.c.h.b16 %v350
    %v644 = vunpack.c.l.b16 %v351
    %v645 = vunpack.c.h.b16 %v351
    %v646 = vunpack.c.l.b16 %v352
    %v647 = vunpack.c.h.b16 %v352
    %v648 = vunpack.c.l.b16 %v353
    %v649 = vunpack.c.h.b16 %v353
    %v650 = vunpack.c.l.b16 %v354
    %v651 = vunpack.c.h.b16 %v354
    %v652 = vunpack.c.l.b16 %v355
    %v653 = vunpack.c.h.b16 %v355
    %v654 = vunpack.c.l.b16 %v356
    %v655 = vunpack.c.h.b16 %v356
    %v656 = vunpack.c.l.b16 %v357
    %v657 = vunpack.c.h.b16 %v357
    %v658 = vunpack.c.l.b16 %v358
    %v659 = vunpack.c.h.b16 %v358
    %v660 = vunpack.c.l.b16 %v359
    %v661 = vunpack.c.h.b16 %v359
    %v662 = vunpack.c.l.b16 %v360
    %v663 = vunpack.c.h.b16 %v360
    %v664 = vunpack.c.l.b16 %v361
    %v665 = vunpack.c.h.b16 %v361
    %v666 = vunpack.c.l.b16 %v362
    %v667 = vunpack.c.h.b16 %v362
    %v668 = vunpack.c.l.b16 %v363
    %v669 = vunpack.c.h.b16 %v363
    %v670 = vunpack.c.l.b16 %v364
    %v671 = vunpack.c.h.b16 %v364
    %v672 = vunpack.c.l.b16 %v365
    %v673 = vunpack.c.h.b16 %v365
    %v674 = vunpack.c.l.b16 %v366
    %v675 = vunpack.c.h.b16 %v366
    %v676 = vunpack.c.l.b16 %v367
    %v677 = vunpack.c.h.b16 %v367
    %v678 = vunpack.c.l.b16 %v368
    %v679 = vunpack.c.h.b16 %v368
    %v680 = vunpack.c.l.b16 %v369
    %v681 = vunpack.c.h.b16 %v369
    %v682 = vunpack.c.l.b16 %v370
    %v683 = vunpack.c.h.b16 %v370
    %v684 = vunpack.c.l.b16 %v371
    %v685 = vunpack.c.h.b16 %v371
    %v686 = vunpack.c.l.b16 %v372
    %v687 = vunpack.c.h.b16 %v372
    %v688 = vunpack.c.l.b16 %v373
    %v689 = vunpack.c.h.b16 %v373
    %v690 = vunpack.c.l.b16 %v374
    %v691 = vunpack.c.h.b16 %v374
    %v692 = vunpack.c.l.b16 %v375
    %v693 = vunpack.c.h.b16 %v375
    %v694 = vunpack.c.l.b16 %v376
    %v695 = vunpack.c.h.b16 %v376
    %v696 = vunpack.c.l.b16 %v377
    %v697 = vunpack.c.h.b16 %v377
    %v698 = vunpack.c.l.b16 %v378
    %v699 = vunpack.c.h.b16 %v378
    %v700 = vunpack.c.l.b16 %v379
    %v701 = vunpack.c.h.b16 %v379
    %v702 = vunpack.c.l.b16 %v380
    %v703 = vunpack.c.h.b16 %v380
    %v704 = vunpack.c.l.b16 %v381
    %v705 = vunpack.c.h.b16 %v381
    %v706 = vunpack.c.l.b16 %v382
    %v707 = vunpack.c.h.b16 %v382
    %v708 = vunpack.c.l.b16 %v383
    %v709 = vunpack.c.h.b16 %v383
    %v710 = vunpack.c.l.b16 %v384
    %v711 = vunpack.c.h.b16 %v384
    %v712 = vunpack.c.l.b16 %v385
    %v713 = vunpack.c.h.b16 %v385
    %v714 = vunpack.c.l.b16 %v386
    %v715 = vunpack.c.h.b16 %v386
    %v716 = vunpack.c.l.b16 %v387
    %v717 = vunpack.c.h.b16 %v387
    %v718 = vunpack.c.l.b16 %v388
    %v719 = vunpack.c.h.b16 %v388
    %v720 = vunpack.c.l.b16 %v389
    %v721 = vunpack.c.h.b16 %v389
    %v722 = vunpack.c.l.b16 %v390
    %v723 = vunpack.c.h.b16 %v390
    %v724 = vunpack.c.l.b16 %v391
    %v725 = vunpack.c.h.b16 %v391
    %v726 = vunpack.c.l.b16 %v392
    %v727 = vunpack.c.h.b16 %v392
    %v728 = vunpack.c.l.b16 %v393
    %v729 = vunpack.c.h.b16 %v393
    %v730 = vunpack.c.l.b16 %v394
    %v731 = vunpack.c.h.b16 %v394
    %v732 = vunpack.c.l.b16 %v395
    %v733 = vunpack.c.h.b16 %v395
    %v734 = vunpack.c.l.b16 %v396
    %v735 = vunpack.c.h.b16 %v396
    %v736 = vunpack.c.l.b16 %v397
    %v737 = vunpack.c.h.b16 %v397
    %v738 = vunpack.c.l.b16 %v398
    %v739 = vunpack.c.h.b16 %v398
    %v740 = vunpack.c.l.b16 %v399
    %v741 = vunpack.c.h.b16 %v399
    %v742 = vunpack.c.l.b16 %v400
    %v743 = vunpack.c.h.b16 %v400
    %v744 = vunpack.c.l.b16 %v401
    %v745 = vunpack.c.h.b16 %v401
    %v746 = vunpack.c.l.b16 %v402
    %v747 = vunpack.c.h.b16 %v402
    %v748 = vunpack.c.l.b16 %v403
    %v749 = vunpack.c.h.b16 %v403
    %v750 = vunpack.c.l.b16 %v404
    %v751 = vunpack.c.h.b16 %v404
    %v752 = vunpack.c.l.b16 %v405
    %v753 = vunpack.c.h.b16 %v405
    %v754 = vunpack.c.l.b16 %v406
    %v755 = vunpack.c.h.b16 %v406
    %v756 = vunpack.c.l.b16 %v407
    %v757 = vunpack.c.h.b16 %v407
    %v758 = vunpack.c.l.b16 %v408
    %v759 = vunpack.c.h.b16 %v408
    %v760 = vunpack.c.l.b16 %v409
    %v761 = vunpack.c.h.b16 %v409
    %v762 = vunpack.c.l.b16 %v410
    %v763 = vunpack.c.h.b16 %v410
    %v764 = vunpack.c.l.b16 %v411
    %v765 = vunpack.c.h.b16 %v411
    %v766 = vunpack.c.l.b16 %v412
    %v767 = vunpack.c.h.b16 %v412
    %v768 = vunpack.c.l.b16 %v413
    %v769 = vunpack.c.h.b16 %v413
    %v770 = vunpack.c.l.b16 %v414
    %v771 = vunpack.c.h.b16 %v414
    %v772 = vunpack.c.l.b16 %v415
    %v773 = vunpack.c.h.b16 %v415
    %v774 = vunpack.c.l.b16 %v416
    %v775 = vunpack.c.h.b16 %v416
    %v776 = vunpack.c.l.b16 %v417
    %v777 = vunpack.c.h.b16 %v417
    %v778 = vunpack.c.l.b16 %v418
    %v779 = vunpack.c.h.b16 %v418
    %v780 = vunpack.c.l.b16 %v419
    %v781 = vunpack.c.h.b16 %v419
    %v782 = vunpack.c.l.b16 %v420
    %v783 = vunpack.c.h.b16 %v420
    %v784 = vunpack.c.l.b16 %v421
    %v785 = vunpack.c.h.b16 %v421
    %v786 = vunpack.c.l.b16 %v422
    %v787 = vunpack.c.h.b16 %v422
    %v788 = vunpack.c.l.b16 %v423
    %v789 = vunpack.c.h.b16 %v423
    %v790 = vunpack.c.l.b16 %v424
    %v791 = vunpack.c.h.b16 %v424
    %v792 = vunpack.c.l.b16 %v425
    %v793 = vunpack.c.h.b16 %v425
    %v794 = vunpack.c.l.b16 %v426
    %v795 = vunpack.c.h.b16 %v426
    %v796 = vunpack.c.l.b16 %v427
    %v797 = vunpack.c.h.b16 %v427
    %v798 = vunpack.c.l.b16 %v428
    %v799 = vunpack.c.h.b16 %v428
    %v800 = vunpack.c.l.b16 %v429
    %v801 = vunpack.c.h.b16 %v429
    %v802 = vunpack.c.l.b16 %v430
    %v803 = vunpack.c.h.b16 %v430
    %v804 = vunpack.c.l.b16 %v431
    %v805 = vunpack.c.h.b16 %v431
    %v806 = vunpack.c.l.b16 %v432
    %v807 = vunpack.c.h.b16 %v432
    %v808 = vunpack.c.l.b16 %v433
    %v809 = vunpack.c.h.b16 %v433
    %v810 = vunpack.c.l.b16 %v434
    %v811 = vunpack.c.h.b16 %v434
    %v812 = vunpack.c.l.b16 %v435
    %v813 = vunpack.c.h.b16 %v435
    %v814 = vunpack.c.l.b16 %v436
    %v815 = vunpack.c.h.b16 %v436
    %v816 = vunpack.c.l.b16 %v437
    %v817 = vunpack.c.h.b16 %v437
    %v818 = vunpack.c.l.b16 %v438
    %v819 = vunpack.c.h.b16 %v438
    %v820 = vunpack.c.l.b16 %v439
    %v821 = vunpack.c.h.b16 %v439
    %v822 = vunpack.c.l.b16 %v440
    %v823 = vunpack.c.h.b16 %v440
    %v824 = vunpack.c.l.b16 %v441
    %v825 = vunpack.c.h.b16 %v441
    %v826 = vunpack.c.l.b16 %v442
    %v827 = vunpack.c.h.b16 %v442
    %v828 = vunpack.c.l.b16 %v443
    %v829 = vunpack.c.h.b16 %v443
    %v830 = vunpack.c.l.b16 %v444
    %v831 = vunpack.c.h.b16 %v444
    %v832 = vunpack.c.l.b16 %v445
    %v833 = vunpack.c.h.b16 %v445
    %v834 = vunpack.c.l.b16 %v446
    %v835 = vunpack.c.h.b16 %v446
    %v836 = vunpack.c.l.b16 %v447
    %v837 = vunpack.c.h.b16 %v447
    %v838 = vunpack.c.l.b16 %v448
    %v839 = vunpack.c.h.b16 %v448
    %v840 = vunpack.c.l.b16 %v449
    %v841 = vunpack.c.h.b16 %v449
    %v842 = vunpack.c.l.b16 %v450
    %v843 = vunpack.c.h.b16 %v450
    %v844 = vunpack.c.l.b16 %v451
    %v845 = vunpack.c.h.b16 %v451
    %v846 = vunpack.c.l.b16 %v452
    %v847 = vunpack.c.h.b16 %v452
    %v848 = vunpack.c.l.b16 %v453
    %v849 = vunpack.c.h.b16 %v453
    %v850 = vunpack.c.l.b16 %v454
    %v851 = vunpack.c.h.b16 %v454
    %v852 = vunpack.c.l.b16 %v455
    %v853 = vunpack.c.h.b16 %v455
    %v854 = vunpack.c.l.b16 %v456
    %v855 = vunpack.c.h.b16 %v456
    %v856 = vunpack.c.l.b16 %v457
    %v857 = vunpack.c.h.b16 %v457
    %v858 = vunpack.c.l.b16 %v458
    %v859 = vunpack.c.h.b16 %v458
    %v860 = vunpack.c.l.b16 %v459
    %v861 = vunpack.c.h.b16 %v459
    %v862 = vunpack.c.l.b16 %v460
    %v863 = vunpack.c.h.b16 %v460
    %v864 = vpack.c.b16 %v616, %v608
    %v865 = vpack.c.b16 %v617, %v609
    %v866 = vpack.c.b16 %v618, %v610
    %v867 = vpack.c.b16 %v619, %v611
    %v868 = vpack.c.b16 %v620, %v612
    %v869 = vpack.c.b16 %v621, %v613
    %v870 = vpack.c.b16 %v622, %v614
    %v871 = vpack.c.b16 %v623, %v615
    %v872 = vpack.c.b16 %v632, %v624
    %v873 = vpack.c.b16 %v633, %v625
    %v874 = vpack.c.b16 %v634, %v626
    %v875 = vpack.c.b16 %v635, %v627
    %v876 = vpack.c.b16 %v636, %v628
    %v877 = vpack.c.b16 %v637, %v629
    %v878 = vpack.c.b16 %v638, %v630
    %v879 = vpack.c.b16 %v639, %v631
    %v880 = vpack.c.b16 %v648, %v640
    %v881 = vpack.c.b16 %v649, %v641
    %v882 = vpack.c.b16 %v650, %v642
    %v883 = vpack.c.b16 %v651, %v643
    %v884 = vpack.c.b16 %v652, %v644
    %v885 = vpack.c.b16 %v653, %v645
    %v886 = vpack.c.b16 %v654, %v646
    %v887 = vpack.c.b16 %v655, %v647
    %v888 = vpack.c.b16 %v664, %v656
    %v889 = vpack.c.b16 %v665, %v657
    %v890 = vpack.c.b16 %v666, %v658
    %v891 = vpack.c.b16 %v667, %v659
    %v892 = vpack.c.b16 %v668, %v660
    %v893 = vpack.c.b16 %v669, %v661
    %v894 = vpack.c.b16 %v670, %v662
    %v895 = vpack.c.b16 %v671, %v663
    %v896 = vpack.c.b16 %v680, %v672
    %v897 = vpack.c.b16 %v681, %v673
    %v898 = vpack.c.b16 %v682, %v674
    %v899 = vpack.c.b16 %v683, %v675
    %v900 = vpack.c.b16 %v684, %v676
    %v901 = vpack.c.b16 %v685, %v677
    %v902 = vpack.c.b16 %v686, %v678
    %v903 = vpack.c.b16 %v687, %v679
    %v904 = vpack.c.b16 %v696, %v688
    %v905 = vpack.c.b16 %v697, %v689
    %v906 = vpack.c.b16 %v698, %v690
    %v907 = vpack.c.b16 %v699, %v691
    %v908 = vpack.c.b16 %v700, %v692
    %v909 = vpack.c.b16 %v701, %v693
    %v910 = vpack.c.b16 %v702, %v694
    %v911 = vpack.c.b16 %v703, %v695
    %v912 = vpack.c.b16 %v712, %v704
    %v913 = vpack.c.b16 %v713, %v705
    %v914 = vpack.c.b16 %v714, %v706
    %v915 = vpack.c.b16 %v715, %v707
    %v916 = vpack.c.b16 %v716, %v708
    %v917 = vpack.c.b16 %v717, %v709
    %v918 = vpack.c.b16 %v718, %v710
    %v919 = vpack.c.b16 %v719, %v711
    %v920 = vpack.c.b16 %v728, %v720
    %v921 = vpack.c.b16 %v729, %v721
    %v922 = vpack.c.b16 %v730, %v722
    %v923 = vpack.c.b16 %v731, %v723
    %v924 = vpack.c.b16 %v732, %v724
    %v925 = vpack.c.b16 %v733, %v725
    %v926 = vpack.c.b16 %v734, %v726
    %v927 = vpack.c.b16 %v735, %v727
    %v928 = vpack.c.b16 %v744, %v736
    %v929 = vpack.c.b16 %v745, %v737
    %v930 = vpack.c.b16 %v746, %v738
    %v931 = vpack.c.b16 %v747, %v739
    %v932 = vpack.c.b16 %v748, %v740
    %v933 = vpack.c.b16 %v749, %v741
    %v934 = vpack.c.b16 %v750, %v742
    %v935 = vpack.c.b16 %v751, %v743
    %v936 = vpack.c.b16 %v760, %v752
    %v937 = vpack.c.b16 %v761, %v753
    %v938 = vpack.c.b16 %v762, %v754
    %v939 = vpack.c.b16 %v763, %v755
    %v940 = vpack.c.b16 %v764, %v756
    %v941 = vpack.c.b16 %v765, %v757
    %v942 = vpack.c.b16 %v766, %v758
    %v943 = vpack.c.b16 %v767, %v759
    %v944 = vpack.c.b16 %v776, %v768
    %v945 = vpack.c.b16 %v777, %v769
    %v946 = vpack.c.b16 %v778, %v770
    %v947 = vpack.c.b16 %v779, %v771
    %v948 = vpack.c.b16 %v780, %v772
    %v949 = vpack.c.b16 %v781, %v773
    %v950 = vpack.c.b16 %v782, %v774
    %v951 = vpack.c.b16 %v783, %v775
    %v952 = vpack.c.b16 %v792, %v784
    %v953 = vpack.c.b16 %v793, %v785
    %v954 = vpack.c.b16 %v794, %v786
    %v955 = vpack.c.b16 %v795, %v787
    %v956 = vpack.c.b16 %v796, %v788
    %v957 = vpack.c.b16 %v797, %v789
    %v958 = vpack.c.b16 %v798, %v790
    %v959 = vpack.c.b16 %v799, %v791
    %v960 = vpack.c.b16 %v808, %v800
    %v961 = vpack.c.b16 %v809, %v801
    %v962 = vpack.c.b16 %v810, %v802
    %v963 = vpack.c.b16 %v811, %v803
    %v964 = vpack.c.b16 %v812, %v804
    %v965 = vpack.c.b16 %v813, %v805
    %v966 = vpack.c.b16 %v814, %v806
    %v967 = vpack.c.b16 %v815, %v807
    %v968 = vpack.c.b16 %v824, %v816
    %v969 = vpack.c.b16 %v825, %v817
    %v970 = vpack.c.b16 %v826, %v818
    %v971 = vpack.c.b16 %v827, %v819
    %v972 = vpack.c.b16 %v828, %v820
    %v973 = vpack.c.b16 %v829, %v821
    %v974 = vpack.c.b16 %v830, %v822
    %v975 = vpack.c.b16 %v831, %v823
    %v976 = vpack.c.b16 %v840, %v832
    %v977 = vpack.c.b16 %v841, %v833
    %v978 = vpack.c.b16 %v842, %v834
    %v979 = vpack.c.b16 %v843, %v835
    %v980 = vpack.c.b16 %v844, %v836
    %v981 = vpack.c.b16 %v845, %v837
    %v982 = vpack.c.b16 %v846, %v838
    %v983 = vpack.c.b16 %v847, %v839
    %v984 = vpack.c.b16 %v856, %v848
    %v985 = vpack.c.b16 %v857, %v849
    %v986 = vpack.c.b16 %v858, %v850
    %v987 = vpack.c.b16 %v859, %v851
    %v988 = vpack.c.b16 %v860, %v852
    %v989 = vpack.c.b16 %v861, %v853
    %v990 = vpack.c.b16 %v862, %v854
    %v991 = vpack.c.b16 %v863, %v855
    %v1128 = vrot.slane %v196, 2
    %v1129 = vrot.slane %v198, 2
    %v1130 = vrot.slane %v239, 2
    %v1131 = vrot.slane %v241, 2
    %v1132 = vrot.slane %v282, 2
    %v1133 = vrot.slane %v284, 2
    %v1134 = vrot.slane %v325, 2
    %v1135 = vrot.slane %v327, 2
    %1144 = vmatprep.subr.bf16.mxu0 %v865
    %1145 = vmatpush1.bf16.msra.mxu0 %v864
    %1146 = vmatprep.subr.bf16.mxu0 %v873
    %1147 = vmatpush1.bf16.msra.mxu0 %v872
    %1148 = vmatprep.subr.bf16.mxu0 %v881
    %1149 = vmatpush1.bf16.msra.mxu0 %v880
    %1150 = vmatprep.subr.bf16.mxu0 %v889
    %1151 = vmatpush1.bf16.msra.mxu0 %v888
    %1152 = vmatprep.subr.bf16.mxu0 %v897
    %1153 = vmatpush1.bf16.msra.mxu0 %v896
    %1154 = vmatprep.subr.bf16.mxu0 %v905
    %1155 = vmatpush1.bf16.msra.mxu0 %v904
    %1156 = vmatprep.subr.bf16.mxu0 %v913
    %1157 = vmatpush1.bf16.msra.mxu0 %v912
    %1158 = vmatprep.subr.bf16.mxu0 %v921
    %1159 = vmatpush1.bf16.msra.mxu0 %v920
    %1160 = vmatprep.subr.bf16.mxu0 %v929
    %1161 = vmatpush1.bf16.msra.mxu0 %v928
    %1162 = vmatprep.subr.bf16.mxu0 %v937
    %1163 = vmatpush1.bf16.msra.mxu0 %v936
    %1164 = vmatprep.subr.bf16.mxu0 %v945
    %1165 = vmatpush1.bf16.msra.mxu0 %v944
    %1166 = vmatprep.subr.bf16.mxu0 %v953
    %1167 = vmatpush1.bf16.msra.mxu0 %v952
    %1168 = vmatprep.subr.bf16.mxu0 %v961
    %1169 = vmatpush1.bf16.msra.mxu0 %v960
    %1170 = vmatprep.subr.bf16.mxu0 %v969
    %1171 = vmatpush1.bf16.msra.mxu0 %v968
    %1172 = vmatprep.subr.bf16.mxu0 %v977
    %1173 = vmatpush1.bf16.msra.mxu0 %v976
    %1174 = vmatprep.subr.bf16.mxu0 %v985
    %1175 = vmatpush1.bf16.msra.mxu0 %v984
    %1176 = vmatprep.mubr.bf16.mxu0 %v479
    %1177 = vmatmul.mubr.bf16.gmra.mrb[0].mxu0 %v478
    %v1178 = vpop.f32.mrb[0].mxu0
    %v1179 = vadd.f32 %v1128, %v1178
    %v1180 = vpop.f32.mrb[0].mxu0
    %v1181 = vadd.f32 %v1129, %v1180
    %v1182 = vpop.f32.mrb[0].mxu0
    %v1183 = vpop.f32.mrb[0].mxu0
    %1184 = vdwg.mxu0
    %1185 = vmatprep.subr.bf16.mxu0 %v867
    %1186 = vmatpush1.bf16.msra.mxu0 %v866
    %1187 = vmatprep.subr.bf16.mxu0 %v875
    %1188 = vmatpush1.bf16.msra.mxu0 %v874
    %1189 = vmatprep.subr.bf16.mxu0 %v883
    %1190 = vmatpush1.bf16.msra.mxu0 %v882
    %1191 = vmatprep.subr.bf16.mxu0 %v891
    %1192 = vmatpush1.bf16.msra.mxu0 %v890
    %1193 = vmatprep.subr.bf16.mxu0 %v899
    %1194 = vmatpush1.bf16.msra.mxu0 %v898
    %1195 = vmatprep.subr.bf16.mxu0 %v907
    %1196 = vmatpush1.bf16.msra.mxu0 %v906
    %1197 = vmatprep.subr.bf16.mxu0 %v915
    %1198 = vmatpush1.bf16.msra.mxu0 %v914
    %1199 = vmatprep.subr.bf16.mxu0 %v923
    %1200 = vmatpush1.bf16.msra.mxu0 %v922
    %1201 = vmatprep.subr.bf16.mxu0 %v931
    %1202 = vmatpush1.bf16.msra.mxu0 %v930
    %1203 = vmatprep.subr.bf16.mxu0 %v939
    %1204 = vmatpush1.bf16.msra.mxu0 %v938
    %1205 = vmatprep.subr.bf16.mxu0 %v947
    %1206 = vmatpush1.bf16.msra.mxu0 %v946
    %1207 = vmatprep.subr.bf16.mxu0 %v955
    %1208 = vmatpush1.bf16.msra.mxu0 %v954
    %1209 = vmatprep.subr.bf16.mxu0 %v963
    %1210 = vmatpush1.bf16.msra.mxu0 %v962
    %1211 = vmatprep.subr.bf16.mxu0 %v971
    %1212 = vmatpush1.bf16.msra.mxu0 %v970
    %1213 = vmatprep.subr.bf16.mxu0 %v979
    %1214 = vmatpush1.bf16.msra.mxu0 %v978
    %1215 = vmatprep.subr.bf16.mxu0 %v987
    %1216 = vmatpush1.bf16.msra.mxu0 %v986
    %1217 = vmatprep.mubr.bf16.mxu0 %v479
    %1218 = vmatmul.mubr.bf16.gmra.mrb[0].mxu0 %v478
    %v1219 = vpop.f32.mrb[0].mxu0
    %v1220 = vadd.f32 %v1130, %v1219
    %v1221 = vpop.f32.mrb[0].mxu0
    %v1222 = vadd.f32 %v1131, %v1221
    %v1223 = vpop.f32.mrb[0].mxu0
    %v1224 = vpop.f32.mrb[0].mxu0
    %1225 = vdwg.mxu0
    %1226 = vmatprep.subr.bf16.mxu0 %v869
    %1227 = vmatpush1.bf16.msra.mxu0 %v868
    %1228 = vmatprep.subr.bf16.mxu0 %v877
    %1229 = vmatpush1.bf16.msra.mxu0 %v876
    %1230 = vmatprep.subr.bf16.mxu0 %v885
    %1231 = vmatpush1.bf16.msra.mxu0 %v884
    %1232 = vmatprep.subr.bf16.mxu0 %v893
    %1233 = vmatpush1.bf16.msra.mxu0 %v892
    %1234 = vmatprep.subr.bf16.mxu0 %v901
    %1235 = vmatpush1.bf16.msra.mxu0 %v900
    %1236 = vmatprep.subr.bf16.mxu0 %v909
    %1237 = vmatpush1.bf16.msra.mxu0 %v908
    %1238 = vmatprep.subr.bf16.mxu0 %v917
    %1239 = vmatpush1.bf16.msra.mxu0 %v916
    %1240 = vmatprep.subr.bf16.mxu0 %v925
    %1241 = vmatpush1.bf16.msra.mxu0 %v924
    %1242 = vmatprep.subr.bf16.mxu0 %v933
    %1243 = vmatpush1.bf16.msra.mxu0 %v932
    %1244 = vmatprep.subr.bf16.mxu0 %v941
    %1245 = vmatpush1.bf16.msra.mxu0 %v940
    %1246 = vmatprep.subr.bf16.mxu0 %v949
    %1247 = vmatpush1.bf16.msra.mxu0 %v948
    %1248 = vmatprep.subr.bf16.mxu0 %v957
    %1249 = vmatpush1.bf16.msra.mxu0 %v956
    %1250 = vmatprep.subr.bf16.mxu0 %v965
    %1251 = vmatpush1.bf16.msra.mxu0 %v964
    %1252 = vmatprep.subr.bf16.mxu0 %v973
    %1253 = vmatpush1.bf16.msra.mxu0 %v972
    %1254 = vmatprep.subr.bf16.mxu0 %v981
    %1255 = vmatpush1.bf16.msra.mxu0 %v980
    %1256 = vmatprep.subr.bf16.mxu0 %v989
    %1257 = vmatpush1.bf16.msra.mxu0 %v988
    %1258 = vmatprep.mubr.bf16.mxu0 %v479
    %1259 = vmatmul.mubr.bf16.gmra.mrb[0].mxu0 %v478
    %v1260 = vpop.f32.mrb[0].mxu0
    %v1261 = vadd.f32 %v1132, %v1260
    %v1262 = vpop.f32.mrb[0].mxu0
    %v1263 = vadd.f32 %v1133, %v1262
    %v1264 = vpop.f32.mrb[0].mxu0
    %v1265 = vpop.f32.mrb[0].mxu0
    %1266 = vdwg.mxu0
    %1267 = vmatprep.subr.bf16.mxu0 %v871
    %1268 = vmatpush1.bf16.msra.mxu0 %v870
    %1269 = vmatprep.subr.bf16.mxu0 %v879
    %1270 = vmatpush1.bf16.msra.mxu0 %v878
    %1271 = vmatprep.subr.bf16.mxu0 %v887
    %1272 = vmatpush1.bf16.msra.mxu0 %v886
    %1273 = vmatprep.subr.bf16.mxu0 %v895
    %1274 = vmatpush1.bf16.msra.mxu0 %v894
    %1275 = vmatprep.subr.bf16.mxu0 %v903
    %1276 = vmatpush1.bf16.msra.mxu0 %v902
    %1277 = vmatprep.subr.bf16.mxu0 %v911
    %1278 = vmatpush1.bf16.msra.mxu0 %v910
    %1279 = vmatprep.subr.bf16.mxu0 %v919
    %1280 = vmatpush1.bf16.msra.mxu0 %v918
    %1281 = vmatprep.subr.bf16.mxu0 %v927
    %1282 = vmatpush1.bf16.msra.mxu0 %v926
    %1283 = vmatprep.subr.bf16.mxu0 %v935
    %1284 = vmatpush1.bf16.msra.mxu0 %v934
    %1285 = vmatprep.subr.bf16.mxu0 %v943
    %1286 = vmatpush1.bf16.msra.mxu0 %v942
    %1287 = vmatprep.subr.bf16.mxu0 %v951
    %1288 = vmatpush1.bf16.msra.mxu0 %v950
    %1289 = vmatprep.subr.bf16.mxu0 %v959
    %1290 = vmatpush1.bf16.msra.mxu0 %v958
    %1291 = vmatprep.subr.bf16.mxu0 %v967
    %1292 = vmatpush1.bf16.msra.mxu0 %v966
    %1293 = vmatprep.subr.bf16.mxu0 %v975
    %1294 = vmatpush1.bf16.msra.mxu0 %v974
    %1295 = vmatprep.subr.bf16.mxu0 %v983
    %1296 = vmatpush1.bf16.msra.mxu0 %v982
    %1297 = vmatprep.subr.bf16.mxu0 %v991
    %1298 = vmatpush1.bf16.msra.mxu0 %v990
    %1299 = vmatprep.mubr.bf16.mxu0 %v479
    %1300 = vmatmul.mubr.bf16.gmra.mrb[0].mxu0 %v478
    %v1301 = vpop.f32.mrb[0].mxu0
    %v1302 = vadd.f32 %v1134, %v1301
    %v1303 = vpop.f32.mrb[0].mxu0
    %v1304 = vadd.f32 %v1135, %v1303
    %v1305 = vpop.f32.mrb[0].mxu0
    %v1306 = vpop.f32.mrb[0].mxu0
    %1307 = vdwg.mxu0
    %v1308 = vxor.u32 %v1179, 2147483648
    %v1309 = vxor.u32 %v1181, 2147483648
    %v1310 = vxor.u32 %v1220, 2147483648
    %v1311 = vxor.u32 %v1222, 2147483648
    %v1312 = vxor.u32 %v1261, 2147483648
    %v1313 = vxor.u32 %v1263, 2147483648
    %v1314 = vmul.f32 %v1308, 1.442695
    %v1315 = vpow.pop %v1314
    %v1316 = vmul.f32 %v1309, 1.442695
    %v1317 = vpow.pop %v1316
    %v1318 = vmul.f32 %v1310, 1.442695
    %v1319 = vpow.pop %v1318
    %v1320 = vmul.f32 %v1311, 1.442695
    %v1321 = vpow.pop %v1320
    %v1322 = vmul.f32 %v1312, 1.442695
    %v1323 = vpow.pop %v1322
    %v1324 = vmul.f32 %v1313, 1.442695
    %v1325 = vpow.pop %v1324
    %v1326 = vadd.f32 %v1315, 1.0
    %v1327 = vadd.f32 %v1317, 1.0
    %v1328 = vadd.f32 %v1319, 1.0
    %v1329 = vadd.f32 %v1321, 1.0
    %v1330 = vadd.f32 %v1323, 1.0
    %v1331 = vadd.f32 %v1325, 1.0
    %v1332 = vrcp.pop %v1326
    %v1333 = vmul.f32 1.0, %v1332
    %v1334 = vrcp.pop %v1327
    %v1335 = vmul.f32 1.0, %v1334
    %v1336 = vrcp.pop %v1328
    %v1337 = vmul.f32 1.0, %v1336
    %v1338 = vrcp.pop %v1329
    %v1339 = vmul.f32 1.0, %v1338
    %v1340 = vrcp.pop %v1330
    %v1341 = vmul.f32 1.0, %v1340
    %v1342 = vrcp.pop %v1331
    %v1343 = vmul.f32 1.0, %v1342
    %v1344 = vtanh.pop %v1302
    %v1345 = vtanh.pop %v1304
    %v1346 = vmul.f32 %v1337, %v475
    %v1347 = vmul.f32 %v1339, 0.0
    %v1348 = vmul.f32 %v1333, %v1344
    %v1349 = vmul.f32 %v1335, %v1345
    %v1350 = vadd.f32 %v1346, %v1348
    %v1351 = vadd.f32 %v1347, %v1349
    %v1352 = vtanh.pop %v1350
    %v1353 = vtanh.pop %v1351
    %v1354 = vmul.f32 %v1341, %v1352
    %v1355 = vmul.f32 %v1343, %v1353
    %vm1356 = vcmp.eq.s32.totalorder %v461, 0
    %v1357 = vsel %vm1356, 1, 0
    %1358 = vset.pattern.permute.xlu0 0
    %1359 = vperm.xlu0 %1358, %v1357
    %v1360 = vpop.permute.xlu0 %1359
    %vm1361 = vcmp.eq.s32.totalorder %v1360, 1
    %v1362 = vsel %vm1361, %v1355, 0.0
    %v1363 = vpack.c.bf16 %v1354, %v1354
    %v1364 = vpack.c.bf16 %v1355, %v1355
    %v1365 = vrot.slane %v196, 4
    %v1366 = vrot.slane %v198, 4
    %v1367 = vrot.slane %v239, 4
    %v1368 = vrot.slane %v241, 4
    %v1369 = vrot.slane %v282, 4
    %v1370 = vrot.slane %v284, 4
    %v1371 = vrot.slane %v325, 4
    %v1372 = vrot.slane %v327, 4
    %1381 = vmatprep.subr.bf16.mxu0 %v865
    %1382 = vmatpush1.bf16.msra.mxu0 %v864
    %1383 = vmatprep.subr.bf16.mxu0 %v873
    %1384 = vmatpush1.bf16.msra.mxu0 %v872
    %1385 = vmatprep.subr.bf16.mxu0 %v881
    %1386 = vmatpush1.bf16.msra.mxu0 %v880
    %1387 = vmatprep.subr.bf16.mxu0 %v889
    %1388 = vmatpush1.bf16.msra.mxu0 %v888
    %1389 = vmatprep.subr.bf16.mxu0 %v897
    %1390 = vmatpush1.bf16.msra.mxu0 %v896
    %1391 = vmatprep.subr.bf16.mxu0 %v905
    %1392 = vmatpush1.bf16.msra.mxu0 %v904
    %1393 = vmatprep.subr.bf16.mxu0 %v913
    %1394 = vmatpush1.bf16.msra.mxu0 %v912
    %1395 = vmatprep.subr.bf16.mxu0 %v921
    %1396 = vmatpush1.bf16.msra.mxu0 %v920
    %1397 = vmatprep.subr.bf16.mxu0 %v929
    %1398 = vmatpush1.bf16.msra.mxu0 %v928
    %1399 = vmatprep.subr.bf16.mxu0 %v937
    %1400 = vmatpush1.bf16.msra.mxu0 %v936
    %1401 = vmatprep.subr.bf16.mxu0 %v945
    %1402 = vmatpush1.bf16.msra.mxu0 %v944
    %1403 = vmatprep.subr.bf16.mxu0 %v953
    %1404 = vmatpush1.bf16.msra.mxu0 %v952
    %1405 = vmatprep.subr.bf16.mxu0 %v961
    %1406 = vmatpush1.bf16.msra.mxu0 %v960
    %1407 = vmatprep.subr.bf16.mxu0 %v969
    %1408 = vmatpush1.bf16.msra.mxu0 %v968
    %1409 = vmatprep.subr.bf16.mxu0 %v977
    %1410 = vmatpush1.bf16.msra.mxu0 %v976
    %1411 = vmatprep.subr.bf16.mxu0 %v985
    %1412 = vmatpush1.bf16.msra.mxu0 %v984
    %1413 = vmatprep.mubr.bf16.mxu0 %v1364
    %1414 = vmatmul.mubr.bf16.gmra.mrb[0].mxu0 %v1363
    %v1415 = vpop.f32.mrb[0].mxu0
    %v1416 = vadd.f32 %v1365, %v1415
    %v1417 = vpop.f32.mrb[0].mxu0
    %v1418 = vadd.f32 %v1366, %v1417
    %v1419 = vpop.f32.mrb[0].mxu0
    %v1420 = vpop.f32.mrb[0].mxu0
    %1421 = vdwg.mxu0
    %1422 = vmatprep.subr.bf16.mxu0 %v867
    %1423 = vmatpush1.bf16.msra.mxu0 %v866
    %1424 = vmatprep.subr.bf16.mxu0 %v875
    %1425 = vmatpush1.bf16.msra.mxu0 %v874
    %1426 = vmatprep.subr.bf16.mxu0 %v883
    %1427 = vmatpush1.bf16.msra.mxu0 %v882
    %1428 = vmatprep.subr.bf16.mxu0 %v891
    %1429 = vmatpush1.bf16.msra.mxu0 %v890
    %1430 = vmatprep.subr.bf16.mxu0 %v899
    %1431 = vmatpush1.bf16.msra.mxu0 %v898
    %1432 = vmatprep.subr.bf16.mxu0 %v907
    %1433 = vmatpush1.bf16.msra.mxu0 %v906
    %1434 = vmatprep.subr.bf16.mxu0 %v915
    %1435 = vmatpush1.bf16.msra.mxu0 %v914
    %1436 = vmatprep.subr.bf16.mxu0 %v923
    %1437 = vmatpush1.bf16.msra.mxu0 %v922
    %1438 = vmatprep.subr.bf16.mxu0 %v931
    %1439 = vmatpush1.bf16.msra.mxu0 %v930
    %1440 = vmatprep.subr.bf16.mxu0 %v939
    %1441 = vmatpush1.bf16.msra.mxu0 %v938
    %1442 = vmatprep.subr.bf16.mxu0 %v947
    %1443 = vmatpush1.bf16.msra.mxu0 %v946
    %1444 = vmatprep.subr.bf16.mxu0 %v955
    %1445 = vmatpush1.bf16.msra.mxu0 %v954
    %1446 = vmatprep.subr.bf16.mxu0 %v963
    %1447 = vmatpush1.bf16.msra.mxu0 %v962
    %1448 = vmatprep.subr.bf16.mxu0 %v971
    %1449 = vmatpush1.bf16.msra.mxu0 %v970
    %1450 = vmatprep.subr.bf16.mxu0 %v979
    %1451 = vmatpush1.bf16.msra.mxu0 %v978
    %1452 = vmatprep.subr.bf16.mxu0 %v987
    %1453 = vmatpush1.bf16.msra.mxu0 %v986
    %1454 = vmatprep.mubr.bf16.mxu0 %v1364
    %1455 = vmatmul.mubr.bf16.gmra.mrb[0].mxu0 %v1363
    %v1456 = vpop.f32.mrb[0].mxu0
    %v1457 = vadd.f32 %v1367, %v1456
    %v1458 = vpop.f32.mrb[0].mxu0
    %v1459 = vadd.f32 %v1368, %v1458
    %v1460 = vpop.f32.mrb[0].mxu0
    %v1461 = vpop.f32.mrb[0].mxu0
    %1462 = vdwg.mxu0
    %1463 = vmatprep.subr.bf16.mxu0 %v869
    %1464 = vmatpush1.bf16.msra.mxu0 %v868
    %1465 = vmatprep.subr.bf16.mxu0 %v877
    %1466 = vmatpush1.bf16.msra.mxu0 %v876
    %1467 = vmatprep.subr.bf16.mxu0 %v885
    %1468 = vmatpush1.bf16.msra.mxu0 %v884
    %1469 = vmatprep.subr.bf16.mxu0 %v893
    %1470 = vmatpush1.bf16.msra.mxu0 %v892
    %1471 = vmatprep.subr.bf16.mxu0 %v901
    %1472 = vmatpush1.bf16.msra.mxu0 %v900
    %1473 = vmatprep.subr.bf16.mxu0 %v909
    %1474 = vmatpush1.bf16.msra.mxu0 %v908
    %1475 = vmatprep.subr.bf16.mxu0 %v917
    %1476 = vmatpush1.bf16.msra.mxu0 %v916
    %1477 = vmatprep.subr.bf16.mxu0 %v925
    %1478 = vmatpush1.bf16.msra.mxu0 %v924
    %1479 = vmatprep.subr.bf16.mxu0 %v933
    %1480 = vmatpush1.bf16.msra.mxu0 %v932
    %1481 = vmatprep.subr.bf16.mxu0 %v941
    %1482 = vmatpush1.bf16.msra.mxu0 %v940
    %1483 = vmatprep.subr.bf16.mxu0 %v949
    %1484 = vmatpush1.bf16.msra.mxu0 %v948
    %1485 = vmatprep.subr.bf16.mxu0 %v957
    %1486 = vmatpush1.bf16.msra.mxu0 %v956
    %1487 = vmatprep.subr.bf16.mxu0 %v965
    %1488 = vmatpush1.bf16.msra.mxu0 %v964
    %1489 = vmatprep.subr.bf16.mxu0 %v973
    %1490 = vmatpush1.bf16.msra.mxu0 %v972
    %1491 = vmatprep.subr.bf16.mxu0 %v981
    %1492 = vmatpush1.bf16.msra.mxu0 %v980
    %1493 = vmatprep.subr.bf16.mxu0 %v989
    %1494 = vmatpush1.bf16.msra.mxu0 %v988
    %1495 = vmatprep.mubr.bf16.mxu0 %v1364
    %1496 = vmatmul.mubr.bf16.gmra.mrb[0].mxu0 %v1363
    %v1497 = vpop.f32.mrb[0].mxu0
    %v1498 = vadd.f32 %v1369, %v1497
    %v1499 = vpop.f32.mrb[0].mxu0
    %v1500 = vadd.f32 %v1370, %v1499
    %v1501 = vpop.f32.mrb[0].mxu0
    %v1502 = vpop.f32.mrb[0].mxu0
    %1503 = vdwg.mxu0
    %1504 = vmatprep.subr.bf16.mxu0 %v871
    %1505 = vmatpush1.bf16.msra.mxu0 %v870
    %1506 = vmatprep.subr.bf16.mxu0 %v879
    %1507 = vmatpush1.bf16.msra.mxu0 %v878
    %1508 = vmatprep.subr.bf16.mxu0 %v887
    %1509 = vmatpush1.bf16.msra.mxu0 %v886
    %1510 = vmatprep.subr.bf16.mxu0 %v895
    %1511 = vmatpush1.bf16.msra.mxu0 %v894
    %1512 = vmatprep.subr.bf16.mxu0 %v903
    %1513 = vmatpush1.bf16.msra.mxu0 %v902
    %1514 = vmatprep.subr.bf16.mxu0 %v911
    %1515 = vmatpush1.bf16.msra.mxu0 %v910
    %1516 = vmatprep.subr.bf16.mxu0 %v919
    %1517 = vmatpush1.bf16.msra.mxu0 %v918
    %1518 = vmatprep.subr.bf16.mxu0 %v927
    %1519 = vmatpush1.bf16.msra.mxu0 %v926
    %1520 = vmatprep.subr.bf16.mxu0 %v935
    %1521 = vmatpush1.bf16.msra.mxu0 %v934
    %1522 = vmatprep.subr.bf16.mxu0 %v943
    %1523 = vmatpush1.bf16.msra.mxu0 %v942
    %1524 = vmatprep.subr.bf16.mxu0 %v951
    %1525 = vmatpush1.bf16.msra.mxu0 %v950
    %1526 = vmatprep.subr.bf16.mxu0 %v959
    %1527 = vmatpush1.bf16.msra.mxu0 %v958
    %1528 = vmatprep.subr.bf16.mxu0 %v967
    %1529 = vmatpush1.bf16.msra.mxu0 %v966
    %1530 = vmatprep.subr.bf16.mxu0 %v975
    %1531 = vmatpush1.bf16.msra.mxu0 %v974
    %1532 = vmatprep.subr.bf16.mxu0 %v983
    %1533 = vmatpush1.bf16.msra.mxu0 %v982
    %1534 = vmatprep.subr.bf16.mxu0 %v991
    %1535 = vmatpush1.bf16.msra.mxu0 %v990
    %1536 = vmatprep.mubr.bf16.mxu0 %v1364
    %1537 = vmatmul.mubr.bf16.gmra.mrb[0].mxu0 %v1363
    %v1538 = vpop.f32.mrb[0].mxu0
    %v1539 = vadd.f32 %v1371, %v1538
    %v1540 = vpop.f32.mrb[0].mxu0
    %v1541 = vadd.f32 %v1372, %v1540
    %v1542 = vpop.f32.mrb[0].mxu0
    %v1543 = vpop.f32.mrb[0].mxu0
    %1544 = vdwg.mxu0
    %v1545 = vxor.u32 %v1416, 2147483648
    %v1546 = vxor.u32 %v1418, 2147483648
    %v1547 = vxor.u32 %v1457, 2147483648
    %v1548 = vxor.u32 %v1459, 2147483648
    %v1549 = vxor.u32 %v1498, 2147483648
    %v1550 = vxor.u32 %v1500, 2147483648
    %v1551 = vmul.f32 %v1545, 1.442695
    %v1552 = vpow.pop %v1551
    %v1553 = vmul.f32 %v1546, 1.442695
    %v1554 = vpow.pop %v1553
    %v1555 = vmul.f32 %v1547, 1.442695
    %v1556 = vpow.pop %v1555
    %v1557 = vmul.f32 %v1548, 1.442695
    %v1558 = vpow.pop %v1557
    %v1559 = vmul.f32 %v1549, 1.442695
    %v1560 = vpow.pop %v1559
    %v1561 = vmul.f32 %v1550, 1.442695
    %v1562 = vpow.pop %v1561
    %v1563 = vadd.f32 %v1552, 1.0
    %v1564 = vadd.f32 %v1554, 1.0
    %v1565 = vadd.f32 %v1556, 1.0
    %v1566 = vadd.f32 %v1558, 1.0
    %v1567 = vadd.f32 %v1560, 1.0
    %v1568 = vadd.f32 %v1562, 1.0
    %v1569 = vrcp.pop %v1563
    %v1570 = vmul.f32 1.0, %v1569
    %v1571 = vrcp.pop %v1564
    %v1572 = vmul.f32 1.0, %v1571
    %v1573 = vrcp.pop %v1565
    %v1574 = vmul.f32 1.0, %v1573
    %v1575 = vrcp.pop %v1566
    %v1576 = vmul.f32 1.0, %v1575
    %v1577 = vrcp.pop %v1567
    %v1578 = vmul.f32 1.0, %v1577
    %v1579 = vrcp.pop %v1568
    %v1580 = vmul.f32 1.0, %v1579
    %v1581 = vtanh.pop %v1539
    %v1582 = vtanh.pop %v1541
    %v1583 = vmul.f32 %v1574, %v1350
    %v1584 = vmul.f32 %v1576, %v1351
    %v1585 = vmul.f32 %v1570, %v1581
    %v1586 = vmul.f32 %v1572, %v1582
    %v1587 = vadd.f32 %v1583, %v1585
    %v1588 = vadd.f32 %v1584, %v1586
    %v1589 = vtanh.pop %v1587
    %v1590 = vtanh.pop %v1588
    %v1591 = vmul.f32 %v1578, %v1589
    %v1592 = vmul.f32 %v1580, %v1590
    %vm1593 = vcmp.eq.s32.totalorder %v461, 1
    %v1594 = vsel %vm1593, 1, 0
    %1595 = vset.pattern.permute.xlu0 0
    %1596 = vperm.xlu0 %1595, %v1594
    %v1597 = vpop.permute.xlu0 %1596
    %vm1598 = vcmp.eq.s32.totalorder %v1597, 1
    %v1599 = vsel %vm1598, %v1592, %v1362
    %v1600 = vpack.c.bf16 %v1591, %v1591
    %v1601 = vpack.c.bf16 %v1592, %v1592
    %v1602 = vrot.slane %v196, 6
    %v1603 = vrot.slane %v198, 6
    %v1604 = vrot.slane %v239, 6
    %v1605 = vrot.slane %v241, 6
    %v1606 = vrot.slane %v282, 6
    %v1607 = vrot.slane %v284, 6
    %v1608 = vrot.slane %v325, 6
    %v1609 = vrot.slane %v327, 6
    %1618 = vmatprep.subr.bf16.mxu0 %v865
    %1619 = vmatpush1.bf16.msra.mxu0 %v864
    %1620 = vmatprep.subr.bf16.mxu0 %v873
    %1621 = vmatpush1.bf16.msra.mxu0 %v872
    %1622 = vmatprep.subr.bf16.mxu0 %v881
    %1623 = vmatpush1.bf16.msra.mxu0 %v880
    %1624 = vmatprep.subr.bf16.mxu0 %v889
    %1625 = vmatpush1.bf16.msra.mxu0 %v888
    %1626 = vmatprep.subr.bf16.mxu0 %v897
    %1627 = vmatpush1.bf16.msra.mxu0 %v896
    %1628 = vmatprep.subr.bf16.mxu0 %v905
    %1629 = vmatpush1.bf16.msra.mxu0 %v904
    %1630 = vmatprep.subr.bf16.mxu0 %v913
    %1631 = vmatpush1.bf16.msra.mxu0 %v912
    %1632 = vmatprep.subr.bf16.mxu0 %v921
    %1633 = vmatpush1.bf16.msra.mxu0 %v920
    %1634 = vmatprep.subr.bf16.mxu0 %v929
    %1635 = vmatpush1.bf16.msra.mxu0 %v928
    %1636 = vmatprep.subr.bf16.mxu0 %v937
    %1637 = vmatpush1.bf16.msra.mxu0 %v936
    %1638 = vmatprep.subr.bf16.mxu0 %v945
    %1639 = vmatpush1.bf16.msra.mxu0 %v944
    %1640 = vmatprep.subr.bf16.mxu0 %v953
    %1641 = vmatpush1.bf16.msra.mxu0 %v952
    %1642 = vmatprep.subr.bf16.mxu0 %v961
    %1643 = vmatpush1.bf16.msra.mxu0 %v960
    %1644 = vmatprep.subr.bf16.mxu0 %v969
    %1645 = vmatpush1.bf16.msra.mxu0 %v968
    %1646 = vmatprep.subr.bf16.mxu0 %v977
    %1647 = vmatpush1.bf16.msra.mxu0 %v976
    %1648 = vmatprep.subr.bf16.mxu0 %v985
    %1649 = vmatpush1.bf16.msra.mxu0 %v984
    %1650 = vmatprep.mubr.bf16.mxu0 %v1601
    %1651 = vmatmul.mubr.bf16.gmra.mrb[0].mxu0 %v1600
    %v1652 = vpop.f32.mrb[0].mxu0
    %v1653 = vadd.f32 %v1602, %v1652
    %v1654 = vpop.f32.mrb[0].mxu0
    %v1655 = vadd.f32 %v1603, %v1654
    %v1656 = vpop.f32.mrb[0].mxu0
    %v1657 = vpop.f32.mrb[0].mxu0
    %1658 = vdwg.mxu0
    %1659 = vmatprep.subr.bf16.mxu0 %v867
    %1660 = vmatpush1.bf16.msra.mxu0 %v866
    %1661 = vmatprep.subr.bf16.mxu0 %v875
    %1662 = vmatpush1.bf16.msra.mxu0 %v874
    %1663 = vmatprep.subr.bf16.mxu0 %v883
    %1664 = vmatpush1.bf16.msra.mxu0 %v882
    %1665 = vmatprep.subr.bf16.mxu0 %v891
    %1666 = vmatpush1.bf16.msra.mxu0 %v890
    %1667 = vmatprep.subr.bf16.mxu0 %v899
    %1668 = vmatpush1.bf16.msra.mxu0 %v898
    %1669 = vmatprep.subr.bf16.mxu0 %v907
    %1670 = vmatpush1.bf16.msra.mxu0 %v906
    %1671 = vmatprep.subr.bf16.mxu0 %v915
    %1672 = vmatpush1.bf16.msra.mxu0 %v914
    %1673 = vmatprep.subr.bf16.mxu0 %v923
    %1674 = vmatpush1.bf16.msra.mxu0 %v922
    %1675 = vmatprep.subr.bf16.mxu0 %v931
    %1676 = vmatpush1.bf16.msra.mxu0 %v930
    %1677 = vmatprep.subr.bf16.mxu0 %v939
    %1678 = vmatpush1.bf16.msra.mxu0 %v938
    %1679 = vmatprep.subr.bf16.mxu0 %v947
    %1680 = vmatpush1.bf16.msra.mxu0 %v946
    %1681 = vmatprep.subr.bf16.mxu0 %v955
    %1682 = vmatpush1.bf16.msra.mxu0 %v954
    %1683 = vmatprep.subr.bf16.mxu0 %v963
    %1684 = vmatpush1.bf16.msra.mxu0 %v962
    %1685 = vmatprep.subr.bf16.mxu0 %v971
    %1686 = vmatpush1.bf16.msra.mxu0 %v970
    %1687 = vmatprep.subr.bf16.mxu0 %v979
    %1688 = vmatpush1.bf16.msra.mxu0 %v978
    %1689 = vmatprep.subr.bf16.mxu0 %v987
    %1690 = vmatpush1.bf16.msra.mxu0 %v986
    %1691 = vmatprep.mubr.bf16.mxu0 %v1601
    %1692 = vmatmul.mubr.bf16.gmra.mrb[0].mxu0 %v1600
    %v1693 = vpop.f32.mrb[0].mxu0
    %v1694 = vadd.f32 %v1604, %v1693
    %v1695 = vpop.f32.mrb[0].mxu0
    %v1696 = vadd.f32 %v1605, %v1695
    %v1697 = vpop.f32.mrb[0].mxu0
    %v1698 = vpop.f32.mrb[0].mxu0
    %1699 = vdwg.mxu0
    %1700 = vmatprep.subr.bf16.mxu0 %v869
    %1701 = vmatpush1.bf16.msra.mxu0 %v868
    %1702 = vmatprep.subr.bf16.mxu0 %v877
    %1703 = vmatpush1.bf16.msra.mxu0 %v876
    %1704 = vmatprep.subr.bf16.mxu0 %v885
    %1705 = vmatpush1.bf16.msra.mxu0 %v884
    %1706 = vmatprep.subr.bf16.mxu0 %v893
    %1707 = vmatpush1.bf16.msra.mxu0 %v892
    %1708 = vmatprep.subr.bf16.mxu0 %v901
    %1709 = vmatpush1.bf16.msra.mxu0 %v900
    %1710 = vmatprep.subr.bf16.mxu0 %v909
    %1711 = vmatpush1.bf16.msra.mxu0 %v908
    %1712 = vmatprep.subr.bf16.mxu0 %v917
    %1713 = vmatpush1.bf16.msra.mxu0 %v916
    %1714 = vmatprep.subr.bf16.mxu0 %v925
    %1715 = vmatpush1.bf16.msra.mxu0 %v924
    %1716 = vmatprep.subr.bf16.mxu0 %v933
    %1717 = vmatpush1.bf16.msra.mxu0 %v932
    %1718 = vmatprep.subr.bf16.mxu0 %v941
    %1719 = vmatpush1.bf16.msra.mxu0 %v940
    %1720 = vmatprep.subr.bf16.mxu0 %v949
    %1721 = vmatpush1.bf16.msra.mxu0 %v948
    %1722 = vmatprep.subr.bf16.mxu0 %v957
    %1723 = vmatpush1.bf16.msra.mxu0 %v956
    %1724 = vmatprep.subr.bf16.mxu0 %v965
    %1725 = vmatpush1.bf16.msra.mxu0 %v964
    %1726 = vmatprep.subr.bf16.mxu0 %v973
    %1727 = vmatpush1.bf16.msra.mxu0 %v972
    %1728 = vmatprep.subr.bf16.mxu0 %v981
    %1729 = vmatpush1.bf16.msra.mxu0 %v980
    %1730 = vmatprep.subr.bf16.mxu0 %v989
    %1731 = vmatpush1.bf16.msra.mxu0 %v988
    %1732 = vmatprep.mubr.bf16.mxu0 %v1601
    %1733 = vmatmul.mubr.bf16.gmra.mrb[0].mxu0 %v1600
    %v1734 = vpop.f32.mrb[0].mxu0
    %v1735 = vadd.f32 %v1606, %v1734
    %v1736 = vpop.f32.mrb[0].mxu0
    %v1737 = vadd.f32 %v1607, %v1736
    %v1738 = vpop.f32.mrb[0].mxu0
    %v1739 = vpop.f32.mrb[0].mxu0
    %1740 = vdwg.mxu0
    %1741 = vmatprep.subr.bf16.mxu0 %v871
    %1742 = vmatpush1.bf16.msra.mxu0 %v870
    %1743 = vmatprep.subr.bf16.mxu0 %v879
    %1744 = vmatpush1.bf16.msra.mxu0 %v878
    %1745 = vmatprep.subr.bf16.mxu0 %v887
    %1746 = vmatpush1.bf16.msra.mxu0 %v886
    %1747 = vmatprep.subr.bf16.mxu0 %v895
    %1748 = vmatpush1.bf16.msra.mxu0 %v894
    %1749 = vmatprep.subr.bf16.mxu0 %v903
    %1750 = vmatpush1.bf16.msra.mxu0 %v902
    %1751 = vmatprep.subr.bf16.mxu0 %v911
    %1752 = vmatpush1.bf16.msra.mxu0 %v910
    %1753 = vmatprep.subr.bf16.mxu0 %v919
    %1754 = vmatpush1.bf16.msra.mxu0 %v918
    %1755 = vmatprep.subr.bf16.mxu0 %v927
    %1756 = vmatpush1.bf16.msra.mxu0 %v926
    %1757 = vmatprep.subr.bf16.mxu0 %v935
    %1758 = vmatpush1.bf16.msra.mxu0 %v934
    %1759 = vmatprep.subr.bf16.mxu0 %v943
    %1760 = vmatpush1.bf16.msra.mxu0 %v942
    %1761 = vmatprep.subr.bf16.mxu0 %v951
    %1762 = vmatpush1.bf16.msra.mxu0 %v950
    %1763 = vmatprep.subr.bf16.mxu0 %v959
    %1764 = vmatpush1.bf16.msra.mxu0 %v958
    %1765 = vmatprep.subr.bf16.mxu0 %v967
    %1766 = vmatpush1.bf16.msra.mxu0 %v966
    %1767 = vmatprep.subr.bf16.mxu0 %v975
    %1768 = vmatpush1.bf16.msra.mxu0 %v974
    %1769 = vmatprep.subr.bf16.mxu0 %v983
    %1770 = vmatpush1.bf16.msra.mxu0 %v982
    %1771 = vmatprep.subr.bf16.mxu0 %v991
    %1772 = vmatpush1.bf16.msra.mxu0 %v990
    %1773 = vmatprep.mubr.bf16.mxu0 %v1601
    %1774 = vmatmul.mubr.bf16.gmra.mrb[0].mxu0 %v1600
    %v1775 = vpop.f32.mrb[0].mxu0
    %v1776 = vadd.f32 %v1608, %v1775
    %v1777 = vpop.f32.mrb[0].mxu0
    %v1778 = vadd.f32 %v1609, %v1777
    %v1779 = vpop.f32.mrb[0].mxu0
    %v1780 = vpop.f32.mrb[0].mxu0
    %1781 = vdwg.mxu0
    %v1782 = vxor.u32 %v1653, 2147483648
    %v1783 = vxor.u32 %v1655, 2147483648
    %v1784 = vxor.u32 %v1694, 2147483648
    %v1785 = vxor.u32 %v1696, 2147483648
    %v1786 = vxor.u32 %v1735, 2147483648
    %v1787 = vxor.u32 %v1737, 2147483648
    %v1788 = vmul.f32 %v1782, 1.442695
    %v1789 = vpow.pop %v1788
    %v1790 = vmul.f32 %v1783, 1.442695
    %v1791 = vpow.pop %v1790
    %v1792 = vmul.f32 %v1784, 1.442695
    %v1793 = vpow.pop %v1792
    %v1794 = vmul.f32 %v1785, 1.442695
    %v1795 = vpow.pop %v1794
    %v1796 = vmul.f32 %v1786, 1.442695
    %v1797 = vpow.pop %v1796
    %v1798 = vmul.f32 %v1787, 1.442695
    %v1799 = vpow.pop %v1798
    %v1800 = vadd.f32 %v1789, 1.0
    %v1801 = vadd.f32 %v1791, 1.0
    %v1802 = vadd.f32 %v1793, 1.0
    %v1803 = vadd.f32 %v1795, 1.0
    %v1804 = vadd.f32 %v1797, 1.0
    %v1805 = vadd.f32 %v1799, 1.0
    %v1806 = vrcp.pop %v1800
    %v1807 = vmul.f32 1.0, %v1806
    %v1808 = vrcp.pop %v1801
    %v1809 = vmul.f32 1.0, %v1808
    %v1810 = vrcp.pop %v1802
    %v1811 = vmul.f32 1.0, %v1810
    %v1812 = vrcp.pop %v1803
    %v1813 = vmul.f32 1.0, %v1812
    %v1814 = vrcp.pop %v1804
    %v1815 = vmul.f32 1.0, %v1814
    %v1816 = vrcp.pop %v1805
    %v1817 = vmul.f32 1.0, %v1816
    %v1818 = vtanh.pop %v1776
    %v1819 = vtanh.pop %v1778
    %v1820 = vmul.f32 %v1811, %v1587
    %v1821 = vmul.f32 %v1813, %v1588
    %v1822 = vmul.f32 %v1807, %v1818
    %v1823 = vmul.f32 %v1809, %v1819
    %v1824 = vadd.f32 %v1820, %v1822
    %v1825 = vadd.f32 %v1821, %v1823
    %v1826 = vtanh.pop %v1824
    %v1827 = vtanh.pop %v1825
    %v1828 = vmul.f32 %v1815, %v1826
    %v1829 = vmul.f32 %v1817, %v1827
    %vm1830 = vcmp.eq.s32.totalorder %v461, 2
    %v1831 = vsel %vm1830, 1, 0
    %1832 = vset.pattern.permute.xlu0 0
    %1833 = vperm.xlu0 %1832, %v1831
    %v1834 = vpop.permute.xlu0 %1833
    %vm1835 = vcmp.eq.s32.totalorder %v1834, 1
    %v1836 = vsel %vm1835, %v1829, %v1599
    %v1837 = vpack.c.bf16 %v1828, %v1828
    %v1838 = vpack.c.bf16 %v1829, %v1829
    %1839 = vmatprep.subr.bf16.mxu0 %v865
    %1840 = vmatpush1.bf16.msra.mxu0 %v864
    %1841 = vmatprep.subr.bf16.mxu0 %v873
    %1842 = vmatpush1.bf16.msra.mxu0 %v872
    %1843 = vmatprep.subr.bf16.mxu0 %v881
    %1844 = vmatpush1.bf16.msra.mxu0 %v880
    %1845 = vmatprep.subr.bf16.mxu0 %v889
    %1846 = vmatpush1.bf16.msra.mxu0 %v888
    %1847 = vmatprep.subr.bf16.mxu0 %v897
    %1848 = vmatpush1.bf16.msra.mxu0 %v896
    %1849 = vmatprep.subr.bf16.mxu0 %v905
    %1850 = vmatpush1.bf16.msra.mxu0 %v904
    %1851 = vmatprep.subr.bf16.mxu0 %v913
    %1852 = vmatpush1.bf16.msra.mxu0 %v912
    %1853 = vmatprep.subr.bf16.mxu0 %v921
    %1854 = vmatpush1.bf16.msra.mxu0 %v920
    %1855 = vmatprep.subr.bf16.mxu0 %v929
    %1856 = vmatpush1.bf16.msra.mxu0 %v928
    %1857 = vmatprep.subr.bf16.mxu0 %v937
    %1858 = vmatpush1.bf16.msra.mxu0 %v936
    %1859 = vmatprep.subr.bf16.mxu0 %v945
    %1860 = vmatpush1.bf16.msra.mxu0 %v944
    %1861 = vmatprep.subr.bf16.mxu0 %v953
    %1862 = vmatpush1.bf16.msra.mxu0 %v952
    %1863 = vmatprep.subr.bf16.mxu0 %v961
    %1864 = vmatpush1.bf16.msra.mxu0 %v960
    %1865 = vmatprep.subr.bf16.mxu0 %v969
    %1866 = vmatpush1.bf16.msra.mxu0 %v968
    %1867 = vmatprep.subr.bf16.mxu0 %v977
    %1868 = vmatpush1.bf16.msra.mxu0 %v976
    %1869 = vmatprep.subr.bf16.mxu0 %v985
    %1870 = vmatpush1.bf16.msra.mxu0 %v984
    %1871 = vmatprep.mubr.bf16.mxu0 %v1838
    %1872 = vmatmul.mubr.bf16.gmra.mrb[0].mxu0 %v1837
    %v1873 = vpop.f32.mrb[0].mxu0
    %v1874 = vadd.f32 %v200, %v1873
    %v1875 = vpop.f32.mrb[0].mxu0
    %v1876 = vadd.f32 %v202, %v1875
    %v1877 = vpop.f32.mrb[0].mxu0
    %v1878 = vpop.f32.mrb[0].mxu0
    %1879 = vdwg.mxu0
    %1880 = vmatprep.subr.bf16.mxu0 %v867
    %1881 = vmatpush1.bf16.msra.mxu0 %v866
    %1882 = vmatprep.subr.bf16.mxu0 %v875
    %1883 = vmatpush1.bf16.msra.mxu0 %v874
    %1884 = vmatprep.subr.bf16.mxu0 %v883
    %1885 = vmatpush1.bf16.msra.mxu0 %v882
    %1886 = vmatprep.subr.bf16.mxu0 %v891
    %1887 = vmatpush1.bf16.msra.mxu0 %v890
    %1888 = vmatprep.subr.bf16.mxu0 %v899
    %1889 = vmatpush1.bf16.msra.mxu0 %v898
    %1890 = vmatprep.subr.bf16.mxu0 %v907
    %1891 = vmatpush1.bf16.msra.mxu0 %v906
    %1892 = vmatprep.subr.bf16.mxu0 %v915
    %1893 = vmatpush1.bf16.msra.mxu0 %v914
    %1894 = vmatprep.subr.bf16.mxu0 %v923
    %1895 = vmatpush1.bf16.msra.mxu0 %v922
    %1896 = vmatprep.subr.bf16.mxu0 %v931
    %1897 = vmatpush1.bf16.msra.mxu0 %v930
    %1898 = vmatprep.subr.bf16.mxu0 %v939
    %1899 = vmatpush1.bf16.msra.mxu0 %v938
    %1900 = vmatprep.subr.bf16.mxu0 %v947
    %1901 = vmatpush1.bf16.msra.mxu0 %v946
    %1902 = vmatprep.subr.bf16.mxu0 %v955
    %1903 = vmatpush1.bf16.msra.mxu0 %v954
    %1904 = vmatprep.subr.bf16.mxu0 %v963
    %1905 = vmatpush1.bf16.msra.mxu0 %v962
    %1906 = vmatprep.subr.bf16.mxu0 %v971
    %1907 = vmatpush1.bf16.msra.mxu0 %v970
    %1908 = vmatprep.subr.bf16.mxu0 %v979
    %1909 = vmatpush1.bf16.msra.mxu0 %v978
    %1910 = vmatprep.subr.bf16.mxu0 %v987
    %1911 = vmatpush1.bf16.msra.mxu0 %v986
    %1912 = vmatprep.mubr.bf16.mxu0 %v1838
    %1913 = vmatmul.mubr.bf16.gmra.mrb[0].mxu0 %v1837
    %v1914 = vpop.f32.mrb[0].mxu0
    %v1915 = vadd.f32 %v243, %v1914
    %v1916 = vpop.f32.mrb[0].mxu0
    %v1917 = vadd.f32 %v245, %v1916
    %v1918 = vpop.f32.mrb[0].mxu0
    %v1919 = vpop.f32.mrb[0].mxu0
    %1920 = vdwg.mxu0
    %1921 = vmatprep.subr.bf16.mxu0 %v869
    %1922 = vmatpush1.bf16.msra.mxu0 %v868
    %1923 = vmatprep.subr.bf16.mxu0 %v877
    %1924 = vmatpush1.bf16.msra.mxu0 %v876
    %1925 = vmatprep.subr.bf16.mxu0 %v885
    %1926 = vmatpush1.bf16.msra.mxu0 %v884
    %1927 = vmatprep.subr.bf16.mxu0 %v893
    %1928 = vmatpush1.bf16.msra.mxu0 %v892
    %1929 = vmatprep.subr.bf16.mxu0 %v901
    %1930 = vmatpush1.bf16.msra.mxu0 %v900
    %1931 = vmatprep.subr.bf16.mxu0 %v909
    %1932 = vmatpush1.bf16.msra.mxu0 %v908
    %1933 = vmatprep.subr.bf16.mxu0 %v917
    %1934 = vmatpush1.bf16.msra.mxu0 %v916
    %1935 = vmatprep.subr.bf16.mxu0 %v925
    %1936 = vmatpush1.bf16.msra.mxu0 %v924
    %1937 = vmatprep.subr.bf16.mxu0 %v933
    %1938 = vmatpush1.bf16.msra.mxu0 %v932
    %1939 = vmatprep.subr.bf16.mxu0 %v941
    %1940 = vmatpush1.bf16.msra.mxu0 %v940
    %1941 = vmatprep.subr.bf16.mxu0 %v949
    %1942 = vmatpush1.bf16.msra.mxu0 %v948
    %1943 = vmatprep.subr.bf16.mxu0 %v957
    %1944 = vmatpush1.bf16.msra.mxu0 %v956
    %1945 = vmatprep.subr.bf16.mxu0 %v965
    %1946 = vmatpush1.bf16.msra.mxu0 %v964
    %1947 = vmatprep.subr.bf16.mxu0 %v973
    %1948 = vmatpush1.bf16.msra.mxu0 %v972
    %1949 = vmatprep.subr.bf16.mxu0 %v981
    %1950 = vmatpush1.bf16.msra.mxu0 %v980
    %1951 = vmatprep.subr.bf16.mxu0 %v989
    %1952 = vmatpush1.bf16.msra.mxu0 %v988
    %1953 = vmatprep.mubr.bf16.mxu0 %v1838
    %1954 = vmatmul.mubr.bf16.gmra.mrb[0].mxu0 %v1837
    %v1955 = vpop.f32.mrb[0].mxu0
    %v1956 = vadd.f32 %v286, %v1955
    %v1957 = vpop.f32.mrb[0].mxu0
    %v1958 = vadd.f32 %v288, %v1957
    %v1959 = vpop.f32.mrb[0].mxu0
    %v1960 = vpop.f32.mrb[0].mxu0
    %1961 = vdwg.mxu0
    %1962 = vmatprep.subr.bf16.mxu0 %v871
    %1963 = vmatpush1.bf16.msra.mxu0 %v870
    %1964 = vmatprep.subr.bf16.mxu0 %v879
    %1965 = vmatpush1.bf16.msra.mxu0 %v878
    %1966 = vmatprep.subr.bf16.mxu0 %v887
    %1967 = vmatpush1.bf16.msra.mxu0 %v886
    %1968 = vmatprep.subr.bf16.mxu0 %v895
    %1969 = vmatpush1.bf16.msra.mxu0 %v894
    %1970 = vmatprep.subr.bf16.mxu0 %v903
    %1971 = vmatpush1.bf16.msra.mxu0 %v902
    %1972 = vmatprep.subr.bf16.mxu0 %v911
    %1973 = vmatpush1.bf16.msra.mxu0 %v910
    %1974 = vmatprep.subr.bf16.mxu0 %v919
    %1975 = vmatpush1.bf16.msra.mxu0 %v918
    %1976 = vmatprep.subr.bf16.mxu0 %v927
    %1977 = vmatpush1.bf16.msra.mxu0 %v926
    %1978 = vmatprep.subr.bf16.mxu0 %v935
    %1979 = vmatpush1.bf16.msra.mxu0 %v934
    %1980 = vmatprep.subr.bf16.mxu0 %v943
    %1981 = vmatpush1.bf16.msra.mxu0 %v942
    %1982 = vmatprep.subr.bf16.mxu0 %v951
    %1983 = vmatpush1.bf16.msra.mxu0 %v950
    %1984 = vmatprep.subr.bf16.mxu0 %v959
    %1985 = vmatpush1.bf16.msra.mxu0 %v958
    %1986 = vmatprep.subr.bf16.mxu0 %v967
    %1987 = vmatpush1.bf16.msra.mxu0 %v966
    %1988 = vmatprep.subr.bf16.mxu0 %v975
    %1989 = vmatpush1.bf16.msra.mxu0 %v974
    %1990 = vmatprep.subr.bf16.mxu0 %v983
    %1991 = vmatpush1.bf16.msra.mxu0 %v982
    %1992 = vmatprep.subr.bf16.mxu0 %v991
    %1993 = vmatpush1.bf16.msra.mxu0 %v990
    %1994 = vmatprep.mubr.bf16.mxu0 %v1838
    %1995 = vmatmul.mubr.bf16.gmra.mrb[0].mxu0 %v1837
    %v1996 = vpop.f32.mrb[0].mxu0
    %v1997 = vadd.f32 %v329, %v1996
    %v1998 = vpop.f32.mrb[0].mxu0
    %v1999 = vadd.f32 %v331, %v1998
    %v2000 = vpop.f32.mrb[0].mxu0
    %v2001 = vpop.f32.mrb[0].mxu0
    %2002 = vdwg.mxu0
    %v2003 = vxor.u32 %v1874, 2147483648
    %v2004 = vxor.u32 %v1876, 2147483648
    %v2005 = vxor.u32 %v1915, 2147483648
    %v2006 = vxor.u32 %v1917, 2147483648
    %v2007 = vxor.u32 %v1956, 2147483648
    %v2008 = vxor.u32 %v1958, 2147483648
    %v2009 = vmul.f32 %v2003, 1.442695
    %v2010 = vpow.pop %v2009
    %v2011 = vmul.f32 %v2004, 1.442695
    %v2012 = vpow.pop %v2011
    %v2013 = vmul.f32 %v2005, 1.442695
    %v2014 = vpow.pop %v2013
    %v2015 = vmul.f32 %v2006, 1.442695
    %v2016 = vpow.pop %v2015
    %v2017 = vmul.f32 %v2007, 1.442695
    %v2018 = vpow.pop %v2017
    %v2019 = vmul.f32 %v2008, 1.442695
    %v2020 = vpow.pop %v2019
    %v2021 = vadd.f32 %v2010, 1.0
    %v2022 = vadd.f32 %v2012, 1.0
    %v2023 = vadd.f32 %v2014, 1.0
    %v2024 = vadd.f32 %v2016, 1.0
    %v2025 = vadd.f32 %v2018, 1.0
    %v2026 = vadd.f32 %v2020, 1.0
    %v2027 = vrcp.pop %v2021
    %v2028 = vmul.f32 1.0, %v2027
    %v2029 = vrcp.pop %v2022
    %v2030 = vmul.f32 1.0, %v2029
    %v2031 = vrcp.pop %v2023
    %v2032 = vmul.f32 1.0, %v2031
    %v2033 = vrcp.pop %v2024
    %v2034 = vmul.f32 1.0, %v2033
    %v2035 = vrcp.pop %v2025
    %v2036 = vmul.f32 1.0, %v2035
    %v2037 = vrcp.pop %v2026
    %v2038 = vmul.f32 1.0, %v2037
    %v2039 = vtanh.pop %v1997
    %v2040 = vtanh.pop %v1999
    %v2041 = vmul.f32 %v2032, %v1824
    %v2042 = vmul.f32 %v2034, %v1825
    %v2043 = vmul.f32 %v2028, %v2039
    %v2044 = vmul.f32 %v2030, %v2040
    %v2045 = vadd.f32 %v2041, %v2043
    %v2046 = vadd.f32 %v2042, %v2044
    %v2047 = vtanh.pop %v2045
    %v2048 = vtanh.pop %v2046
    %v2049 = vmul.f32 %v2036, %v2047
    %v2050 = vmul.f32 %v2038, %v2048
    %vm2051 = vcmp.eq.s32.totalorder %v461, 3
    %v2052 = vsel %vm2051, 1, 0
    %2053 = vset.pattern.permute.xlu0 0
    %2054 = vperm.xlu0 %2053, %v2052
    %v2055 = vpop.permute.xlu0 %2054
    %vm2056 = vcmp.eq.s32.totalorder %v2055, 1
    %v2057 = vsel %vm2056, %v2050, %v1836
    %v2058 = vpack.c.bf16 %v2049, %v2049
    %v2059 = vpack.c.bf16 %v2050, %v2050
    %v2068 = vrot.slane %v200, 2
    %v2069 = vrot.slane %v202, 2
    %v2070 = vrot.slane %v243, 2
    %v2071 = vrot.slane %v245, 2
    %v2072 = vrot.slane %v286, 2
    %v2073 = vrot.slane %v288, 2
    %v2074 = vrot.slane %v329, 2
    %v2075 = vrot.slane %v331, 2
    %2084 = vmatprep.subr.bf16.mxu0 %v865
    %2085 = vmatpush1.bf16.msra.mxu0 %v864
    %2086 = vmatprep.subr.bf16.mxu0 %v873
    %2087 = vmatpush1.bf16.msra.mxu0 %v872
    %2088 = vmatprep.subr.bf16.mxu0 %v881
    %2089 = vmatpush1.bf16.msra.mxu0 %v880
    %2090 = vmatprep.subr.bf16.mxu0 %v889
    %2091 = vmatpush1.bf16.msra.mxu0 %v888
    %2092 = vmatprep.subr.bf16.mxu0 %v897
    %2093 = vmatpush1.bf16.msra.mxu0 %v896
    %2094 = vmatprep.subr.bf16.mxu0 %v905
    %2095 = vmatpush1.bf16.msra.mxu0 %v904
    %2096 = vmatprep.subr.bf16.mxu0 %v913
    %2097 = vmatpush1.bf16.msra.mxu0 %v912
    %2098 = vmatprep.subr.bf16.mxu0 %v921
    %2099 = vmatpush1.bf16.msra.mxu0 %v920
    %2100 = vmatprep.subr.bf16.mxu0 %v929
    %2101 = vmatpush1.bf16.msra.mxu0 %v928
    %2102 = vmatprep.subr.bf16.mxu0 %v937
    %2103 = vmatpush1.bf16.msra.mxu0 %v936
    %2104 = vmatprep.subr.bf16.mxu0 %v945
    %2105 = vmatpush1.bf16.msra.mxu0 %v944
    %2106 = vmatprep.subr.bf16.mxu0 %v953
    %2107 = vmatpush1.bf16.msra.mxu0 %v952
    %2108 = vmatprep.subr.bf16.mxu0 %v961
    %2109 = vmatpush1.bf16.msra.mxu0 %v960
    %2110 = vmatprep.subr.bf16.mxu0 %v969
    %2111 = vmatpush1.bf16.msra.mxu0 %v968
    %2112 = vmatprep.subr.bf16.mxu0 %v977
    %2113 = vmatpush1.bf16.msra.mxu0 %v976
    %2114 = vmatprep.subr.bf16.mxu0 %v985
    %2115 = vmatpush1.bf16.msra.mxu0 %v984
    %2116 = vmatprep.mubr.bf16.mxu0 %v2059
    %2117 = vmatmul.mubr.bf16.gmra.mrb[0].mxu0 %v2058
    %v2118 = vpop.f32.mrb[0].mxu0
    %v2119 = vadd.f32 %v2068, %v2118
    %v2120 = vpop.f32.mrb[0].mxu0
    %v2121 = vadd.f32 %v2069, %v2120
    %v2122 = vpop.f32.mrb[0].mxu0
    %v2123 = vpop.f32.mrb[0].mxu0
    %2124 = vdwg.mxu0
    %2125 = vmatprep.subr.bf16.mxu0 %v867
    %2126 = vmatpush1.bf16.msra.mxu0 %v866
    %2127 = vmatprep.subr.bf16.mxu0 %v875
    %2128 = vmatpush1.bf16.msra.mxu0 %v874
    %2129 = vmatprep.subr.bf16.mxu0 %v883
    %2130 = vmatpush1.bf16.msra.mxu0 %v882
    %2131 = vmatprep.subr.bf16.mxu0 %v891
    %2132 = vmatpush1.bf16.msra.mxu0 %v890
    %2133 = vmatprep.subr.bf16.mxu0 %v899
    %2134 = vmatpush1.bf16.msra.mxu0 %v898
    %2135 = vmatprep.subr.bf16.mxu0 %v907
    %2136 = vmatpush1.bf16.msra.mxu0 %v906
    %2137 = vmatprep.subr.bf16.mxu0 %v915
    %2138 = vmatpush1.bf16.msra.mxu0 %v914
    %2139 = vmatprep.subr.bf16.mxu0 %v923
    %2140 = vmatpush1.bf16.msra.mxu0 %v922
    %2141 = vmatprep.subr.bf16.mxu0 %v931
    %2142 = vmatpush1.bf16.msra.mxu0 %v930
    %2143 = vmatprep.subr.bf16.mxu0 %v939
    %2144 = vmatpush1.bf16.msra.mxu0 %v938
    %2145 = vmatprep.subr.bf16.mxu0 %v947
    %2146 = vmatpush1.bf16.msra.mxu0 %v946
    %2147 = vmatprep.subr.bf16.mxu0 %v955
    %2148 = vmatpush1.bf16.msra.mxu0 %v954
    %2149 = vmatprep.subr.bf16.mxu0 %v963
    %2150 = vmatpush1.bf16.msra.mxu0 %v962
    %2151 = vmatprep.subr.bf16.mxu0 %v971
    %2152 = vmatpush1.bf16.msra.mxu0 %v970
    %2153 = vmatprep.subr.bf16.mxu0 %v979
    %2154 = vmatpush1.bf16.msra.mxu0 %v978
    %2155 = vmatprep.subr.bf16.mxu0 %v987
    %2156 = vmatpush1.bf16.msra.mxu0 %v986
    %2157 = vmatprep.mubr.bf16.mxu0 %v2059
    %2158 = vmatmul.mubr.bf16.gmra.mrb[0].mxu0 %v2058
    %v2159 = vpop.f32.mrb[0].mxu0
    %v2160 = vadd.f32 %v2070, %v2159
    %v2161 = vpop.f32.mrb[0].mxu0
    %v2162 = vadd.f32 %v2071, %v2161
    %v2163 = vpop.f32.mrb[0].mxu0
    %v2164 = vpop.f32.mrb[0].mxu0
    %2165 = vdwg.mxu0
    %2166 = vmatprep.subr.bf16.mxu0 %v869
    %2167 = vmatpush1.bf16.msra.mxu0 %v868
    %2168 = vmatprep.subr.bf16.mxu0 %v877
    %2169 = vmatpush1.bf16.msra.mxu0 %v876
    %2170 = vmatprep.subr.bf16.mxu0 %v885
    %2171 = vmatpush1.bf16.msra.mxu0 %v884
    %2172 = vmatprep.subr.bf16.mxu0 %v893
    %2173 = vmatpush1.bf16.msra.mxu0 %v892
    %2174 = vmatprep.subr.bf16.mxu0 %v901
    %2175 = vmatpush1.bf16.msra.mxu0 %v900
    %2176 = vmatprep.subr.bf16.mxu0 %v909
    %2177 = vmatpush1.bf16.msra.mxu0 %v908
    %2178 = vmatprep.subr.bf16.mxu0 %v917
    %2179 = vmatpush1.bf16.msra.mxu0 %v916
    %2180 = vmatprep.subr.bf16.mxu0 %v925
    %2181 = vmatpush1.bf16.msra.mxu0 %v924
    %2182 = vmatprep.subr.bf16.mxu0 %v933
    %2183 = vmatpush1.bf16.msra.mxu0 %v932
    %2184 = vmatprep.subr.bf16.mxu0 %v941
    %2185 = vmatpush1.bf16.msra.mxu0 %v940
    %2186 = vmatprep.subr.bf16.mxu0 %v949
    %2187 = vmatpush1.bf16.msra.mxu0 %v948
    %2188 = vmatprep.subr.bf16.mxu0 %v957
    %2189 = vmatpush1.bf16.msra.mxu0 %v956
    %2190 = vmatprep.subr.bf16.mxu0 %v965
    %2191 = vmatpush1.bf16.msra.mxu0 %v964
    %2192 = vmatprep.subr.bf16.mxu0 %v973
    %2193 = vmatpush1.bf16.msra.mxu0 %v972
    %2194 = vmatprep.subr.bf16.mxu0 %v981
    %2195 = vmatpush1.bf16.msra.mxu0 %v980
    %2196 = vmatprep.subr.bf16.mxu0 %v989
    %2197 = vmatpush1.bf16.msra.mxu0 %v988
    %2198 = vmatprep.mubr.bf16.mxu0 %v2059
    %2199 = vmatmul.mubr.bf16.gmra.mrb[0].mxu0 %v2058
    %v2200 = vpop.f32.mrb[0].mxu0
    %v2201 = vadd.f32 %v2072, %v2200
    %v2202 = vpop.f32.mrb[0].mxu0
    %v2203 = vadd.f32 %v2073, %v2202
    %v2204 = vpop.f32.mrb[0].mxu0
    %v2205 = vpop.f32.mrb[0].mxu0
    %2206 = vdwg.mxu0
    %2207 = vmatprep.subr.bf16.mxu0 %v871
    %2208 = vmatpush1.bf16.msra.mxu0 %v870
    %2209 = vmatprep.subr.bf16.mxu0 %v879
    %2210 = vmatpush1.bf16.msra.mxu0 %v878
    %2211 = vmatprep.subr.bf16.mxu0 %v887
    %2212 = vmatpush1.bf16.msra.mxu0 %v886
    %2213 = vmatprep.subr.bf16.mxu0 %v895
    %2214 = vmatpush1.bf16.msra.mxu0 %v894
    %2215 = vmatprep.subr.bf16.mxu0 %v903
    %2216 = vmatpush1.bf16.msra.mxu0 %v902
    %2217 = vmatprep.subr.bf16.mxu0 %v911
    %2218 = vmatpush1.bf16.msra.mxu0 %v910
    %2219 = vmatprep.subr.bf16.mxu0 %v919
    %2220 = vmatpush1.bf16.msra.mxu0 %v918
    %2221 = vmatprep.subr.bf16.mxu0 %v927
    %2222 = vmatpush1.bf16.msra.mxu0 %v926
    %2223 = vmatprep.subr.bf16.mxu0 %v935
    %2224 = vmatpush1.bf16.msra.mxu0 %v934
    %2225 = vmatprep.subr.bf16.mxu0 %v943
    %2226 = vmatpush1.bf16.msra.mxu0 %v942
    %2227 = vmatprep.subr.bf16.mxu0 %v951
    %2228 = vmatpush1.bf16.msra.mxu0 %v950
    %2229 = vmatprep.subr.bf16.mxu0 %v959
    %2230 = vmatpush1.bf16.msra.mxu0 %v958
    %2231 = vmatprep.subr.bf16.mxu0 %v967
    %2232 = vmatpush1.bf16.msra.mxu0 %v966
    %2233 = vmatprep.subr.bf16.mxu0 %v975
    %2234 = vmatpush1.bf16.msra.mxu0 %v974
    %2235 = vmatprep.subr.bf16.mxu0 %v983
    %2236 = vmatpush1.bf16.msra.mxu0 %v982
    %2237 = vmatprep.subr.bf16.mxu0 %v991
    %2238 = vmatpush1.bf16.msra.mxu0 %v990
    %2239 = vmatprep.mubr.bf16.mxu0 %v2059
    %2240 = vmatmul.mubr.bf16.gmra.mrb[0].mxu0 %v2058
    %v2241 = vpop.f32.mrb[0].mxu0
    %v2242 = vadd.f32 %v2074, %v2241
    %v2243 = vpop.f32.mrb[0].mxu0
    %v2244 = vadd.f32 %v2075, %v2243
    %v2245 = vpop.f32.mrb[0].mxu0
    %v2246 = vpop.f32.mrb[0].mxu0
    %2247 = vdwg.mxu0
    %v2248 = vxor.u32 %v2119, 2147483648
    %v2249 = vxor.u32 %v2121, 2147483648
    %v2250 = vxor.u32 %v2160, 2147483648
    %v2251 = vxor.u32 %v2162, 2147483648
    %v2252 = vxor.u32 %v2201, 2147483648
    %v2253 = vxor.u32 %v2203, 2147483648
    %v2254 = vmul.f32 %v2248, 1.442695
    %v2255 = vpow.pop %v2254
    %v2256 = vmul.f32 %v2249, 1.442695
    %v2257 = vpow.pop %v2256
    %v2258 = vmul.f32 %v2250, 1.442695
    %v2259 = vpow.pop %v2258
    %v2260 = vmul.f32 %v2251, 1.442695
    %v2261 = vpow.pop %v2260
    %v2262 = vmul.f32 %v2252, 1.442695
    %v2263 = vpow.pop %v2262
    %v2264 = vmul.f32 %v2253, 1.442695
    %v2265 = vpow.pop %v2264
    %v2266 = vadd.f32 %v2255, 1.0
    %v2267 = vadd.f32 %v2257, 1.0
    %v2268 = vadd.f32 %v2259, 1.0
    %v2269 = vadd.f32 %v2261, 1.0
    %v2270 = vadd.f32 %v2263, 1.0
    %v2271 = vadd.f32 %v2265, 1.0
    %v2272 = vrcp.pop %v2266
    %v2273 = vmul.f32 1.0, %v2272
    %v2274 = vrcp.pop %v2267
    %v2275 = vmul.f32 1.0, %v2274
    %v2276 = vrcp.pop %v2268
    %v2277 = vmul.f32 1.0, %v2276
    %v2278 = vrcp.pop %v2269
    %v2279 = vmul.f32 1.0, %v2278
    %v2280 = vrcp.pop %v2270
    %v2281 = vmul.f32 1.0, %v2280
    %v2282 = vrcp.pop %v2271
    %v2283 = vmul.f32 1.0, %v2282
    %v2284 = vtanh.pop %v2242
    %v2285 = vtanh.pop %v2244
    %v2286 = vmul.f32 %v2277, %v2045
    %v2287 = vmul.f32 %v2279, %v2046
    %v2288 = vmul.f32 %v2273, %v2284
    %v2289 = vmul.f32 %v2275, %v2285
    %v2290 = vadd.f32 %v2286, %v2288
    %v2291 = vadd.f32 %v2287, %v2289
    %v2292 = vtanh.pop %v2290
    %v2293 = vtanh.pop %v2291
    %v2294 = vmul.f32 %v2281, %v2292
    %v2295 = vmul.f32 %v2283, %v2293
    %vm2296 = vcmp.eq.s32.totalorder %v461, 4
    %v2297 = vsel %vm2296, 1, 0
    %2298 = vset.pattern.permute.xlu0 0
    %2299 = vperm.xlu0 %2298, %v2297
    %v2300 = vpop.permute.xlu0 %2299
    %vm2301 = vcmp.eq.s32.totalorder %v2300, 1
    %v2302 = vsel %vm2301, %v2295, %v2057
    %v2303 = vpack.c.bf16 %v2294, %v2294
    %v2304 = vpack.c.bf16 %v2295, %v2295
    %v2305 = vrot.slane %v200, 4
    %v2306 = vrot.slane %v202, 4
    %v2307 = vrot.slane %v243, 4
    %v2308 = vrot.slane %v245, 4
    %v2309 = vrot.slane %v286, 4
    %v2310 = vrot.slane %v288, 4
    %v2311 = vrot.slane %v329, 4
    %v2312 = vrot.slane %v331, 4
    %2321 = vmatprep.subr.bf16.mxu0 %v865
    %2322 = vmatpush1.bf16.msra.mxu0 %v864
    %2323 = vmatprep.subr.bf16.mxu0 %v873
    %2324 = vmatpush1.bf16.msra.mxu0 %v872
    %2325 = vmatprep.subr.bf16.mxu0 %v881
    %2326 = vmatpush1.bf16.msra.mxu0 %v880
    %2327 = vmatprep.subr.bf16.mxu0 %v889
    %2328 = vmatpush1.bf16.msra.mxu0 %v888
    %2329 = vmatprep.subr.bf16.mxu0 %v897
    %2330 = vmatpush1.bf16.msra.mxu0 %v896
    %2331 = vmatprep.subr.bf16.mxu0 %v905
    %2332 = vmatpush1.bf16.msra.mxu0 %v904
    %2333 = vmatprep.subr.bf16.mxu0 %v913
    %2334 = vmatpush1.bf16.msra.mxu0 %v912
    %2335 = vmatprep.subr.bf16.mxu0 %v921
    %2336 = vmatpush1.bf16.msra.mxu0 %v920
    %2337 = vmatprep.subr.bf16.mxu0 %v929
    %2338 = vmatpush1.bf16.msra.mxu0 %v928
    %2339 = vmatprep.subr.bf16.mxu0 %v937
    %2340 = vmatpush1.bf16.msra.mxu0 %v936
    %2341 = vmatprep.subr.bf16.mxu0 %v945
    %2342 = vmatpush1.bf16.msra.mxu0 %v944
    %2343 = vmatprep.subr.bf16.mxu0 %v953
    %2344 = vmatpush1.bf16.msra.mxu0 %v952
    %2345 = vmatprep.subr.bf16.mxu0 %v961
    %2346 = vmatpush1.bf16.msra.mxu0 %v960
    %2347 = vmatprep.subr.bf16.mxu0 %v969
    %2348 = vmatpush1.bf16.msra.mxu0 %v968
    %2349 = vmatprep.subr.bf16.mxu0 %v977
    %2350 = vmatpush1.bf16.msra.mxu0 %v976
    %2351 = vmatprep.subr.bf16.mxu0 %v985
    %2352 = vmatpush1.bf16.msra.mxu0 %v984
    %2353 = vmatprep.mubr.bf16.mxu0 %v2304
    %2354 = vmatmul.mubr.bf16.gmra.mrb[0].mxu0 %v2303
    %v2355 = vpop.f32.mrb[0].mxu0
    %v2356 = vadd.f32 %v2305, %v2355
    %v2357 = vpop.f32.mrb[0].mxu0
    %v2358 = vadd.f32 %v2306, %v2357
    %v2359 = vpop.f32.mrb[0].mxu0
    %v2360 = vpop.f32.mrb[0].mxu0
    %2361 = vdwg.mxu0
    %2362 = vmatprep.subr.bf16.mxu0 %v867
    %2363 = vmatpush1.bf16.msra.mxu0 %v866
    %2364 = vmatprep.subr.bf16.mxu0 %v875
    %2365 = vmatpush1.bf16.msra.mxu0 %v874
    %2366 = vmatprep.subr.bf16.mxu0 %v883
    %2367 = vmatpush1.bf16.msra.mxu0 %v882
    %2368 = vmatprep.subr.bf16.mxu0 %v891
    %2369 = vmatpush1.bf16.msra.mxu0 %v890
    %2370 = vmatprep.subr.bf16.mxu0 %v899
    %2371 = vmatpush1.bf16.msra.mxu0 %v898
    %2372 = vmatprep.subr.bf16.mxu0 %v907
    %2373 = vmatpush1.bf16.msra.mxu0 %v906
    %2374 = vmatprep.subr.bf16.mxu0 %v915
    %2375 = vmatpush1.bf16.msra.mxu0 %v914
    %2376 = vmatprep.subr.bf16.mxu0 %v923
    %2377 = vmatpush1.bf16.msra.mxu0 %v922
    %2378 = vmatprep.subr.bf16.mxu0 %v931
    %2379 = vmatpush1.bf16.msra.mxu0 %v930
    %2380 = vmatprep.subr.bf16.mxu0 %v939
    %2381 = vmatpush1.bf16.msra.mxu0 %v938
    %2382 = vmatprep.subr.bf16.mxu0 %v947
    %2383 = vmatpush1.bf16.msra.mxu0 %v946
    %2384 = vmatprep.subr.bf16.mxu0 %v955
    %2385 = vmatpush1.bf16.msra.mxu0 %v954
    %2386 = vmatprep.subr.bf16.mxu0 %v963
    %2387 = vmatpush1.bf16.msra.mxu0 %v962
    %2388 = vmatprep.subr.bf16.mxu0 %v971
    %2389 = vmatpush1.bf16.msra.mxu0 %v970
    %2390 = vmatprep.subr.bf16.mxu0 %v979
    %2391 = vmatpush1.bf16.msra.mxu0 %v978
    %2392 = vmatprep.subr.bf16.mxu0 %v987
    %2393 = vmatpush1.bf16.msra.mxu0 %v986
    %2394 = vmatprep.mubr.bf16.mxu0 %v2304
    %2395 = vmatmul.mubr.bf16.gmra.mrb[0].mxu0 %v2303
    %v2396 = vpop.f32.mrb[0].mxu0
    %v2397 = vadd.f32 %v2307, %v2396
    %v2398 = vpop.f32.mrb[0].mxu0
    %v2399 = vadd.f32 %v2308, %v2398
    %v2400 = vpop.f32.mrb[0].mxu0
    %v2401 = vpop.f32.mrb[0].mxu0
    %2402 = vdwg.mxu0
    %2403 = vmatprep.subr.bf16.mxu0 %v869
    %2404 = vmatpush1.bf16.msra.mxu0 %v868
    %2405 = vmatprep.subr.bf16.mxu0 %v877
    %2406 = vmatpush1.bf16.msra.mxu0 %v876
    %2407 = vmatprep.subr.bf16.mxu0 %v885
    %2408 = vmatpush1.bf16.msra.mxu0 %v884
    %2409 = vmatprep.subr.bf16.mxu0 %v893
    %2410 = vmatpush1.bf16.msra.mxu0 %v892
    %2411 = vmatprep.subr.bf16.mxu0 %v901
    %2412 = vmatpush1.bf16.msra.mxu0 %v900
    %2413 = vmatprep.subr.bf16.mxu0 %v909
    %2414 = vmatpush1.bf16.msra.mxu0 %v908
    %2415 = vmatprep.subr.bf16.mxu0 %v917
    %2416 = vmatpush1.bf16.msra.mxu0 %v916
    %2417 = vmatprep.subr.bf16.mxu0 %v925
    %2418 = vmatpush1.bf16.msra.mxu0 %v924
    %2419 = vmatprep.subr.bf16.mxu0 %v933
    %2420 = vmatpush1.bf16.msra.mxu0 %v932
    %2421 = vmatprep.subr.bf16.mxu0 %v941
    %2422 = vmatpush1.bf16.msra.mxu0 %v940
    %2423 = vmatprep.subr.bf16.mxu0 %v949
    %2424 = vmatpush1.bf16.msra.mxu0 %v948
    %2425 = vmatprep.subr.bf16.mxu0 %v957
    %2426 = vmatpush1.bf16.msra.mxu0 %v956
    %2427 = vmatprep.subr.bf16.mxu0 %v965
    %2428 = vmatpush1.bf16.msra.mxu0 %v964
    %2429 = vmatprep.subr.bf16.mxu0 %v973
    %2430 = vmatpush1.bf16.msra.mxu0 %v972
    %2431 = vmatprep.subr.bf16.mxu0 %v981
    %2432 = vmatpush1.bf16.msra.mxu0 %v980
    %2433 = vmatprep.subr.bf16.mxu0 %v989
    %2434 = vmatpush1.bf16.msra.mxu0 %v988
    %2435 = vmatprep.mubr.bf16.mxu0 %v2304
    %2436 = vmatmul.mubr.bf16.gmra.mrb[0].mxu0 %v2303
    %v2437 = vpop.f32.mrb[0].mxu0
    %v2438 = vadd.f32 %v2309, %v2437
    %v2439 = vpop.f32.mrb[0].mxu0
    %v2440 = vadd.f32 %v2310, %v2439
    %v2441 = vpop.f32.mrb[0].mxu0
    %v2442 = vpop.f32.mrb[0].mxu0
    %2443 = vdwg.mxu0
    %2444 = vmatprep.subr.bf16.mxu0 %v871
    %2445 = vmatpush1.bf16.msra.mxu0 %v870
    %2446 = vmatprep.subr.bf16.mxu0 %v879
    %2447 = vmatpush1.bf16.msra.mxu0 %v878
    %2448 = vmatprep.subr.bf16.mxu0 %v887
    %2449 = vmatpush1.bf16.msra.mxu0 %v886
    %2450 = vmatprep.subr.bf16.mxu0 %v895
    %2451 = vmatpush1.bf16.msra.mxu0 %v894
    %2452 = vmatprep.subr.bf16.mxu0 %v903
    %2453 = vmatpush1.bf16.msra.mxu0 %v902
    %2454 = vmatprep.subr.bf16.mxu0 %v911
    %2455 = vmatpush1.bf16.msra.mxu0 %v910
    %2456 = vmatprep.subr.bf16.mxu0 %v919
    %2457 = vmatpush1.bf16.msra.mxu0 %v918
    %2458 = vmatprep.subr.bf16.mxu0 %v927
    %2459 = vmatpush1.bf16.msra.mxu0 %v926
    %2460 = vmatprep.subr.bf16.mxu0 %v935
    %2461 = vmatpush1.bf16.msra.mxu0 %v934
    %2462 = vmatprep.subr.bf16.mxu0 %v943
    %2463 = vmatpush1.bf16.msra.mxu0 %v942
    %2464 = vmatprep.subr.bf16.mxu0 %v951
    %2465 = vmatpush1.bf16.msra.mxu0 %v950
    %2466 = vmatprep.subr.bf16.mxu0 %v959
    %2467 = vmatpush1.bf16.msra.mxu0 %v958
    %2468 = vmatprep.subr.bf16.mxu0 %v967
    %2469 = vmatpush1.bf16.msra.mxu0 %v966
    %2470 = vmatprep.subr.bf16.mxu0 %v975
    %2471 = vmatpush1.bf16.msra.mxu0 %v974
    %2472 = vmatprep.subr.bf16.mxu0 %v983
    %2473 = vmatpush1.bf16.msra.mxu0 %v982
    %2474 = vmatprep.subr.bf16.mxu0 %v991
    %2475 = vmatpush1.bf16.msra.mxu0 %v990
    %2476 = vmatprep.mubr.bf16.mxu0 %v2304
    %2477 = vmatmul.mubr.bf16.gmra.mrb[0].mxu0 %v2303
    %v2478 = vpop.f32.mrb[0].mxu0
    %v2479 = vadd.f32 %v2311, %v2478
    %v2480 = vpop.f32.mrb[0].mxu0
    %v2481 = vadd.f32 %v2312, %v2480
    %v2482 = vpop.f32.mrb[0].mxu0
    %v2483 = vpop.f32.mrb[0].mxu0
    %2484 = vdwg.mxu0
    %v2485 = vxor.u32 %v2356, 2147483648
    %v2486 = vxor.u32 %v2358, 2147483648
    %v2487 = vxor.u32 %v2397, 2147483648
    %v2488 = vxor.u32 %v2399, 2147483648
    %v2489 = vxor.u32 %v2438, 2147483648
    %v2490 = vxor.u32 %v2440, 2147483648
    %v2491 = vmul.f32 %v2485, 1.442695
    %v2492 = vpow.pop %v2491
    %v2493 = vmul.f32 %v2486, 1.442695
    %v2494 = vpow.pop %v2493
    %v2495 = vmul.f32 %v2487, 1.442695
    %v2496 = vpow.pop %v2495
    %v2497 = vmul.f32 %v2488, 1.442695
    %v2498 = vpow.pop %v2497
    %v2499 = vmul.f32 %v2489, 1.442695
    %v2500 = vpow.pop %v2499
    %v2501 = vmul.f32 %v2490, 1.442695
    %v2502 = vpow.pop %v2501
    %v2503 = vadd.f32 %v2492, 1.0
    %v2504 = vadd.f32 %v2494, 1.0
    %v2505 = vadd.f32 %v2496, 1.0
    %v2506 = vadd.f32 %v2498, 1.0
    %v2507 = vadd.f32 %v2500, 1.0
    %v2508 = vadd.f32 %v2502, 1.0
    %v2509 = vrcp.pop %v2503
    %v2510 = vmul.f32 1.0, %v2509
    %v2511 = vrcp.pop %v2504
    %v2512 = vmul.f32 1.0, %v2511
    %v2513 = vrcp.pop %v2505
    %v2514 = vmul.f32 1.0, %v2513
    %v2515 = vrcp.pop %v2506
    %v2516 = vmul.f32 1.0, %v2515
    %v2517 = vrcp.pop %v2507
    %v2518 = vmul.f32 1.0, %v2517
    %v2519 = vrcp.pop %v2508
    %v2520 = vmul.f32 1.0, %v2519
    %v2521 = vtanh.pop %v2479
    %v2522 = vtanh.pop %v2481
    %v2523 = vmul.f32 %v2514, %v2290
    %v2524 = vmul.f32 %v2516, %v2291
    %v2525 = vmul.f32 %v2510, %v2521
    %v2526 = vmul.f32 %v2512, %v2522
    %v2527 = vadd.f32 %v2523, %v2525
    %v2528 = vadd.f32 %v2524, %v2526
    %v2529 = vtanh.pop %v2527
    %v2530 = vtanh.pop %v2528
    %v2531 = vmul.f32 %v2518, %v2529
    %v2532 = vmul.f32 %v2520, %v2530
    %vm2533 = vcmp.eq.s32.totalorder %v461, 5
    %v2534 = vsel %vm2533, 1, 0
    %2535 = vset.pattern.permute.xlu0 0
    %2536 = vperm.xlu0 %2535, %v2534
    %v2537 = vpop.permute.xlu0 %2536
    %vm2538 = vcmp.eq.s32.totalorder %v2537, 1
    %v2539 = vsel %vm2538, %v2532, %v2302
    %v2540 = vpack.c.bf16 %v2531, %v2531
    %v2541 = vpack.c.bf16 %v2532, %v2532
    %v2542 = vrot.slane %v200, 6
    %v2543 = vrot.slane %v202, 6
    %v2544 = vrot.slane %v243, 6
    %v2545 = vrot.slane %v245, 6
    %v2546 = vrot.slane %v286, 6
    %v2547 = vrot.slane %v288, 6
    %v2548 = vrot.slane %v329, 6
    %v2549 = vrot.slane %v331, 6
    %2558 = vmatprep.subr.bf16.mxu0 %v865
    %2559 = vmatpush1.bf16.msra.mxu0 %v864
    %2560 = vmatprep.subr.bf16.mxu0 %v873
    %2561 = vmatpush1.bf16.msra.mxu0 %v872
    %2562 = vmatprep.subr.bf16.mxu0 %v881
    %2563 = vmatpush1.bf16.msra.mxu0 %v880
    %2564 = vmatprep.subr.bf16.mxu0 %v889
    %2565 = vmatpush1.bf16.msra.mxu0 %v888
    %2566 = vmatprep.subr.bf16.mxu0 %v897
    %2567 = vmatpush1.bf16.msra.mxu0 %v896
    %2568 = vmatprep.subr.bf16.mxu0 %v905
    %2569 = vmatpush1.bf16.msra.mxu0 %v904
    %2570 = vmatprep.subr.bf16.mxu0 %v913
    %2571 = vmatpush1.bf16.msra.mxu0 %v912
    %2572 = vmatprep.subr.bf16.mxu0 %v921
    %2573 = vmatpush1.bf16.msra.mxu0 %v920
    %2574 = vmatprep.subr.bf16.mxu0 %v929
    %2575 = vmatpush1.bf16.msra.mxu0 %v928
    %2576 = vmatprep.subr.bf16.mxu0 %v937
    %2577 = vmatpush1.bf16.msra.mxu0 %v936
    %2578 = vmatprep.subr.bf16.mxu0 %v945
    %2579 = vmatpush1.bf16.msra.mxu0 %v944
    %2580 = vmatprep.subr.bf16.mxu0 %v953
    %2581 = vmatpush1.bf16.msra.mxu0 %v952
    %2582 = vmatprep.subr.bf16.mxu0 %v961
    %2583 = vmatpush1.bf16.msra.mxu0 %v960
    %2584 = vmatprep.subr.bf16.mxu0 %v969
    %2585 = vmatpush1.bf16.msra.mxu0 %v968
    %2586 = vmatprep.subr.bf16.mxu0 %v977
    %2587 = vmatpush1.bf16.msra.mxu0 %v976
    %2588 = vmatprep.subr.bf16.mxu0 %v985
    %2589 = vmatpush1.bf16.msra.mxu0 %v984
    %2590 = vmatprep.mubr.bf16.mxu0 %v2541
    %2591 = vmatmul.mubr.bf16.gmra.mrb[0].mxu0 %v2540
    %v2592 = vpop.f32.mrb[0].mxu0
    %v2593 = vadd.f32 %v2542, %v2592
    %v2594 = vpop.f32.mrb[0].mxu0
    %v2595 = vadd.f32 %v2543, %v2594
    %v2596 = vpop.f32.mrb[0].mxu0
    %v2597 = vpop.f32.mrb[0].mxu0
    %2598 = vdwg.mxu0
    %2599 = vmatprep.subr.bf16.mxu0 %v867
    %2600 = vmatpush1.bf16.msra.mxu0 %v866
    %2601 = vmatprep.subr.bf16.mxu0 %v875
    %2602 = vmatpush1.bf16.msra.mxu0 %v874
    %2603 = vmatprep.subr.bf16.mxu0 %v883
    %2604 = vmatpush1.bf16.msra.mxu0 %v882
    %2605 = vmatprep.subr.bf16.mxu0 %v891
    %2606 = vmatpush1.bf16.msra.mxu0 %v890
    %2607 = vmatprep.subr.bf16.mxu0 %v899
    %2608 = vmatpush1.bf16.msra.mxu0 %v898
    %2609 = vmatprep.subr.bf16.mxu0 %v907
    %2610 = vmatpush1.bf16.msra.mxu0 %v906
    %2611 = vmatprep.subr.bf16.mxu0 %v915
    %2612 = vmatpush1.bf16.msra.mxu0 %v914
    %2613 = vmatprep.subr.bf16.mxu0 %v923
    %2614 = vmatpush1.bf16.msra.mxu0 %v922
    %2615 = vmatprep.subr.bf16.mxu0 %v931
    %2616 = vmatpush1.bf16.msra.mxu0 %v930
    %2617 = vmatprep.subr.bf16.mxu0 %v939
    %2618 = vmatpush1.bf16.msra.mxu0 %v938
    %2619 = vmatprep.subr.bf16.mxu0 %v947
    %2620 = vmatpush1.bf16.msra.mxu0 %v946
    %2621 = vmatprep.subr.bf16.mxu0 %v955
    %2622 = vmatpush1.bf16.msra.mxu0 %v954
    %2623 = vmatprep.subr.bf16.mxu0 %v963
    %2624 = vmatpush1.bf16.msra.mxu0 %v962
    %2625 = vmatprep.subr.bf16.mxu0 %v971
    %2626 = vmatpush1.bf16.msra.mxu0 %v970
    %2627 = vmatprep.subr.bf16.mxu0 %v979
    %2628 = vmatpush1.bf16.msra.mxu0 %v978
    %2629 = vmatprep.subr.bf16.mxu0 %v987
    %2630 = vmatpush1.bf16.msra.mxu0 %v986
    %2631 = vmatprep.mubr.bf16.mxu0 %v2541
    %2632 = vmatmul.mubr.bf16.gmra.mrb[0].mxu0 %v2540
    %v2633 = vpop.f32.mrb[0].mxu0
    %v2634 = vadd.f32 %v2544, %v2633
    %v2635 = vpop.f32.mrb[0].mxu0
    %v2636 = vadd.f32 %v2545, %v2635
    %v2637 = vpop.f32.mrb[0].mxu0
    %v2638 = vpop.f32.mrb[0].mxu0
    %2639 = vdwg.mxu0
    %2640 = vmatprep.subr.bf16.mxu0 %v869
    %2641 = vmatpush1.bf16.msra.mxu0 %v868
    %2642 = vmatprep.subr.bf16.mxu0 %v877
    %2643 = vmatpush1.bf16.msra.mxu0 %v876
    %2644 = vmatprep.subr.bf16.mxu0 %v885
    %2645 = vmatpush1.bf16.msra.mxu0 %v884
    %2646 = vmatprep.subr.bf16.mxu0 %v893
    %2647 = vmatpush1.bf16.msra.mxu0 %v892
    %2648 = vmatprep.subr.bf16.mxu0 %v901
    %2649 = vmatpush1.bf16.msra.mxu0 %v900
    %2650 = vmatprep.subr.bf16.mxu0 %v909
    %2651 = vmatpush1.bf16.msra.mxu0 %v908
    %2652 = vmatprep.subr.bf16.mxu0 %v917
    %2653 = vmatpush1.bf16.msra.mxu0 %v916
    %2654 = vmatprep.subr.bf16.mxu0 %v925
    %2655 = vmatpush1.bf16.msra.mxu0 %v924
    %2656 = vmatprep.subr.bf16.mxu0 %v933
    %2657 = vmatpush1.bf16.msra.mxu0 %v932
    %2658 = vmatprep.subr.bf16.mxu0 %v941
    %2659 = vmatpush1.bf16.msra.mxu0 %v940
    %2660 = vmatprep.subr.bf16.mxu0 %v949
    %2661 = vmatpush1.bf16.msra.mxu0 %v948
    %2662 = vmatprep.subr.bf16.mxu0 %v957
    %2663 = vmatpush1.bf16.msra.mxu0 %v956
    %2664 = vmatprep.subr.bf16.mxu0 %v965
    %2665 = vmatpush1.bf16.msra.mxu0 %v964
    %2666 = vmatprep.subr.bf16.mxu0 %v973
    %2667 = vmatpush1.bf16.msra.mxu0 %v972
    %2668 = vmatprep.subr.bf16.mxu0 %v981
    %2669 = vmatpush1.bf16.msra.mxu0 %v980
    %2670 = vmatprep.subr.bf16.mxu0 %v989
    %2671 = vmatpush1.bf16.msra.mxu0 %v988
    %2672 = vmatprep.mubr.bf16.mxu0 %v2541
    %2673 = vmatmul.mubr.bf16.gmra.mrb[0].mxu0 %v2540
    %v2674 = vpop.f32.mrb[0].mxu0
    %v2675 = vadd.f32 %v2546, %v2674
    %v2676 = vpop.f32.mrb[0].mxu0
    %v2677 = vadd.f32 %v2547, %v2676
    %v2678 = vpop.f32.mrb[0].mxu0
    %v2679 = vpop.f32.mrb[0].mxu0
    %2680 = vdwg.mxu0
    %2681 = vmatprep.subr.bf16.mxu0 %v871
    %2682 = vmatpush1.bf16.msra.mxu0 %v870
    %2683 = vmatprep.subr.bf16.mxu0 %v879
    %2684 = vmatpush1.bf16.msra.mxu0 %v878
    %2685 = vmatprep.subr.bf16.mxu0 %v887
    %2686 = vmatpush1.bf16.msra.mxu0 %v886
    %2687 = vmatprep.subr.bf16.mxu0 %v895
    %2688 = vmatpush1.bf16.msra.mxu0 %v894
    %2689 = vmatprep.subr.bf16.mxu0 %v903
    %2690 = vmatpush1.bf16.msra.mxu0 %v902
    %2691 = vmatprep.subr.bf16.mxu0 %v911
    %2692 = vmatpush1.bf16.msra.mxu0 %v910
    %2693 = vmatprep.subr.bf16.mxu0 %v919
    %2694 = vmatpush1.bf16.msra.mxu0 %v918
    %2695 = vmatprep.subr.bf16.mxu0 %v927
    %2696 = vmatpush1.bf16.msra.mxu0 %v926
    %2697 = vmatprep.subr.bf16.mxu0 %v935
    %2698 = vmatpush1.bf16.msra.mxu0 %v934
    %2699 = vmatprep.subr.bf16.mxu0 %v943
    %2700 = vmatpush1.bf16.msra.mxu0 %v942
    %2701 = vmatprep.subr.bf16.mxu0 %v951
    %2702 = vmatpush1.bf16.msra.mxu0 %v950
    %2703 = vmatprep.subr.bf16.mxu0 %v959
    %2704 = vmatpush1.bf16.msra.mxu0 %v958
    %2705 = vmatprep.subr.bf16.mxu0 %v967
    %2706 = vmatpush1.bf16.msra.mxu0 %v966
    %2707 = vmatprep.subr.bf16.mxu0 %v975
    %2708 = vmatpush1.bf16.msra.mxu0 %v974
    %2709 = vmatprep.subr.bf16.mxu0 %v983
    %2710 = vmatpush1.bf16.msra.mxu0 %v982
    %2711 = vmatprep.subr.bf16.mxu0 %v991
    %2712 = vmatpush1.bf16.msra.mxu0 %v990
    %2713 = vmatprep.mubr.bf16.mxu0 %v2541
    %2714 = vmatmul.mubr.bf16.gmra.mrb[0].mxu0 %v2540
    %v2715 = vpop.f32.mrb[0].mxu0
    %v2716 = vadd.f32 %v2548, %v2715
    %v2717 = vpop.f32.mrb[0].mxu0
    %v2718 = vadd.f32 %v2549, %v2717
    %v2719 = vpop.f32.mrb[0].mxu0
    %v2720 = vpop.f32.mrb[0].mxu0
    %2721 = vdwg.mxu0
    %v2722 = vxor.u32 %v2593, 2147483648
    %v2723 = vxor.u32 %v2595, 2147483648
    %v2724 = vxor.u32 %v2634, 2147483648
    %v2725 = vxor.u32 %v2636, 2147483648
    %v2726 = vxor.u32 %v2675, 2147483648
    %v2727 = vxor.u32 %v2677, 2147483648
    %v2728 = vmul.f32 %v2722, 1.442695
    %v2729 = vpow.pop %v2728
    %v2730 = vmul.f32 %v2723, 1.442695
    %v2731 = vpow.pop %v2730
    %v2732 = vmul.f32 %v2724, 1.442695
    %v2733 = vpow.pop %v2732
    %v2734 = vmul.f32 %v2725, 1.442695
    %v2735 = vpow.pop %v2734
    %v2736 = vmul.f32 %v2726, 1.442695
    %v2737 = vpow.pop %v2736
    %v2738 = vmul.f32 %v2727, 1.442695
    %v2739 = vpow.pop %v2738
    %v2740 = vadd.f32 %v2729, 1.0
    %v2741 = vadd.f32 %v2731, 1.0
    %v2742 = vadd.f32 %v2733, 1.0
    %v2743 = vadd.f32 %v2735, 1.0
    %v2744 = vadd.f32 %v2737, 1.0
    %v2745 = vadd.f32 %v2739, 1.0
    %v2746 = vrcp.pop %v2740
    %v2747 = vmul.f32 1.0, %v2746
    %v2748 = vrcp.pop %v2741
    %v2749 = vmul.f32 1.0, %v2748
    %v2750 = vrcp.pop %v2742
    %v2751 = vmul.f32 1.0, %v2750
    %v2752 = vrcp.pop %v2743
    %v2753 = vmul.f32 1.0, %v2752
    %v2754 = vrcp.pop %v2744
    %v2755 = vmul.f32 1.0, %v2754
    %v2756 = vrcp.pop %v2745
    %v2757 = vmul.f32 1.0, %v2756
    %v2758 = vtanh.pop %v2716
    %v2759 = vtanh.pop %v2718
    %v2760 = vmul.f32 %v2751, %v2527
    %v2761 = vmul.f32 %v2753, %v2528
    %v2762 = vmul.f32 %v2747, %v2758
    %v2763 = vmul.f32 %v2749, %v2759
    %v2764 = vadd.f32 %v2760, %v2762
    %v2765 = vadd.f32 %v2761, %v2763
    %v2766 = vtanh.pop %v2764
    %v2767 = vtanh.pop %v2765
    %v2768 = vmul.f32 %v2755, %v2766
    %v2769 = vmul.f32 %v2757, %v2767
    %vm2770 = vcmp.eq.s32.totalorder %v461, 6
    %v2771 = vsel %vm2770, 1, 0
    %2772 = vset.pattern.permute.xlu0 0
    %2773 = vperm.xlu0 %2772, %v2771
    %v2774 = vpop.permute.xlu0 %2773
    %vm2775 = vcmp.eq.s32.totalorder %v2774, 1
    %v2776 = vsel %vm2775, %v2769, %v2539
    %v2777 = vpack.c.bf16 %v2768, %v2768
    %v2778 = vpack.c.bf16 %v2769, %v2769
    %2779 = vmatprep.subr.bf16.mxu0 %v865
    %2780 = vmatpush1.bf16.msra.mxu0 %v864
    %2781 = vmatprep.subr.bf16.mxu0 %v873
    %2782 = vmatpush1.bf16.msra.mxu0 %v872
    %2783 = vmatprep.subr.bf16.mxu0 %v881
    %2784 = vmatpush1.bf16.msra.mxu0 %v880
    %2785 = vmatprep.subr.bf16.mxu0 %v889
    %2786 = vmatpush1.bf16.msra.mxu0 %v888
    %2787 = vmatprep.subr.bf16.mxu0 %v897
    %2788 = vmatpush1.bf16.msra.mxu0 %v896
    %2789 = vmatprep.subr.bf16.mxu0 %v905
    %2790 = vmatpush1.bf16.msra.mxu0 %v904
    %2791 = vmatprep.subr.bf16.mxu0 %v913
    %2792 = vmatpush1.bf16.msra.mxu0 %v912
    %2793 = vmatprep.subr.bf16.mxu0 %v921
    %2794 = vmatpush1.bf16.msra.mxu0 %v920
    %2795 = vmatprep.subr.bf16.mxu0 %v929
    %2796 = vmatpush1.bf16.msra.mxu0 %v928
    %2797 = vmatprep.subr.bf16.mxu0 %v937
    %2798 = vmatpush1.bf16.msra.mxu0 %v936
    %2799 = vmatprep.subr.bf16.mxu0 %v945
    %2800 = vmatpush1.bf16.msra.mxu0 %v944
    %2801 = vmatprep.subr.bf16.mxu0 %v953
    %2802 = vmatpush1.bf16.msra.mxu0 %v952
    %2803 = vmatprep.subr.bf16.mxu0 %v961
    %2804 = vmatpush1.bf16.msra.mxu0 %v960
    %2805 = vmatprep.subr.bf16.mxu0 %v969
    %2806 = vmatpush1.bf16.msra.mxu0 %v968
    %2807 = vmatprep.subr.bf16.mxu0 %v977
    %2808 = vmatpush1.bf16.msra.mxu0 %v976
    %2809 = vmatprep.subr.bf16.mxu0 %v985
    %2810 = vmatpush1.bf16.msra.mxu0 %v984
    %2811 = vmatprep.mubr.bf16.mxu0 %v2778
    %2812 = vmatmul.mubr.bf16.gmra.mrb[0].mxu0 %v2777
    %v2813 = vpop.f32.mrb[0].mxu0
    %v2814 = vpop.f32.mrb[0].mxu0
    %v2815 = vadd.f32 %v2543, %v2814
    %v2816 = vpop.f32.mrb[0].mxu0
    %v2817 = vpop.f32.mrb[0].mxu0
    %2818 = vdwg.mxu0
    %2819 = vmatprep.subr.bf16.mxu0 %v867
    %2820 = vmatpush1.bf16.msra.mxu0 %v866
    %2821 = vmatprep.subr.bf16.mxu0 %v875
    %2822 = vmatpush1.bf16.msra.mxu0 %v874
    %2823 = vmatprep.subr.bf16.mxu0 %v883
    %2824 = vmatpush1.bf16.msra.mxu0 %v882
    %2825 = vmatprep.subr.bf16.mxu0 %v891
    %2826 = vmatpush1.bf16.msra.mxu0 %v890
    %2827 = vmatprep.subr.bf16.mxu0 %v899
    %2828 = vmatpush1.bf16.msra.mxu0 %v898
    %2829 = vmatprep.subr.bf16.mxu0 %v907
    %2830 = vmatpush1.bf16.msra.mxu0 %v906
    %2831 = vmatprep.subr.bf16.mxu0 %v915
    %2832 = vmatpush1.bf16.msra.mxu0 %v914
    %2833 = vmatprep.subr.bf16.mxu0 %v923
    %2834 = vmatpush1.bf16.msra.mxu0 %v922
    %2835 = vmatprep.subr.bf16.mxu0 %v931
    %2836 = vmatpush1.bf16.msra.mxu0 %v930
    %2837 = vmatprep.subr.bf16.mxu0 %v939
    %2838 = vmatpush1.bf16.msra.mxu0 %v938
    %2839 = vmatprep.subr.bf16.mxu0 %v947
    %2840 = vmatpush1.bf16.msra.mxu0 %v946
    %2841 = vmatprep.subr.bf16.mxu0 %v955
    %2842 = vmatpush1.bf16.msra.mxu0 %v954
    %2843 = vmatprep.subr.bf16.mxu0 %v963
    %2844 = vmatpush1.bf16.msra.mxu0 %v962
    %2845 = vmatprep.subr.bf16.mxu0 %v971
    %2846 = vmatpush1.bf16.msra.mxu0 %v970
    %2847 = vmatprep.subr.bf16.mxu0 %v979
    %2848 = vmatpush1.bf16.msra.mxu0 %v978
    %2849 = vmatprep.subr.bf16.mxu0 %v987
    %2850 = vmatpush1.bf16.msra.mxu0 %v986
    %2851 = vmatprep.mubr.bf16.mxu0 %v2778
    %2852 = vmatmul.mubr.bf16.gmra.mrb[0].mxu0 %v2777
    %v2853 = vpop.f32.mrb[0].mxu0
    %v2854 = vpop.f32.mrb[0].mxu0
    %v2855 = vadd.f32 %v2545, %v2854
    %v2856 = vpop.f32.mrb[0].mxu0
    %v2857 = vpop.f32.mrb[0].mxu0
    %2858 = vdwg.mxu0
    %2859 = vmatprep.subr.bf16.mxu0 %v869
    %2860 = vmatpush1.bf16.msra.mxu0 %v868
    %2861 = vmatprep.subr.bf16.mxu0 %v877
    %2862 = vmatpush1.bf16.msra.mxu0 %v876
    %2863 = vmatprep.subr.bf16.mxu0 %v885
    %2864 = vmatpush1.bf16.msra.mxu0 %v884
    %2865 = vmatprep.subr.bf16.mxu0 %v893
    %2866 = vmatpush1.bf16.msra.mxu0 %v892
    %2867 = vmatprep.subr.bf16.mxu0 %v901
    %2868 = vmatpush1.bf16.msra.mxu0 %v900
    %2869 = vmatprep.subr.bf16.mxu0 %v909
    %2870 = vmatpush1.bf16.msra.mxu0 %v908
    %2871 = vmatprep.subr.bf16.mxu0 %v917
    %2872 = vmatpush1.bf16.msra.mxu0 %v916
    %2873 = vmatprep.subr.bf16.mxu0 %v925
    %2874 = vmatpush1.bf16.msra.mxu0 %v924
    %2875 = vmatprep.subr.bf16.mxu0 %v933
    %2876 = vmatpush1.bf16.msra.mxu0 %v932
    %2877 = vmatprep.subr.bf16.mxu0 %v941
    %2878 = vmatpush1.bf16.msra.mxu0 %v940
    %2879 = vmatprep.subr.bf16.mxu0 %v949
    %2880 = vmatpush1.bf16.msra.mxu0 %v948
    %2881 = vmatprep.subr.bf16.mxu0 %v957
    %2882 = vmatpush1.bf16.msra.mxu0 %v956
    %2883 = vmatprep.subr.bf16.mxu0 %v965
    %2884 = vmatpush1.bf16.msra.mxu0 %v964
    %2885 = vmatprep.subr.bf16.mxu0 %v973
    %2886 = vmatpush1.bf16.msra.mxu0 %v972
    %2887 = vmatprep.subr.bf16.mxu0 %v981
    %2888 = vmatpush1.bf16.msra.mxu0 %v980
    %2889 = vmatprep.subr.bf16.mxu0 %v989
    %2890 = vmatpush1.bf16.msra.mxu0 %v988
    %2891 = vmatprep.mubr.bf16.mxu0 %v2778
    %2892 = vmatmul.mubr.bf16.gmra.mrb[0].mxu0 %v2777
    %v2893 = vpop.f32.mrb[0].mxu0
    %v2894 = vpop.f32.mrb[0].mxu0
    %v2895 = vadd.f32 %v2547, %v2894
    %v2896 = vpop.f32.mrb[0].mxu0
    %v2897 = vpop.f32.mrb[0].mxu0
    %2898 = vdwg.mxu0
    %2899 = vmatprep.subr.bf16.mxu0 %v871
    %2900 = vmatpush1.bf16.msra.mxu0 %v870
    %2901 = vmatprep.subr.bf16.mxu0 %v879
    %2902 = vmatpush1.bf16.msra.mxu0 %v878
    %2903 = vmatprep.subr.bf16.mxu0 %v887
    %2904 = vmatpush1.bf16.msra.mxu0 %v886
    %2905 = vmatprep.subr.bf16.mxu0 %v895
    %2906 = vmatpush1.bf16.msra.mxu0 %v894
    %2907 = vmatprep.subr.bf16.mxu0 %v903
    %2908 = vmatpush1.bf16.msra.mxu0 %v902
    %2909 = vmatprep.subr.bf16.mxu0 %v911
    %2910 = vmatpush1.bf16.msra.mxu0 %v910
    %2911 = vmatprep.subr.bf16.mxu0 %v919
    %2912 = vmatpush1.bf16.msra.mxu0 %v918
    %2913 = vmatprep.subr.bf16.mxu0 %v927
    %2914 = vmatpush1.bf16.msra.mxu0 %v926
    %2915 = vmatprep.subr.bf16.mxu0 %v935
    %2916 = vmatpush1.bf16.msra.mxu0 %v934
    %2917 = vmatprep.subr.bf16.mxu0 %v943
    %2918 = vmatpush1.bf16.msra.mxu0 %v942
    %2919 = vmatprep.subr.bf16.mxu0 %v951
    %2920 = vmatpush1.bf16.msra.mxu0 %v950
    %2921 = vmatprep.subr.bf16.mxu0 %v959
    %2922 = vmatpush1.bf16.msra.mxu0 %v958
    %2923 = vmatprep.subr.bf16.mxu0 %v967
    %2924 = vmatpush1.bf16.msra.mxu0 %v966
    %2925 = vmatprep.subr.bf16.mxu0 %v975
    %2926 = vmatpush1.bf16.msra.mxu0 %v974
    %2927 = vmatprep.subr.bf16.mxu0 %v983
    %2928 = vmatpush1.bf16.msra.mxu0 %v982
    %2929 = vmatprep.subr.bf16.mxu0 %v991
    %2930 = vmatpush1.bf16.msra.mxu0 %v990
    %2931 = vmatprep.mubr.bf16.mxu0 %v2778
    %2932 = vmatmul.mubr.bf16.gmra.mrb[0].mxu0 %v2777
    %v2933 = vpop.f32.mrb[0].mxu0
    %v2934 = vpop.f32.mrb[0].mxu0
    %v2935 = vadd.f32 %v2549, %v2934
    %v2936 = vpop.f32.mrb[0].mxu0
    %v2937 = vpop.f32.mrb[0].mxu0
    %2938 = vdwg.mxu0
    %v2939 = vxor.u32 %v2815, 2147483648
    %v2940 = vxor.u32 %v2855, 2147483648
    %v2941 = vxor.u32 %v2895, 2147483648
    %v2942 = vmul.f32 %v2939, 1.442695
    %v2943 = vpow.pop %v2942
    %v2944 = vmul.f32 %v2940, 1.442695
    %v2945 = vpow.pop %v2944
    %v2946 = vmul.f32 %v2941, 1.442695
    %v2947 = vpow.pop %v2946
    %v2948 = vadd.f32 %v2943, 1.0
    %v2949 = vadd.f32 %v2945, 1.0
    %v2950 = vadd.f32 %v2947, 1.0
    %v2951 = vrcp.pop %v2948
    %v2952 = vmul.f32 1.0, %v2951
    %v2953 = vrcp.pop %v2949
    %v2954 = vmul.f32 1.0, %v2953
    %v2955 = vrcp.pop %v2950
    %v2956 = vmul.f32 1.0, %v2955
    %v2957 = vtanh.pop %v2935
    %v2958 = vmul.f32 %v2954, %v2765
    %v2959 = vmul.f32 %v2952, %v2957
    %v2960 = vadd.f32 %v2958, %v2959
    %v2961 = vtanh.pop %v2960
    %v2962 = vmul.f32 %v2956, %v2961
    %vm2963 = vcmp.eq.s32.totalorder %v461, 7
    %v2964 = vsel %vm2963, 1, 0
    %2965 = vset.pattern.permute.xlu0 0
    %2966 = vperm.xlu0 %2965, %v2964
    %v2967 = vpop.permute.xlu0 %2966
    %vm2968 = vcmp.eq.s32.totalorder %v2967, 1
    %v2969 = vsel %vm2968, %v2962, %v2776
    %2970 = vst [vmem:[#allocation7] sm:$0x3] %v2969
    // Predicated region
    $region30: #{tpu_custom_call.1} parent=1 // pred_check
      _
    $region31: #{tpu_custom_call.1} parent=1 // pred_check_branch
      %2972 = sbr.rel (0) target = $region33
    $region32: #{tpu_custom_call.1} parent=1 // pred_region
      %s2974 = ssub.s32 32, 32
      %2975 = vsyncadd [#allocation4], %s2974
      %s2977 = sshll.u32 [#allocation7], 4
      %s2978 = int_to_ptr.vmem [resolvable:$true] %s2977
      %2980 = dma.vmem_to_hbm [thread:$0]  %s2978, 32, %s5, [#allocation4]
    $region33: #{tpu_custom_call.1} parent=1 // pred_fallthru
      _
    // Predicated region
    $region34: #{tpu_custom_call.1} parent=1 // pred_check
      _
    $region35: #{tpu_custom_call.1} parent=1 // pred_check_branch
      %2982 = sbr.rel (0) target = $region37
    $region36: #{tpu_custom_call.1} parent=1 // pred_region
      %2983 = dma.done [#allocation4], 32
    $region37: #{tpu_custom_call.1} parent=1 // pred_fallthru
      _
    %2984 = vsyncpa [#allocation3], 1
    %2985 = vsyncpa [#allocation6], 1
    %2986 = vsyncpa [#allocation4], 1

</llo_original>
